<compile_context>
chip_gen: v7x
topology: tpu7x:2x2x1
jax: 0.10.0
libtpu: 0.0.40
codegen_flags: <defaults>
</compile_context>

<pallas_src>
import numpy as np
import jax
import jax.numpy as jnp
from jax import lax
from jax.experimental import pallas as pl
from jax.experimental.pallas import tpu as pltpu


# ---------------- fused Pallas kernel (factory captures static H, W, C) ----------------

def _make_kernel(H, W, C):
    WC = W * C

    def taps_for(canvas, a):
        # Store the activation into the canvas interior (halo rows 0 and H+1 stay zero)
        # and return the nine 3x3 taps as lane-dense (H, W*C) values.
        canvas[1:H + 1, :] = a
        cv = canvas[...]                                        # (H+2, W*C)
        zc = jnp.zeros((H + 2, C), jnp.float32)
        h_l = jnp.concatenate([zc, cv[:, :WC - C]], axis=1)     # pixel w-1 (zero at w == 0)
        h_r = jnp.concatenate([cv[:, C:], zc], axis=1)          # pixel w+1 (zero at w == W-1)
        horiz = (h_l, cv, h_r)                                  # dx = 0, 1, 2
        return [horiz[k % 3][(k // 3):(k // 3) + H, :] for k in range(9)]

    def kernel(x_ref, bd1_ref, b1t_ref, alpha_ref, bd2_ref, b2t_ref,
               bdc_ref, bct_ref, bdf1_ref, bf1t_ref, bdf2_ref, bf2t_ref,
               o_ref, canvas):
        # Zero ONLY the two halo rows; the interior is overwritten every stage.
        canvas[0:1, :] = jnp.zeros((1, WC), jnp.float32)
        canvas[H + 1:H + 2, :] = jnp.zeros((1, WC), jnp.float32)

        x_d = x_ref[0]                                          # (H, W*C) lane-dense image

        # ---- involution kernel branch: 1x1 conv -> PReLU (block-diag matmul keeps layout) ----
        t = jnp.dot(x_d, bd1_ref[...], preferred_element_type=jnp.float32) + b1t_ref[...]
        alpha = alpha_ref[0]                                    # scalar PReLU slope (SMEM)
        t = jnp.where(t >= 0.0, t, alpha * t)                   # (H, W*C4)

        # ---- involution apply: per-tap dynamic weight * tap (VPU), wk built per tap ----
        taps_x = taps_for(canvas, x_d)
        x_inv = jnp.zeros((H, WC), jnp.float32)
        for k in range(9):
            wk_k = jnp.dot(t, bd2_ref[k], preferred_element_type=jnp.float32) + b2t_ref[k]
            x_inv = x_inv + wk_k * taps_x[k]

        # ---- Con 3x3 on x_inv: nine accumulated lane-dense matmuls (no im2col concat) ----
        taps_i = taps_for(canvas, x_inv)
        x_conv = jnp.broadcast_to(bct_ref[...], (H, WC))
        for k in range(9):
            x_conv = x_conv + jnp.dot(taps_i[k], bdc_ref[k],
                                      preferred_element_type=jnp.float32)

        # ---- fusion 1x1 over [x, x_inv, x_conv] + ReLU: three matmuls, no channel concat ----
        y = (jnp.dot(x_d, bdf1_ref[0], preferred_element_type=jnp.float32)
             + jnp.dot(x_inv, bdf1_ref[1], preferred_element_type=jnp.float32)
             + jnp.dot(x_conv, bdf1_ref[2], preferred_element_type=jnp.float32)
             + bf1t_ref[...])
        y = jnp.maximum(y, 0.0)

        # ---- fusion 3x3 on y ----
        taps_y = taps_for(canvas, y)
        out = jnp.broadcast_to(bf2t_ref[...], (H, WC))
        for k in range(9):
            out = out + jnp.dot(taps_y[k], bdf2_ref[k],
                                preferred_element_type=jnp.float32)

        o_ref[...] = out.reshape(1, H, WC)                      # lane-dense store (last dim W*C)

    return kernel


# ---------------- host-side weight preprocessing (lane-dense "D layout") ----------------

def _block_diag(Wm, reps):
    # (Cin, Cout) -> (reps*Cin, reps*Cout), Wm repeated along the diagonal.
    cin, cout = Wm.shape
    eye = jnp.eye(reps, dtype=Wm.dtype)
    return jnp.einsum('wv,io->wivo', eye, Wm).reshape(reps * cin, reps * cout)


def _block_diag_stack(Wk, reps):
    # (K, Cin, Cout) -> (K, reps*Cin, reps*Cout)
    K, cin, cout = Wk.shape
    eye = jnp.eye(reps, dtype=Wk.dtype)
    return jnp.einsum('wv,kio->kwivo', eye, Wk).reshape(K, reps * cin, reps * cout)


def _tile_bias(b, reps):
    # per-channel bias -> (1, reps*Cout) tiled for the D layout
    return jnp.tile(b.reshape(1, -1), (1, reps))


def _full_spec(a):
    nd = a.ndim
    return pl.BlockSpec(a.shape, lambda b, _nd=nd: (0,) * _nd)


# ---------------- pallas_call wrapper ----------------

def windows_partition_forward(x, params, windows):
    B, H, W, C = x.shape
    WC = W * C
    W1, b1, alpha, W2e, b2e = params['inv']
    Wc, bc = params['con']
    Wf1, bf1 = params['f1']
    Wf2, bf2 = params['f2']
    C4 = W1.shape[1]

    # block-diag-expanded weights / tiled biases for the lane-dense layout
    bd1 = _block_diag(W1, W)                                    # (W*C, W*C4)
    b1t = _tile_bias(b1, W)                                     # (1, W*C4)
    W2s = W2e.reshape(C4, 9, C).transpose(1, 0, 2)              # (9, C4, C), per-tap
    bd2 = _block_diag_stack(W2s, W)                             # (9, W*C4, W*C)
    b2t = jnp.tile(b2e.reshape(9, C), (1, W)).reshape(9, 1, WC)  # (9, 1, W*C)
    bdc = _block_diag_stack(Wc, W)                              # (9, W*C, W*C)
    bct = _tile_bias(bc, W)                                     # (1, W*C)
    bdf1 = _block_diag_stack(Wf1.reshape(3, C, C), W)           # (3, W*C, W*C)
    bf1t = _tile_bias(bf1, W)
    bdf2 = _block_diag_stack(Wf2, W)                            # (9, W*C, W*C)
    bf2t = _tile_bias(bf2, W)
    alpha_s = alpha.reshape(1)                                  # scalar PReLU slope -> SMEM

    x_d = x.reshape(B, H, WC)                                   # lane-dense HBM input (free reshape)

    kernel = _make_kernel(H, W, C)

    out = pl.pallas_call(
        kernel,
        out_shape=jax.ShapeDtypeStruct((B, H, WC), jnp.float32),
        grid=(B,),
        in_specs=[
            pl.BlockSpec((1, H, WC), lambda b: (b, 0, 0)),
            _full_spec(bd1), _full_spec(b1t),
            pl.BlockSpec(memory_space=pltpu.MemorySpace.SMEM),
            _full_spec(bd2), _full_spec(b2t),
            _full_spec(bdc), _full_spec(bct),
            _full_spec(bdf1), _full_spec(bf1t),
            _full_spec(bdf2), _full_spec(bf2t),
        ],
        out_specs=pl.BlockSpec((1, H, WC), lambda b: (b, 0, 0)),
        scratch_shapes=[pltpu.VMEM((H + 2, WC), jnp.float32)],
        compiler_params=pltpu.CompilerParams(dimension_semantics=("parallel",)),
    )(x_d, bd1, b1t, alpha_s, bd2, b2t, bdc, bct, bdf1, bf1t, bdf2, bf2t)

    out = out.reshape(B, H, W, C)
    # window partition (pure layout glue, left to XLA; ~16KB per image at these sizes)
    w = windows
    y = out.reshape(B, H // w, w, W // w, w, C)
    y = jnp.transpose(y, (0, 1, 3, 2, 4, 5))
    return y.reshape(-1, w, w, C)


# ---------------- parameters (deterministic synthetic init) ----------------

def init_params(key, C):
    assert C % 4 == 0, "num_feature must be divisible by 4 (reduction_ratio)"
    gc = 2                 # Involution.group_channels
    G = C // gc            # Involution.groups
    C4 = C // 4
    ks = jax.random.split(key, 10)
    W1 = jax.random.normal(ks[0], (C, C4), jnp.float32) * 0.1          # conv1 (1x1), (Cin, Cout)
    b1 = jax.random.normal(ks[1], (1, C4), jnp.float32) * 0.1
    alpha = jnp.full((1, 1), 0.25, jnp.float32)                        # PReLU default init
    W2 = jax.random.normal(ks[2], (C4, 9 * G), jnp.float32) * 0.1      # conv2 (1x1), cols g*9+k
    b2 = jax.random.normal(ks[3], (1, 9 * G), jnp.float32) * 0.1
    # expand conv2 columns so the weight for kernel position k / channel c
    # (group g = c // gc) sits at column k*C + c.
    cols = np.array([(c // gc) * 9 + k for k in range(9) for c in range(C)], dtype=np.int32)
    W2e = W2[:, cols]
    b2e = b2[:, cols]
    Wc = jax.random.normal(ks[4], (9, C, C), jnp.float32) * 0.1        # Con 3x3, (kh*3+kw, Cin, Cout)
    bc = jax.random.normal(ks[5], (1, C), jnp.float32) * 0.1
    Wf1 = jax.random.normal(ks[6], (3 * C, C), jnp.float32) * 0.1      # fusion[0] 1x1, (3C, C)
    bf1 = jax.random.normal(ks[7], (1, C), jnp.float32) * 0.1
    Wf2 = jax.random.normal(ks[8], (9, C, C), jnp.float32) * 0.1       # fusion[2] 3x3
    bf2 = jax.random.normal(ks[9], (1, C), jnp.float32) * 0.1
    return dict(inv=(W1, b1, alpha, W2e, b2e), con=(Wc, bc), f1=(Wf1, bf1), f2=(Wf2, bf2))


# ---------------- pure-JAX reference ----------------

def _reference_forward(x, params, windows):
    W1, b1, alpha, W2e, b2e = params['inv']
    Wc, bc = params['con']
    Wf1, bf1 = params['f1']
    Wf2, bf2 = params['f2']
    B, H, Wd, C = x.shape

    def conv1x1(v, Wm, b):
        return jnp.einsum('bhwc,cd->bhwd', v, Wm) + b.reshape(1, 1, 1, -1)

    def conv3x3(v, Wm, b):
        vp = jnp.pad(v, ((0, 0), (1, 1), (1, 1), (0, 0)))
        acc = 0.0
        for k in range(9):
            dy, dx = k // 3, k % 3
            acc = acc + jnp.einsum('bhwc,cd->bhwd', vp[:, dy:dy + H, dx:dx + Wd, :], Wm[k])
        return acc + b.reshape(1, 1, 1, -1)

    t = conv1x1(x, W1, b1)
    t = jnp.where(t >= 0, t, alpha[0, 0] * t)
    wk = conv1x1(t, W2e, b2e)
    xp = jnp.pad(x, ((0, 0), (1, 1), (1, 1), (0, 0)))
    inv = 0.0
    for k in range(9):
        dy, dx = k // 3, k % 3
        inv = inv + wk[..., k * C:(k + 1) * C] * xp[:, dy:dy + H, dx:dx + Wd, :]
    conv = conv3x3(inv, Wc, bc)
    zero_b = jnp.zeros((1, C), jnp.float32)
    y = jnp.maximum(conv1x1(x, Wf1[:C], zero_b) + conv1x1(inv, Wf1[C:2 * C], zero_b)
                    + conv1x1(conv, Wf1[2 * C:], zero_b) + bf1.reshape(1, 1, 1, -1), 0.0)
    y = conv3x3(y, Wf2, bf2)
    w = windows
    y = y.reshape(B, H // w, w, Wd // w, w, C)
    y = jnp.transpose(y, (0, 1, 3, 2, 4, 5))
    return y.reshape(-1, w, w, C)


if __name__ == "__main__":
    B, H, W, C = 2, 16, 16, 8
    windows = 4          # stride = 1 (see note above)
    key = jax.random.PRNGKey(0)
    kx, kp = jax.random.split(key)
    x = jax.random.normal(kx, (B, H, W, C), jnp.float32)
    params = init_params(kp, C)

    out = windows_partition_forward(x, params, windows)
    out = jax.block_until_ready(out)

    assert out.shape == (B * (H // windows) * (W // windows), windows, windows, C), out.shape
    ref = _reference_forward(x, params, windows)
    np.testing.assert_allclose(np.asarray(out), np.asarray(ref), atol=1e-4, rtol=1e-4)
    print("KERNEL_OK")
</pallas_src>

<mosaic_0001>
module attributes {stable_mosaic.version = 11 : i64} {
  func.func @kernel(%arg0: i32, %arg1: memref<1x16x128xf32, #tpu.memory_space<vmem>>, %arg2: memref<128x32xf32, #tpu.memory_space<vmem>>, %arg3: memref<1x32xf32, #tpu.memory_space<vmem>>, %arg4: memref<1xf32, #tpu.memory_space<smem>>, %arg5: memref<9x32x128xf32, #tpu.memory_space<vmem>>, %arg6: memref<9x1x128xf32, #tpu.memory_space<vmem>>, %arg7: memref<9x128x128xf32, #tpu.memory_space<vmem>>, %arg8: memref<1x128xf32, #tpu.memory_space<vmem>>, %arg9: memref<3x128x128xf32, #tpu.memory_space<vmem>>, %arg10: memref<1x128xf32, #tpu.memory_space<vmem>>, %arg11: memref<9x128x128xf32, #tpu.memory_space<vmem>>, %arg12: memref<1x128xf32, #tpu.memory_space<vmem>>, %arg13: memref<1x16x128xf32, #tpu.memory_space<vmem>>, %arg14: memref<18x128xf32, #tpu.memory_space<vmem>>) attributes {dimension_semantics = [#tpu.dimension_semantics<parallel>], iteration_bounds = array<i64: 2>, scalar_prefetch = 0 : i64, scratch_operands = 1 : i64, tpu.core_type = #tpu.core_type<tc>, window_params = [{transform_indices = @transform_0, window_bounds = array<i64: 1, 16, 128>}, {pipeline_mode = #tpu.pipeline_mode<synchronous>, transform_indices = @transform_1, window_bounds = array<i64: 128, 32>}, {pipeline_mode = #tpu.pipeline_mode<synchronous>, transform_indices = @transform_2, window_bounds = array<i64: 1, 32>}, {transform_indices = @transform_3, window_bounds = array<i64: 1>}, {pipeline_mode = #tpu.pipeline_mode<synchronous>, transform_indices = @transform_4, window_bounds = array<i64: 9, 32, 128>}, {pipeline_mode = #tpu.pipeline_mode<synchronous>, transform_indices = @transform_5, window_bounds = array<i64: 9, 1, 128>}, {pipeline_mode = #tpu.pipeline_mode<synchronous>, transform_indices = @transform_6, window_bounds = array<i64: 9, 128, 128>}, {pipeline_mode = #tpu.pipeline_mode<synchronous>, transform_indices = @transform_7, window_bounds = array<i64: 1, 128>}, {pipeline_mode = #tpu.pipeline_mode<synchronous>, transform_indices = @transform_8, window_bounds = array<i64: 3, 128, 128>}, {pipeline_mode = #tpu.pipeline_mode<synchronous>, transform_indices = @transform_9, window_bounds = array<i64: 1, 128>}, {pipeline_mode = #tpu.pipeline_mode<synchronous>, transform_indices = @transform_10, window_bounds = array<i64: 9, 128, 128>}, {pipeline_mode = #tpu.pipeline_mode<synchronous>, transform_indices = @transform_11, window_bounds = array<i64: 1, 128>}, {transform_indices = @transform_12, window_bounds = array<i64: 1, 16, 128>}]} {
    %cst = arith.constant 0.000000e+00 : f32
    %0 = vector.broadcast %cst : f32 to vector<1x128xf32>
    %c0 = arith.constant 0 : index
    %c0_0 = arith.constant 0 : index
    %1 = vector.load %arg14[%c0, %c0_0] : memref<18x128xf32, #tpu.memory_space<vmem>>, vector<1x128xf32>
    tpu.vector_store %arg14[%c0, %c0_0], %0 {strides = array<i32>} : memref<18x128xf32, #tpu.memory_space<vmem>>, vector<1x128xf32>,
    %cst_1 = arith.constant 0.000000e+00 : f32
    %2 = vector.broadcast %cst_1 : f32 to vector<1x128xf32>
    %c17 = arith.constant 17 : index
    %c0_2 = arith.constant 0 : index
    %3 = vector.load %arg14[%c17, %c0_2] : memref<18x128xf32, #tpu.memory_space<vmem>>, vector<1x128xf32>
    tpu.vector_store %arg14[%c17, %c0_2], %2 {strides = array<i32>} : memref<18x128xf32, #tpu.memory_space<vmem>>, vector<1x128xf32>,
    %c0_3 = arith.constant 0 : index
    %c0_4 = arith.constant 0 : index
    %c0_5 = arith.constant 0 : index
    %4 = vector.load %arg1[%c0_3, %c0_4, %c0_5] : memref<1x16x128xf32, #tpu.memory_space<vmem>>, vector<1x16x128xf32>
    %5 = vector.shape_cast %4 : vector<1x16x128xf32> to vector<16x128xf32>
    %c0_6 = arith.constant 0 : index
    %c0_7 = arith.constant 0 : index
    %6 = vector.load %arg2[%c0_6, %c0_7] : memref<128x32xf32, #tpu.memory_space<vmem>>, vector<128x32xf32>
    %cst_8 = arith.constant dense<0.000000e+00> : vector<16x32xf32>
    %7 = tpu.matmul %5, %6, %cst_8 {dimension_numbers = #tpu.dot_dimension_numbers<[1], [0], [0], [1], [0, 0, 1, 1], [], []>} : vector<16x128xf32>, vector<128x32xf32>, vector<16x32xf32> -> vector<16x32xf32>
    %c0_9 = arith.constant 0 : index
    %c0_10 = arith.constant 0 : index
    %8 = vector.load %arg3[%c0_9, %c0_10] : memref<1x32xf32, #tpu.memory_space<vmem>>, vector<1x32xf32>
    %9 = vector.broadcast %8 : vector<1x32xf32> to vector<16x32xf32>
    %10 = arith.addf %7, %9 : vector<16x32xf32>
    %c0_11 = arith.constant 0 : index
    %11 = memref.load %arg4[%c0_11] : memref<1xf32, #tpu.memory_space<smem>>
    %cst_12 = arith.constant 0.000000e+00 : f32
    %12 = vector.broadcast %cst_12 : f32 to vector<16x32xf32>
    %13 = arith.cmpf oge, %10, %12 : vector<16x32xf32>
    %14 = vector.broadcast %11 : f32 to vector<16x32xf32>
    %15 = arith.mulf %14, %10 : vector<16x32xf32>
    %16 = arith.select %13, %10, %15 : vector<16x32xi1>, vector<16x32xf32>
    %c1 = arith.constant 1 : index
    %c0_13 = arith.constant 0 : index
    %17 = vector.load %arg14[%c1, %c0_13] : memref<18x128xf32, #tpu.memory_space<vmem>>, vector<16x128xf32>
    tpu.vector_store %arg14[%c1, %c0_13], %5 {strides = array<i32>} : memref<18x128xf32, #tpu.memory_space<vmem>>, vector<16x128xf32>,
    %c0_14 = arith.constant 0 : index
    %c0_15 = arith.constant 0 : index
    %18 = vector.load %arg14[%c0_14, %c0_15] : memref<18x128xf32, #tpu.memory_space<vmem>>, vector<18x128xf32>
    %cst_16 = arith.constant 0.000000e+00 : f32
    %19 = vector.broadcast %cst_16 : f32 to vector<18x8xf32>
    %20 = vector.extract_strided_slice %18 {offsets = [0, 0], sizes = [18, 120], strides = [1, 1]} : vector<18x128xf32> to vector<18x120xf32>
    %21 = tpu.concatenate %19, %20 in 1 : vector<18x8xf32>, vector<18x120xf32> -> vector<18x128xf32>
    %22 = vector.extract_strided_slice %18 {offsets = [0, 8], sizes = [18, 120], strides = [1, 1]} : vector<18x128xf32> to vector<18x120xf32>
    %23 = tpu.concatenate %22, %19 in 1 : vector<18x120xf32>, vector<18x8xf32> -> vector<18x128xf32>
    %24 = vector.extract_strided_slice %21 {offsets = [0, 0], sizes = [16, 128], strides = [1, 1]} : vector<18x128xf32> to vector<16x128xf32>
    %25 = vector.extract_strided_slice %18 {offsets = [0, 0], sizes = [16, 128], strides = [1, 1]} : vector<18x128xf32> to vector<16x128xf32>
    %26 = vector.extract_strided_slice %23 {offsets = [0, 0], sizes = [16, 128], strides = [1, 1]} : vector<18x128xf32> to vector<16x128xf32>
    %27 = vector.extract_strided_slice %21 {offsets = [1, 0], sizes = [16, 128], strides = [1, 1]} : vector<18x128xf32> to vector<16x128xf32>
    %28 = vector.extract_strided_slice %18 {offsets = [1, 0], sizes = [16, 128], strides = [1, 1]} : vector<18x128xf32> to vector<16x128xf32>
    %29 = vector.extract_strided_slice %23 {offsets = [1, 0], sizes = [16, 128], strides = [1, 1]} : vector<18x128xf32> to vector<16x128xf32>
    %30 = vector.extract_strided_slice %21 {offsets = [2, 0], sizes = [16, 128], strides = [1, 1]} : vector<18x128xf32> to vector<16x128xf32>
    %31 = vector.extract_strided_slice %18 {offsets = [2, 0], sizes = [16, 128], strides = [1, 1]} : vector<18x128xf32> to vector<16x128xf32>
    %32 = vector.extract_strided_slice %23 {offsets = [2, 0], sizes = [16, 128], strides = [1, 1]} : vector<18x128xf32> to vector<16x128xf32>
    %cst_17 = arith.constant 0.000000e+00 : f32
    %33 = vector.broadcast %cst_17 : f32 to vector<16x128xf32>
    %c0_18 = arith.constant 0 : index
    %c0_19 = arith.constant 0 : index
    %c0_20 = arith.constant 0 : index
    %34 = vector.load %arg5[%c0_18, %c0_19, %c0_20] : memref<9x32x128xf32, #tpu.memory_space<vmem>>, vector<1x32x128xf32>
    %35 = vector.shape_cast %34 : vector<1x32x128xf32> to vector<32x128xf32>
    %cst_21 = arith.constant dense<0.000000e+00> : vector<16x128xf32>
    %36 = tpu.matmul %16, %35, %cst_21 {dimension_numbers = #tpu.dot_dimension_numbers<[1], [0], [0], [1], [0, 0, 1, 1], [], []>} : vector<16x32xf32>, vector<32x128xf32>, vector<16x128xf32> -> vector<16x128xf32>
    %c0_22 = arith.constant 0 : index
    %c0_23 = arith.constant 0 : index
    %c0_24 = arith.constant 0 : index
    %37 = vector.load %arg6[%c0_22, %c0_23, %c0_24] : memref<9x1x128xf32, #tpu.memory_space<vmem>>, vector<1x1x128xf32>
    %38 = vector.shape_cast %37 : vector<1x1x128xf32> to vector<1x128xf32>
    %39 = vector.broadcast %38 : vector<1x128xf32> to vector<16x128xf32>
    %40 = arith.addf %36, %39 : vector<16x128xf32>
    %41 = arith.mulf %40, %24 : vector<16x128xf32>
    %42 = arith.addf %33, %41 : vector<16x128xf32>
    %c1_25 = arith.constant 1 : index
    %c0_26 = arith.constant 0 : index
    %c0_27 = arith.constant 0 : index
    %43 = vector.load %arg5[%c1_25, %c0_26, %c0_27] : memref<9x32x128xf32, #tpu.memory_space<vmem>>, vector<1x32x128xf32>
    %44 = vector.shape_cast %43 : vector<1x32x128xf32> to vector<32x128xf32>
    %cst_28 = arith.constant dense<0.000000e+00> : vector<16x128xf32>
    %45 = tpu.matmul %16, %44, %cst_28 {dimension_numbers = #tpu.dot_dimension_numbers<[1], [0], [0], [1], [0, 0, 1, 1], [], []>} : vector<16x32xf32>, vector<32x128xf32>, vector<16x128xf32> -> vector<16x128xf32>
    %c1_29 = arith.constant 1 : index
    %c0_30 = arith.constant 0 : index
    %c0_31 = arith.constant 0 : index
    %46 = vector.load %arg6[%c1_29, %c0_30, %c0_31] : memref<9x1x128xf32, #tpu.memory_space<vmem>>, vector<1x1x128xf32>
    %47 = vector.shape_cast %46 : vector<1x1x128xf32> to vector<1x128xf32>
    %48 = vector.broadcast %47 : vector<1x128xf32> to vector<16x128xf32>
    %49 = arith.addf %45, %48 : vector<16x128xf32>
    %50 = arith.mulf %49, %25 : vector<16x128xf32>
    %51 = arith.addf %42, %50 : vector<16x128xf32>
    %c2 = arith.constant 2 : index
    %c0_32 = arith.constant 0 : index
    %c0_33 = arith.constant 0 : index
    %52 = vector.load %arg5[%c2, %c0_32, %c0_33] : memref<9x32x128xf32, #tpu.memory_space<vmem>>, vector<1x32x128xf32>
    %53 = vector.shape_cast %52 : vector<1x32x128xf32> to vector<32x128xf32>
    %cst_34 = arith.constant dense<0.000000e+00> : vector<16x128xf32>
    %54 = tpu.matmul %16, %53, %cst_34 {dimension_numbers = #tpu.dot_dimension_numbers<[1], [0], [0], [1], [0, 0, 1, 1], [], []>} : vector<16x32xf32>, vector<32x128xf32>, vector<16x128xf32> -> vector<16x128xf32>
    %c2_35 = arith.constant 2 : index
    %c0_36 = arith.constant 0 : index
    %c0_37 = arith.constant 0 : index
    %55 = vector.load %arg6[%c2_35, %c0_36, %c0_37] : memref<9x1x128xf32, #tpu.memory_space<vmem>>, vector<1x1x128xf32>
    %56 = vector.shape_cast %55 : vector<1x1x128xf32> to vector<1x128xf32>
    %57 = vector.broadcast %56 : vector<1x128xf32> to vector<16x128xf32>
    %58 = arith.addf %54, %57 : vector<16x128xf32>
    %59 = arith.mulf %58, %26 : vector<16x128xf32>
    %60 = arith.addf %51, %59 : vector<16x128xf32>
    %c3 = arith.constant 3 : index
    %c0_38 = arith.constant 0 : index
    %c0_39 = arith.constant 0 : index
    %61 = vector.load %arg5[%c3, %c0_38, %c0_39] : memref<9x32x128xf32, #tpu.memory_space<vmem>>, vector<1x32x128xf32>
    %62 = vector.shape_cast %61 : vector<1x32x128xf32> to vector<32x128xf32>
    %cst_40 = arith.constant dense<0.000000e+00> : vector<16x128xf32>
    %63 = tpu.matmul %16, %62, %cst_40 {dimension_numbers = #tpu.dot_dimension_numbers<[1], [0], [0], [1], [0, 0, 1, 1], [], []>} : vector<16x32xf32>, vector<32x128xf32>, vector<16x128xf32> -> vector<16x128xf32>
    %c3_41 = arith.constant 3 : index
    %c0_42 = arith.constant 0 : index
    %c0_43 = arith.constant 0 : index
    %64 = vector.load %arg6[%c3_41, %c0_42, %c0_43] : memref<9x1x128xf32, #tpu.memory_space<vmem>>, vector<1x1x128xf32>
    %65 = vector.shape_cast %64 : vector<1x1x128xf32> to vector<1x128xf32>
    %66 = vector.broadcast %65 : vector<1x128xf32> to vector<16x128xf32>
    %67 = arith.addf %63, %66 : vector<16x128xf32>
    %68 = arith.mulf %67, %27 : vector<16x128xf32>
    %69 = arith.addf %60, %68 : vector<16x128xf32>
    %c4 = arith.constant 4 : index
    %c0_44 = arith.constant 0 : index
    %c0_45 = arith.constant 0 : index
    %70 = vector.load %arg5[%c4, %c0_44, %c0_45] : memref<9x32x128xf32, #tpu.memory_space<vmem>>, vector<1x32x128xf32>
    %71 = vector.shape_cast %70 : vector<1x32x128xf32> to vector<32x128xf32>
    %cst_46 = arith.constant dense<0.000000e+00> : vector<16x128xf32>
    %72 = tpu.matmul %16, %71, %cst_46 {dimension_numbers = #tpu.dot_dimension_numbers<[1], [0], [0], [1], [0, 0, 1, 1], [], []>} : vector<16x32xf32>, vector<32x128xf32>, vector<16x128xf32> -> vector<16x128xf32>
    %c4_47 = arith.constant 4 : index
    %c0_48 = arith.constant 0 : index
    %c0_49 = arith.constant 0 : index
    %73 = vector.load %arg6[%c4_47, %c0_48, %c0_49] : memref<9x1x128xf32, #tpu.memory_space<vmem>>, vector<1x1x128xf32>
    %74 = vector.shape_cast %73 : vector<1x1x128xf32> to vector<1x128xf32>
    %75 = vector.broadcast %74 : vector<1x128xf32> to vector<16x128xf32>
    %76 = arith.addf %72, %75 : vector<16x128xf32>
    %77 = arith.mulf %76, %28 : vector<16x128xf32>
    %78 = arith.addf %69, %77 : vector<16x128xf32>
    %c5 = arith.constant 5 : index
    %c0_50 = arith.constant 0 : index
    %c0_51 = arith.constant 0 : index
    %79 = vector.load %arg5[%c5, %c0_50, %c0_51] : memref<9x32x128xf32, #tpu.memory_space<vmem>>, vector<1x32x128xf32>
    %80 = vector.shape_cast %79 : vector<1x32x128xf32> to vector<32x128xf32>
    %cst_52 = arith.constant dense<0.000000e+00> : vector<16x128xf32>
    %81 = tpu.matmul %16, %80, %cst_52 {dimension_numbers = #tpu.dot_dimension_numbers<[1], [0], [0], [1], [0, 0, 1, 1], [], []>} : vector<16x32xf32>, vector<32x128xf32>, vector<16x128xf32> -> vector<16x128xf32>
    %c5_53 = arith.constant 5 : index
    %c0_54 = arith.constant 0 : index
    %c0_55 = arith.constant 0 : index
    %82 = vector.load %arg6[%c5_53, %c0_54, %c0_55] : memref<9x1x128xf32, #tpu.memory_space<vmem>>, vector<1x1x128xf32>
    %83 = vector.shape_cast %82 : vector<1x1x128xf32> to vector<1x128xf32>
    %84 = vector.broadcast %83 : vector<1x128xf32> to vector<16x128xf32>
    %85 = arith.addf %81, %84 : vector<16x128xf32>
    %86 = arith.mulf %85, %29 : vector<16x128xf32>
    %87 = arith.addf %78, %86 : vector<16x128xf32>
    %c6 = arith.constant 6 : index
    %c0_56 = arith.constant 0 : index
    %c0_57 = arith.constant 0 : index
    %88 = vector.load %arg5[%c6, %c0_56, %c0_57] : memref<9x32x128xf32, #tpu.memory_space<vmem>>, vector<1x32x128xf32>
    %89 = vector.shape_cast %88 : vector<1x32x128xf32> to vector<32x128xf32>
    %cst_58 = arith.constant dense<0.000000e+00> : vector<16x128xf32>
    %90 = tpu.matmul %16, %89, %cst_58 {dimension_numbers = #tpu.dot_dimension_numbers<[1], [0], [0], [1], [0, 0, 1, 1], [], []>} : vector<16x32xf32>, vector<32x128xf32>, vector<16x128xf32> -> vector<16x128xf32>
    %c6_59 = arith.constant 6 : index
    %c0_60 = arith.constant 0 : index
    %c0_61 = arith.constant 0 : index
    %91 = vector.load %arg6[%c6_59, %c0_60, %c0_61] : memref<9x1x128xf32, #tpu.memory_space<vmem>>, vector<1x1x128xf32>
    %92 = vector.shape_cast %91 : vector<1x1x128xf32> to vector<1x128xf32>
    %93 = vector.broadcast %92 : vector<1x128xf32> to vector<16x128xf32>
    %94 = arith.addf %90, %93 : vector<16x128xf32>
    %95 = arith.mulf %94, %30 : vector<16x128xf32>
    %96 = arith.addf %87, %95 : vector<16x128xf32>
    %c7 = arith.constant 7 : index
    %c0_62 = arith.constant 0 : index
    %c0_63 = arith.constant 0 : index
    %97 = vector.load %arg5[%c7, %c0_62, %c0_63] : memref<9x32x128xf32, #tpu.memory_space<vmem>>, vector<1x32x128xf32>
    %98 = vector.shape_cast %97 : vector<1x32x128xf32> to vector<32x128xf32>
    %cst_64 = arith.constant dense<0.000000e+00> : vector<16x128xf32>
    %99 = tpu.matmul %16, %98, %cst_64 {dimension_numbers = #tpu.dot_dimension_numbers<[1], [0], [0], [1], [0, 0, 1, 1], [], []>} : vector<16x32xf32>, vector<32x128xf32>, vector<16x128xf32> -> vector<16x128xf32>
    %c7_65 = arith.constant 7 : index
    %c0_66 = arith.constant 0 : index
    %c0_67 = arith.constant 0 : index
    %100 = vector.load %arg6[%c7_65, %c0_66, %c0_67] : memref<9x1x128xf32, #tpu.memory_space<vmem>>, vector<1x1x128xf32>
    %101 = vector.shape_cast %100 : vector<1x1x128xf32> to vector<1x128xf32>
    %102 = vector.broadcast %101 : vector<1x128xf32> to vector<16x128xf32>
    %103 = arith.addf %99, %102 : vector<16x128xf32>
    %104 = arith.mulf %103, %31 : vector<16x128xf32>
    %105 = arith.addf %96, %104 : vector<16x128xf32>
    %c8 = arith.constant 8 : index
    %c0_68 = arith.constant 0 : index
    %c0_69 = arith.constant 0 : index
    %106 = vector.load %arg5[%c8, %c0_68, %c0_69] : memref<9x32x128xf32, #tpu.memory_space<vmem>>, vector<1x32x128xf32>
    %107 = vector.shape_cast %106 : vector<1x32x128xf32> to vector<32x128xf32>
    %cst_70 = arith.constant dense<0.000000e+00> : vector<16x128xf32>
    %108 = tpu.matmul %16, %107, %cst_70 {dimension_numbers = #tpu.dot_dimension_numbers<[1], [0], [0], [1], [0, 0, 1, 1], [], []>} : vector<16x32xf32>, vector<32x128xf32>, vector<16x128xf32> -> vector<16x128xf32>
    %c8_71 = arith.constant 8 : index
    %c0_72 = arith.constant 0 : index
    %c0_73 = arith.constant 0 : index
    %109 = vector.load %arg6[%c8_71, %c0_72, %c0_73] : memref<9x1x128xf32, #tpu.memory_space<vmem>>, vector<1x1x128xf32>
    %110 = vector.shape_cast %109 : vector<1x1x128xf32> to vector<1x128xf32>
    %111 = vector.broadcast %110 : vector<1x128xf32> to vector<16x128xf32>
    %112 = arith.addf %108, %111 : vector<16x128xf32>
    %113 = arith.mulf %112, %32 : vector<16x128xf32>
    %114 = arith.addf %105, %113 : vector<16x128xf32>
    %c1_74 = arith.constant 1 : index
    %c0_75 = arith.constant 0 : index
    %115 = vector.load %arg14[%c1_74, %c0_75] : memref<18x128xf32, #tpu.memory_space<vmem>>, vector<16x128xf32>
    tpu.vector_store %arg14[%c1_74, %c0_75], %114 {strides = array<i32>} : memref<18x128xf32, #tpu.memory_space<vmem>>, vector<16x128xf32>,
    %c0_76 = arith.constant 0 : index
    %c0_77 = arith.constant 0 : index
    %116 = vector.load %arg14[%c0_76, %c0_77] : memref<18x128xf32, #tpu.memory_space<vmem>>, vector<18x128xf32>
    %cst_78 = arith.constant 0.000000e+00 : f32
    %117 = vector.broadcast %cst_78 : f32 to vector<18x8xf32>
    %118 = vector.extract_strided_slice %116 {offsets = [0, 0], sizes = [18, 120], strides = [1, 1]} : vector<18x128xf32> to vector<18x120xf32>
    %119 = tpu.concatenate %117, %118 in 1 : vector<18x8xf32>, vector<18x120xf32> -> vector<18x128xf32>
    %120 = vector.extract_strided_slice %116 {offsets = [0, 8], sizes = [18, 120], strides = [1, 1]} : vector<18x128xf32> to vector<18x120xf32>
    %121 = tpu.concatenate %120, %117 in 1 : vector<18x120xf32>, vector<18x8xf32> -> vector<18x128xf32>
    %122 = vector.extract_strided_slice %119 {offsets = [0, 0], sizes = [16, 128], strides = [1, 1]} : vector<18x128xf32> to vector<16x128xf32>
    %123 = vector.extract_strided_slice %116 {offsets = [0, 0], sizes = [16, 128], strides = [1, 1]} : vector<18x128xf32> to vector<16x128xf32>
    %124 = vector.extract_strided_slice %121 {offsets = [0, 0], sizes = [16, 128], strides = [1, 1]} : vector<18x128xf32> to vector<16x128xf32>
    %125 = vector.extract_strided_slice %119 {offsets = [1, 0], sizes = [16, 128], strides = [1, 1]} : vector<18x128xf32> to vector<16x128xf32>
    %126 = vector.extract_strided_slice %116 {offsets = [1, 0], sizes = [16, 128], strides = [1, 1]} : vector<18x128xf32> to vector<16x128xf32>
    %127 = vector.extract_strided_slice %121 {offsets = [1, 0], sizes = [16, 128], strides = [1, 1]} : vector<18x128xf32> to vector<16x128xf32>
    %128 = vector.extract_strided_slice %119 {offsets = [2, 0], sizes = [16, 128], strides = [1, 1]} : vector<18x128xf32> to vector<16x128xf32>
    %129 = vector.extract_strided_slice %116 {offsets = [2, 0], sizes = [16, 128], strides = [1, 1]} : vector<18x128xf32> to vector<16x128xf32>
    %130 = vector.extract_strided_slice %121 {offsets = [2, 0], sizes = [16, 128], strides = [1, 1]} : vector<18x128xf32> to vector<16x128xf32>
    %c0_79 = arith.constant 0 : index
    %c0_80 = arith.constant 0 : index
    %131 = vector.load %arg8[%c0_79, %c0_80] : memref<1x128xf32, #tpu.memory_space<vmem>>, vector<1x128xf32>
    %132 = vector.shape_cast %131 : vector<1x128xf32> to vector<1x128xf32>
    %133 = vector.broadcast %132 : vector<1x128xf32> to vector<16x128xf32>
    %c0_81 = arith.constant 0 : index
    %c0_82 = arith.constant 0 : index
    %c0_83 = arith.constant 0 : index
    %134 = vector.load %arg7[%c0_81, %c0_82, %c0_83] : memref<9x128x128xf32, #tpu.memory_space<vmem>>, vector<1x128x128xf32>
    %135 = vector.shape_cast %134 : vector<1x128x128xf32> to vector<128x128xf32>
    %cst_84 = arith.constant dense<0.000000e+00> : vector<16x128xf32>
    %136 = tpu.matmul %122, %135, %cst_84 {dimension_numbers = #tpu.dot_dimension_numbers<[1], [0], [0], [1], [0, 0, 1, 1], [], []>} : vector<16x128xf32>, vector<128x128xf32>, vector<16x128xf32> -> vector<16x128xf32>
    %137 = arith.addf %133, %136 : vector<16x128xf32>
    %c1_85 = arith.constant 1 : index
    %c0_86 = arith.constant 0 : index
    %c0_87 = arith.constant 0 : index
    %138 = vector.load %arg7[%c1_85, %c0_86, %c0_87] : memref<9x128x128xf32, #tpu.memory_space<vmem>>, vector<1x128x128xf32>
    %139 = vector.shape_cast %138 : vector<1x128x128xf32> to vector<128x128xf32>
    %cst_88 = arith.constant dense<0.000000e+00> : vector<16x128xf32>
    %140 = tpu.matmul %123, %139, %cst_88 {dimension_numbers = #tpu.dot_dimension_numbers<[1], [0], [0], [1], [0, 0, 1, 1], [], []>} : vector<16x128xf32>, vector<128x128xf32>, vector<16x128xf32> -> vector<16x128xf32>
    %141 = arith.addf %137, %140 : vector<16x128xf32>
    %c2_89 = arith.constant 2 : index
    %c0_90 = arith.constant 0 : index
    %c0_91 = arith.constant 0 : index
    %142 = vector.load %arg7[%c2_89, %c0_90, %c0_91] : memref<9x128x128xf32, #tpu.memory_space<vmem>>, vector<1x128x128xf32>
    %143 = vector.shape_cast %142 : vector<1x128x128xf32> to vector<128x128xf32>
    %cst_92 = arith.constant dense<0.000000e+00> : vector<16x128xf32>
    %144 = tpu.matmul %124, %143, %cst_92 {dimension_numbers = #tpu.dot_dimension_numbers<[1], [0], [0], [1], [0, 0, 1, 1], [], []>} : vector<16x128xf32>, vector<128x128xf32>, vector<16x128xf32> -> vector<16x128xf32>
    %145 = arith.addf %141, %144 : vector<16x128xf32>
    %c3_93 = arith.constant 3 : index
    %c0_94 = arith.constant 0 : index
    %c0_95 = arith.constant 0 : index
    %146 = vector.load %arg7[%c3_93, %c0_94, %c0_95] : memref<9x128x128xf32, #tpu.memory_space<vmem>>, vector<1x128x128xf32>
    %147 = vector.shape_cast %146 : vector<1x128x128xf32> to vector<128x128xf32>
    %cst_96 = arith.constant dense<0.000000e+00> : vector<16x128xf32>
    %148 = tpu.matmul %125, %147, %cst_96 {dimension_numbers = #tpu.dot_dimension_numbers<[1], [0], [0], [1], [0, 0, 1, 1], [], []>} : vector<16x128xf32>, vector<128x128xf32>, vector<16x128xf32> -> vector<16x128xf32>
    %149 = arith.addf %145, %148 : vector<16x128xf32>
    %c4_97 = arith.constant 4 : index
    %c0_98 = arith.constant 0 : index
    %c0_99 = arith.constant 0 : index
    %150 = vector.load %arg7[%c4_97, %c0_98, %c0_99] : memref<9x128x128xf32, #tpu.memory_space<vmem>>, vector<1x128x128xf32>
    %151 = vector.shape_cast %150 : vector<1x128x128xf32> to vector<128x128xf32>
    %cst_100 = arith.constant dense<0.000000e+00> : vector<16x128xf32>
    %152 = tpu.matmul %126, %151, %cst_100 {dimension_numbers = #tpu.dot_dimension_numbers<[1], [0], [0], [1], [0, 0, 1, 1], [], []>} : vector<16x128xf32>, vector<128x128xf32>, vector<16x128xf32> -> vector<16x128xf32>
    %153 = arith.addf %149, %152 : vector<16x128xf32>
    %c5_101 = arith.constant 5 : index
    %c0_102 = arith.constant 0 : index
    %c0_103 = arith.constant 0 : index
    %154 = vector.load %arg7[%c5_101, %c0_102, %c0_103] : memref<9x128x128xf32, #tpu.memory_space<vmem>>, vector<1x128x128xf32>
    %155 = vector.shape_cast %154 : vector<1x128x128xf32> to vector<128x128xf32>
    %cst_104 = arith.constant dense<0.000000e+00> : vector<16x128xf32>
    %156 = tpu.matmul %127, %155, %cst_104 {dimension_numbers = #tpu.dot_dimension_numbers<[1], [0], [0], [1], [0, 0, 1, 1], [], []>} : vector<16x128xf32>, vector<128x128xf32>, vector<16x128xf32> -> vector<16x128xf32>
    %157 = arith.addf %153, %156 : vector<16x128xf32>
    %c6_105 = arith.constant 6 : index
    %c0_106 = arith.constant 0 : index
    %c0_107 = arith.constant 0 : index
    %158 = vector.load %arg7[%c6_105, %c0_106, %c0_107] : memref<9x128x128xf32, #tpu.memory_space<vmem>>, vector<1x128x128xf32>
    %159 = vector.shape_cast %158 : vector<1x128x128xf32> to vector<128x128xf32>
    %cst_108 = arith.constant dense<0.000000e+00> : vector<16x128xf32>
    %160 = tpu.matmul %128, %159, %cst_108 {dimension_numbers = #tpu.dot_dimension_numbers<[1], [0], [0], [1], [0, 0, 1, 1], [], []>} : vector<16x128xf32>, vector<128x128xf32>, vector<16x128xf32> -> vector<16x128xf32>
    %161 = arith.addf %157, %160 : vector<16x128xf32>
    %c7_109 = arith.constant 7 : index
    %c0_110 = arith.constant 0 : index
    %c0_111 = arith.constant 0 : index
    %162 = vector.load %arg7[%c7_109, %c0_110, %c0_111] : memref<9x128x128xf32, #tpu.memory_space<vmem>>, vector<1x128x128xf32>
    %163 = vector.shape_cast %162 : vector<1x128x128xf32> to vector<128x128xf32>
    %cst_112 = arith.constant dense<0.000000e+00> : vector<16x128xf32>
    %164 = tpu.matmul %129, %163, %cst_112 {dimension_numbers = #tpu.dot_dimension_numbers<[1], [0], [0], [1], [0, 0, 1, 1], [], []>} : vector<16x128xf32>, vector<128x128xf32>, vector<16x128xf32> -> vector<16x128xf32>
    %165 = arith.addf %161, %164 : vector<16x128xf32>
    %c8_113 = arith.constant 8 : index
    %c0_114 = arith.constant 0 : index
    %c0_115 = arith.constant 0 : index
    %166 = vector.load %arg7[%c8_113, %c0_114, %c0_115] : memref<9x128x128xf32, #tpu.memory_space<vmem>>, vector<1x128x128xf32>
    %167 = vector.shape_cast %166 : vector<1x128x128xf32> to vector<128x128xf32>
    %cst_116 = arith.constant dense<0.000000e+00> : vector<16x128xf32>
    %168 = tpu.matmul %130, %167, %cst_116 {dimension_numbers = #tpu.dot_dimension_numbers<[1], [0], [0], [1], [0, 0, 1, 1], [], []>} : vector<16x128xf32>, vector<128x128xf32>, vector<16x128xf32> -> vector<16x128xf32>
    %169 = arith.addf %165, %168 : vector<16x128xf32>
    %c0_117 = arith.constant 0 : index
    %c0_118 = arith.constant 0 : index
    %c0_119 = arith.constant 0 : index
    %170 = vector.load %arg9[%c0_117, %c0_118, %c0_119] : memref<3x128x128xf32, #tpu.memory_space<vmem>>, vector<1x128x128xf32>
    %171 = vector.shape_cast %170 : vector<1x128x128xf32> to vector<128x128xf32>
    %cst_120 = arith.constant dense<0.000000e+00> : vector<16x128xf32>
    %172 = tpu.matmul %5, %171, %cst_120 {dimension_numbers = #tpu.dot_dimension_numbers<[1], [0], [0], [1], [0, 0, 1, 1], [], []>} : vector<16x128xf32>, vector<128x128xf32>, vector<16x128xf32> -> vector<16x128xf32>
    %c1_121 = arith.constant 1 : index
    %c0_122 = arith.constant 0 : index
    %c0_123 = arith.constant 0 : index
    %173 = vector.load %arg9[%c1_121, %c0_122, %c0_123] : memref<3x128x128xf32, #tpu.memory_space<vmem>>, vector<1x128x128xf32>
    %174 = vector.shape_cast %173 : vector<1x128x128xf32> to vector<128x128xf32>
    %cst_124 = arith.constant dense<0.000000e+00> : vector<16x128xf32>
    %175 = tpu.matmul %114, %174, %cst_124 {dimension_numbers = #tpu.dot_dimension_numbers<[1], [0], [0], [1], [0, 0, 1, 1], [], []>} : vector<16x128xf32>, vector<128x128xf32>, vector<16x128xf32> -> vector<16x128xf32>
    %176 = arith.addf %172, %175 : vector<16x128xf32>
    %c2_125 = arith.constant 2 : index
    %c0_126 = arith.constant 0 : index
    %c0_127 = arith.constant 0 : index
    %177 = vector.load %arg9[%c2_125, %c0_126, %c0_127] : memref<3x128x128xf32, #tpu.memory_space<vmem>>, vector<1x128x128xf32>
    %178 = vector.shape_cast %177 : vector<1x128x128xf32> to vector<128x128xf32>
    %cst_128 = arith.constant dense<0.000000e+00> : vector<16x128xf32>
    %179 = tpu.matmul %169, %178, %cst_128 {dimension_numbers = #tpu.dot_dimension_numbers<[1], [0], [0], [1], [0, 0, 1, 1], [], []>} : vector<16x128xf32>, vector<128x128xf32>, vector<16x128xf32> -> vector<16x128xf32>
    %180 = arith.addf %176, %179 : vector<16x128xf32>
    %c0_129 = arith.constant 0 : index
    %c0_130 = arith.constant 0 : index
    %181 = vector.load %arg10[%c0_129, %c0_130] : memref<1x128xf32, #tpu.memory_space<vmem>>, vector<1x128xf32>
    %182 = vector.broadcast %181 : vector<1x128xf32> to vector<16x128xf32>
    %183 = arith.addf %180, %182 : vector<16x128xf32>
    %cst_131 = arith.constant 0.000000e+00 : f32
    %184 = vector.broadcast %cst_131 : f32 to vector<16x128xf32>
    %185 = arith.maximumf %183, %184 : vector<16x128xf32>
    %c1_132 = arith.constant 1 : index
    %c0_133 = arith.constant 0 : index
    %186 = vector.load %arg14[%c1_132, %c0_133] : memref<18x128xf32, #tpu.memory_space<vmem>>, vector<16x128xf32>
    tpu.vector_store %arg14[%c1_132, %c0_133], %185 {strides = array<i32>} : memref<18x128xf32, #tpu.memory_space<vmem>>, vector<16x128xf32>,
    %c0_134 = arith.constant 0 : index
    %c0_135 = arith.constant 0 : index
    %187 = vector.load %arg14[%c0_134, %c0_135] : memref<18x128xf32, #tpu.memory_space<vmem>>, vector<18x128xf32>
    %cst_136 = arith.constant 0.000000e+00 : f32
    %188 = vector.broadcast %cst_136 : f32 to vector<18x8xf32>
    %189 = vector.extract_strided_slice %187 {offsets = [0, 0], sizes = [18, 120], strides = [1, 1]} : vector<18x128xf32> to vector<18x120xf32>
    %190 = tpu.concatenate %188, %189 in 1 : vector<18x8xf32>, vector<18x120xf32> -> vector<18x128xf32>
    %191 = vector.extract_strided_slice %187 {offsets = [0, 8], sizes = [18, 120], strides = [1, 1]} : vector<18x128xf32> to vector<18x120xf32>
    %192 = tpu.concatenate %191, %188 in 1 : vector<18x120xf32>, vector<18x8xf32> -> vector<18x128xf32>
    %193 = vector.extract_strided_slice %190 {offsets = [0, 0], sizes = [16, 128], strides = [1, 1]} : vector<18x128xf32> to vector<16x128xf32>
    %194 = vector.extract_strided_slice %187 {offsets = [0, 0], sizes = [16, 128], strides = [1, 1]} : vector<18x128xf32> to vector<16x128xf32>
    %195 = vector.extract_strided_slice %192 {offsets = [0, 0], sizes = [16, 128], strides = [1, 1]} : vector<18x128xf32> to vector<16x128xf32>
    %196 = vector.extract_strided_slice %190 {offsets = [1, 0], sizes = [16, 128], strides = [1, 1]} : vector<18x128xf32> to vector<16x128xf32>
    %197 = vector.extract_strided_slice %187 {offsets = [1, 0], sizes = [16, 128], strides = [1, 1]} : vector<18x128xf32> to vector<16x128xf32>
    %198 = vector.extract_strided_slice %192 {offsets = [1, 0], sizes = [16, 128], strides = [1, 1]} : vector<18x128xf32> to vector<16x128xf32>
    %199 = vector.extract_strided_slice %190 {offsets = [2, 0], sizes = [16, 128], strides = [1, 1]} : vector<18x128xf32> to vector<16x128xf32>
    %200 = vector.extract_strided_slice %187 {offsets = [2, 0], sizes = [16, 128], strides = [1, 1]} : vector<18x128xf32> to vector<16x128xf32>
    %201 = vector.extract_strided_slice %192 {offsets = [2, 0], sizes = [16, 128], strides = [1, 1]} : vector<18x128xf32> to vector<16x128xf32>
    %c0_137 = arith.constant 0 : index
    %c0_138 = arith.constant 0 : index
    %202 = vector.load %arg12[%c0_137, %c0_138] : memref<1x128xf32, #tpu.memory_space<vmem>>, vector<1x128xf32>
    %203 = vector.shape_cast %202 : vector<1x128xf32> to vector<1x128xf32>
    %204 = vector.broadcast %203 : vector<1x128xf32> to vector<16x128xf32>
    %c0_139 = arith.constant 0 : index
    %c0_140 = arith.constant 0 : index
    %c0_141 = arith.constant 0 : index
    %205 = vector.load %arg11[%c0_139, %c0_140, %c0_141] : memref<9x128x128xf32, #tpu.memory_space<vmem>>, vector<1x128x128xf32>
    %206 = vector.shape_cast %205 : vector<1x128x128xf32> to vector<128x128xf32>
    %cst_142 = arith.constant dense<0.000000e+00> : vector<16x128xf32>
    %207 = tpu.matmul %193, %206, %cst_142 {dimension_numbers = #tpu.dot_dimension_numbers<[1], [0], [0], [1], [0, 0, 1, 1], [], []>} : vector<16x128xf32>, vector<128x128xf32>, vector<16x128xf32> -> vector<16x128xf32>
    %208 = arith.addf %204, %207 : vector<16x128xf32>
    %c1_143 = arith.constant 1 : index
    %c0_144 = arith.constant 0 : index
    %c0_145 = arith.constant 0 : index
    %209 = vector.load %arg11[%c1_143, %c0_144, %c0_145] : memref<9x128x128xf32, #tpu.memory_space<vmem>>, vector<1x128x128xf32>
    %210 = vector.shape_cast %209 : vector<1x128x128xf32> to vector<128x128xf32>
    %cst_146 = arith.constant dense<0.000000e+00> : vector<16x128xf32>
    %211 = tpu.matmul %194, %210, %cst_146 {dimension_numbers = #tpu.dot_dimension_numbers<[1], [0], [0], [1], [0, 0, 1, 1], [], []>} : vector<16x128xf32>, vector<128x128xf32>, vector<16x128xf32> -> vector<16x128xf32>
    %212 = arith.addf %208, %211 : vector<16x128xf32>
    %c2_147 = arith.constant 2 : index
    %c0_148 = arith.constant 0 : index
    %c0_149 = arith.constant 0 : index
    %213 = vector.load %arg11[%c2_147, %c0_148, %c0_149] : memref<9x128x128xf32, #tpu.memory_space<vmem>>, vector<1x128x128xf32>
    %214 = vector.shape_cast %213 : vector<1x128x128xf32> to vector<128x128xf32>
    %cst_150 = arith.constant dense<0.000000e+00> : vector<16x128xf32>
    %215 = tpu.matmul %195, %214, %cst_150 {dimension_numbers = #tpu.dot_dimension_numbers<[1], [0], [0], [1], [0, 0, 1, 1], [], []>} : vector<16x128xf32>, vector<128x128xf32>, vector<16x128xf32> -> vector<16x128xf32>
    %216 = arith.addf %212, %215 : vector<16x128xf32>
    %c3_151 = arith.constant 3 : index
    %c0_152 = arith.constant 0 : index
    %c0_153 = arith.constant 0 : index
    %217 = vector.load %arg11[%c3_151, %c0_152, %c0_153] : memref<9x128x128xf32, #tpu.memory_space<vmem>>, vector<1x128x128xf32>
    %218 = vector.shape_cast %217 : vector<1x128x128xf32> to vector<128x128xf32>
    %cst_154 = arith.constant dense<0.000000e+00> : vector<16x128xf32>
    %219 = tpu.matmul %196, %218, %cst_154 {dimension_numbers = #tpu.dot_dimension_numbers<[1], [0], [0], [1], [0, 0, 1, 1], [], []>} : vector<16x128xf32>, vector<128x128xf32>, vector<16x128xf32> -> vector<16x128xf32>
    %220 = arith.addf %216, %219 : vector<16x128xf32>
    %c4_155 = arith.constant 4 : index
    %c0_156 = arith.constant 0 : index
    %c0_157 = arith.constant 0 : index
    %221 = vector.load %arg11[%c4_155, %c0_156, %c0_157] : memref<9x128x128xf32, #tpu.memory_space<vmem>>, vector<1x128x128xf32>
    %222 = vector.shape_cast %221 : vector<1x128x128xf32> to vector<128x128xf32>
    %cst_158 = arith.constant dense<0.000000e+00> : vector<16x128xf32>
    %223 = tpu.matmul %197, %222, %cst_158 {dimension_numbers = #tpu.dot_dimension_numbers<[1], [0], [0], [1], [0, 0, 1, 1], [], []>} : vector<16x128xf32>, vector<128x128xf32>, vector<16x128xf32> -> vector<16x128xf32>
    %224 = arith.addf %220, %223 : vector<16x128xf32>
    %c5_159 = arith.constant 5 : index
    %c0_160 = arith.constant 0 : index
    %c0_161 = arith.constant 0 : index
    %225 = vector.load %arg11[%c5_159, %c0_160, %c0_161] : memref<9x128x128xf32, #tpu.memory_space<vmem>>, vector<1x128x128xf32>
    %226 = vector.shape_cast %225 : vector<1x128x128xf32> to vector<128x128xf32>
    %cst_162 = arith.constant dense<0.000000e+00> : vector<16x128xf32>
    %227 = tpu.matmul %198, %226, %cst_162 {dimension_numbers = #tpu.dot_dimension_numbers<[1], [0], [0], [1], [0, 0, 1, 1], [], []>} : vector<16x128xf32>, vector<128x128xf32>, vector<16x128xf32> -> vector<16x128xf32>
    %228 = arith.addf %224, %227 : vector<16x128xf32>
    %c6_163 = arith.constant 6 : index
    %c0_164 = arith.constant 0 : index
    %c0_165 = arith.constant 0 : index
    %229 = vector.load %arg11[%c6_163, %c0_164, %c0_165] : memref<9x128x128xf32, #tpu.memory_space<vmem>>, vector<1x128x128xf32>
    %230 = vector.shape_cast %229 : vector<1x128x128xf32> to vector<128x128xf32>
    %cst_166 = arith.constant dense<0.000000e+00> : vector<16x128xf32>
    %231 = tpu.matmul %199, %230, %cst_166 {dimension_numbers = #tpu.dot_dimension_numbers<[1], [0], [0], [1], [0, 0, 1, 1], [], []>} : vector<16x128xf32>, vector<128x128xf32>, vector<16x128xf32> -> vector<16x128xf32>
    %232 = arith.addf %228, %231 : vector<16x128xf32>
    %c7_167 = arith.constant 7 : index
    %c0_168 = arith.constant 0 : index
    %c0_169 = arith.constant 0 : index
    %233 = vector.load %arg11[%c7_167, %c0_168, %c0_169] : memref<9x128x128xf32, #tpu.memory_space<vmem>>, vector<1x128x128xf32>
    %234 = vector.shape_cast %233 : vector<1x128x128xf32> to vector<128x128xf32>
    %cst_170 = arith.constant dense<0.000000e+00> : vector<16x128xf32>
    %235 = tpu.matmul %200, %234, %cst_170 {dimension_numbers = #tpu.dot_dimension_numbers<[1], [0], [0], [1], [0, 0, 1, 1], [], []>} : vector<16x128xf32>, vector<128x128xf32>, vector<16x128xf32> -> vector<16x128xf32>
    %236 = arith.addf %232, %235 : vector<16x128xf32>
    %c8_171 = arith.constant 8 : index
    %c0_172 = arith.constant 0 : index
    %c0_173 = arith.constant 0 : index
    %237 = vector.load %arg11[%c8_171, %c0_172, %c0_173] : memref<9x128x128xf32, #tpu.memory_space<vmem>>, vector<1x128x128xf32>
    %238 = vector.shape_cast %237 : vector<1x128x128xf32> to vector<128x128xf32>
    %cst_174 = arith.constant dense<0.000000e+00> : vector<16x128xf32>
    %239 = tpu.matmul %201, %238, %cst_174 {dimension_numbers = #tpu.dot_dimension_numbers<[1], [0], [0], [1], [0, 0, 1, 1], [], []>} : vector<16x128xf32>, vector<128x128xf32>, vector<16x128xf32> -> vector<16x128xf32>
    %240 = arith.addf %236, %239 : vector<16x128xf32>
    %241 = vector.shape_cast %240 : vector<16x128xf32> to vector<1x16x128xf32>
    %c0_175 = arith.constant 0 : index
    %c0_176 = arith.constant 0 : index
    %c0_177 = arith.constant 0 : index
    %242 = vector.load %arg13[%c0_175, %c0_176, %c0_177] : memref<1x16x128xf32, #tpu.memory_space<vmem>>, vector<1x16x128xf32>
    tpu.vector_store %arg13[%c0_175, %c0_176, %c0_177], %241 {strides = array<i32>} : memref<1x16x128xf32, #tpu.memory_space<vmem>>, vector<1x16x128xf32>,
    return
  }
  func.func @transform_0(%arg0: i32) -> (i32, i32, i32) {
    %c0_i32 = arith.constant 0 : i32
    %c0_i32_0 = arith.constant 0 : i32
    %c0_i32_1 = arith.constant 0 : i32
    return %arg0, %c0_i32, %c0_i32_0 : i32, i32, i32
  }
  func.func @transform_1(%arg0: i32) -> (i32, i32) {
    %c0_i32 = arith.constant 0 : i32
    %c0_i32_0 = arith.constant 0 : i32
    %c0_i32_1 = arith.constant 0 : i32
    return %c0_i32, %c0_i32_0 : i32, i32
  }
  func.func @transform_2(%arg0: i32) -> (i32, i32) {
    %c0_i32 = arith.constant 0 : i32
    %c0_i32_0 = arith.constant 0 : i32
    %c0_i32_1 = arith.constant 0 : i32
    return %c0_i32, %c0_i32_0 : i32, i32
  }
  func.func @transform_3(%arg0: i32) -> i32 {
    %c0_i32 = arith.constant 0 : i32
    %c0_i32_0 = arith.constant 0 : i32
    return %c0_i32 : i32
  }
  func.func @transform_4(%arg0: i32) -> (i32, i32, i32) {
    %c0_i32 = arith.constant 0 : i32
    %c0_i32_0 = arith.constant 0 : i32
    %c0_i32_1 = arith.constant 0 : i32
    %c0_i32_2 = arith.constant 0 : i32
    return %c0_i32, %c0_i32_0, %c0_i32_1 : i32, i32, i32
  }
  func.func @transform_5(%arg0: i32) -> (i32, i32, i32) {
    %c0_i32 = arith.constant 0 : i32
    %c0_i32_0 = arith.constant 0 : i32
    %c0_i32_1 = arith.constant 0 : i32
    %c0_i32_2 = arith.constant 0 : i32
    return %c0_i32, %c0_i32_0, %c0_i32_1 : i32, i32, i32
  }
  func.func @transform_6(%arg0: i32) -> (i32, i32, i32) {
    %c0_i32 = arith.constant 0 : i32
    %c0_i32_0 = arith.constant 0 : i32
    %c0_i32_1 = arith.constant 0 : i32
    %c0_i32_2 = arith.constant 0 : i32
    return %c0_i32, %c0_i32_0, %c0_i32_1 : i32, i32, i32
  }
  func.func @transform_7(%arg0: i32) -> (i32, i32) {
    %c0_i32 = arith.constant 0 : i32
    %c0_i32_0 = arith.constant 0 : i32
    %c0_i32_1 = arith.constant 0 : i32
    return %c0_i32, %c0_i32_0 : i32, i32
  }
  func.func @transform_8(%arg0: i32) -> (i32, i32, i32) {
    %c0_i32 = arith.constant 0 : i32
    %c0_i32_0 = arith.constant 0 : i32
    %c0_i32_1 = arith.constant 0 : i32
    %c0_i32_2 = arith.constant 0 : i32
    return %c0_i32, %c0_i32_0, %c0_i32_1 : i32, i32, i32
  }
  func.func @transform_9(%arg0: i32) -> (i32, i32) {
    %c0_i32 = arith.constant 0 : i32
    %c0_i32_0 = arith.constant 0 : i32
    %c0_i32_1 = arith.constant 0 : i32
    return %c0_i32, %c0_i32_0 : i32, i32
  }
  func.func @transform_10(%arg0: i32) -> (i32, i32, i32) {
    %c0_i32 = arith.constant 0 : i32
    %c0_i32_0 = arith.constant 0 : i32
    %c0_i32_1 = arith.constant 0 : i32
    %c0_i32_2 = arith.constant 0 : i32
    return %c0_i32, %c0_i32_0, %c0_i32_1 : i32, i32, i32
  }
  func.func @transform_11(%arg0: i32) -> (i32, i32) {
    %c0_i32 = arith.constant 0 : i32
    %c0_i32_0 = arith.constant 0 : i32
    %c0_i32_1 = arith.constant 0 : i32
    return %c0_i32, %c0_i32_0 : i32, i32
  }
  func.func @transform_12(%arg0: i32) -> (i32, i32, i32) {
    %c0_i32 = arith.constant 0 : i32
    %c0_i32_0 = arith.constant 0 : i32
    %c0_i32_1 = arith.constant 0 : i32
    return %arg0, %c0_i32, %c0_i32_0 : i32, i32, i32
  }
}

</mosaic_0001>

<llo_original>
// kernel: tpu_custom_call.1
$region0: #{tpu_custom_call.1}
  #allocation0 [shape = 'u32[]', space=smem, size = 0x4, offset = 0x4, fixed_abs, tag = 'smem constant byte address 0x4 - core index']
  #allocation1 [shape = 'u32[144,128]{1,0:T(1,128)}', space=vmem, size = 0x12000, scoped, tag = 'internal scratch']
  #allocation2 [shape = 'f32[18,128]{1,0:T(8,128)}', space=vmem, size = 0x3000, scoped, tag = 'scratch operand']
  #allocation3 [shape = 'f32[1]{0:T(128)S(6)}', space=smem, size = 0x200, scoped, tag = 'scoped memory for tpu_custom_call.1']
  %s0 = inlined_call_operand.vmem [shape: f32[2,16,128], index: 0, kind: input, shape index: {}]
  %s1 = inlined_call_operand.vmem [shape: f32[128,32], index: 1, kind: input, shape index: {}]
  %s2 = inlined_call_operand.vmem [shape: f32[1,32], index: 2, kind: input, shape index: {}]
  %s3 = inlined_call_operand.<no memory space> [shape: f32[1], index: 3, kind: input, shape index: {}]
  %s4 = inlined_call_operand.hbm [shape: f32[9,32,128], index: 4, kind: input, shape index: {}]
  %s5 = inlined_call_operand.vmem [shape: f32[9,1,128], index: 5, kind: input, shape index: {}]
  %s6 = inlined_call_operand.hbm [shape: f32[9,128,128], index: 6, kind: input, shape index: {}]
  %s7 = inlined_call_operand.vmem [shape: f32[1,128], index: 7, kind: input, shape index: {}]
  %s8 = inlined_call_operand.hbm [shape: f32[3,128,128], index: 8, kind: input, shape index: {}]
  %s9 = inlined_call_operand.vmem [shape: f32[1,128], index: 9, kind: input, shape index: {}]
  %s10 = inlined_call_operand.hbm [shape: f32[9,128,128], index: 10, kind: input, shape index: {}]
  %s11 = inlined_call_operand.vmem [shape: f32[1,128], index: 11, kind: input, shape index: {}]
  %s12 = inlined_call_operand.hbm [shape: f32[2,16,128], index: 12, kind: output, shape index: {}]
  %s13 = sld [smem:[#allocation0]]
  $region97: #{tpu_custom_call.1} parent=0
    _
  %s15 = ssub.s32 1, %s13
  %s16 = scalar_select 0, %s15, %s13
  %17 = sst [smem:[#allocation3]] %s3
  $region1: #{tpu_custom_call.1} parent=0
    #allocation4 [shape = 'u8[147456]{0}', space=vmem, size = 0x24000, scoped, tag = 'input window, operand 4, single buffered']
    #allocation5 [shape = 's32[2]{0}', space=sflag, size = 0x8, scoped, tag = 'scoped memory for tpu_custom_call.1']
    #allocation6 [shape = 's32[2]{0}', space=sflag, size = 0x8, scoped, tag = 'scoped memory for tpu_custom_call.1']
    #allocation7 [shape = 'u8[589824]{0}', space=vmem, size = 0x90000, scoped, tag = 'input window, operand 6, single buffered']
    #allocation8 [shape = 's32[1]{0}', space=sflag, size = 0x4, scoped, tag = 'scoped memory for tpu_custom_call.1']
    #allocation9 [shape = 'u8[196608]{0}', space=vmem, size = 0x30000, scoped, tag = 'input window, operand 8, single buffered']
    #allocation10 [shape = 'u8[589824]{0}', space=vmem, size = 0x90000, scoped, tag = 'input window, operand 10, single buffered']
    #allocation11 [shape = 's32[1]{0}', space=sflag, size = 0x4, scoped, tag = 'scoped memory for tpu_custom_call.1']
    #allocation12 [shape = 'u8[16384]{0}', space=vmem, size = 0x4000, scoped, tag = 'output window, operand 0']
    %18 = vsyncpa [#allocation5], 0
    %19 = vsyncpa [#allocation8], 0
    %20 = vsyncpa [#allocation11], 0
    %21 = vsyncpa [#allocation6], 0
    %s22 = scalar_lea.sflag [#allocation6], 1
    %23 = vsyncpa %s22, 0
    loop: start=0, step=1, limit=4
    $region2: #{tpu_custom_call.1} parent=1 // loop_pre_header
      _
    $region3: #{tpu_custom_call.1} parent=1 // loop_header
      %s25 = sphi 0, %s29
      %p26 = scmp.ge.s32.totalorder %s25, 4
      %s35 = sphi 0, %s37
      %s38 = sphi 0, %s35
      %s39 = sphi 0, %s38
      %s55 = sphi 0, %s39
      %s59 = sphi 0, %s59
      %s61 = sphi 0, %s59
      %s62 = sphi 0, %s61
      %s76 = sphi 0, %s62
      %s80 = sphi 0, %s80
      %s82 = sphi 0, %s80
      %s83 = sphi 0, %s82
      %s97 = sphi 0, %s83
      %s101 = sphi 0, %s101
      %s103 = sphi 0, %s101
      %s104 = sphi 0, %s103
      %s118 = sphi 0, %s104
      %s122 = sphi 0, %s122
      %s124 = sphi 0, %s122
      %s125 = sphi 0, %s124
      %s139 = sphi 0, %s125
      %s143 = sphi 0, %s143
      %s145 = sphi 0, %s143
      %s146 = sphi 0, %s145
      %s160 = sphi 0, %s146
      %s164 = sphi 0, %s164
      %s166 = sphi 0, %s164
      %s167 = sphi 0, %s166
      %s181 = sphi 0, %s167
      %s185 = sphi 0, %s185
      %s187 = sphi 0, %s185
      %s188 = sphi 0, %s187
      %s202 = sphi 0, %s188
      %s206 = sphi 0, %s206
      %s208 = sphi 0, %s206
      %s209 = sphi 0, %s208
      %s223 = sphi 0, %s209
      %s227 = sphi 0, %s227
      %s229 = sphi 0, %s227
      %s230 = sphi 0, %s229
      %s244 = sphi 0, %s230
      %s248 = sphi 0, %s248
      %s250 = sphi 0, %s248
      %s251 = sphi 0, %s250
      %s265 = sphi 0, %s251
      %s269 = sphi 0, %s269
      %s271 = sphi 0, %s269
      %s272 = sphi 0, %s271
      %s286 = sphi 0, %s272
      %s292 = sphi 0, %s294
      %s295 = sphi 0, %s292
      %s296 = sphi 0, %s295
      %s312 = sphi 0, %s296
    $region4: #{tpu_custom_call.1} parent=1 // loop_header_branch
      %28 = sbr.rel (%p26) target = $region8
    $region5: #{tpu_custom_call.1} parent=1 // loop_body
      %s30 = ssub.s32 %s25, 1
      %s31 = ssub.s32 %s25, 2
      %s32 = sadd.s32 %s25, 1
      %s33 = ssub.s32 %s25, %s32
      %p34 = scmp.eq.s32.totalorder %s33, 0
      %s36 = sadd.s32 %s35, 1
      %s37 = scalar_select %p34, %s35, %s36
      %p40 = pneg %p34
      %p41 = scmp.eq.s32.totalorder %s25, 1
      %p42 = por %p40, %p41
      %p43 = scmp.ne.s32.totalorder %s35, %s38
      %p44 = scmp.eq.s32.totalorder %s25, 0
      %p45 = por %p43, %p44
      %p46 = scmp.ne.s32.totalorder %s35, %s38
      %p47 = scmp.eq.s32.totalorder %s30, 1
      %p48 = por %p46, %p47
      %p49 = scmp.ne.s32.totalorder %s38, %s39
      %p50 = scmp.eq.s32.totalorder %s30, 0
      %p51 = por %p49, %p50
      %p52 = scmp.ne.s32.totalorder %s38, %s39
      %p53 = scmp.eq.s32.totalorder %s31, 1
      %p54 = por %p52, %p53
      %p56 = scmp.ne.s32.totalorder %s39, %s55
      %p57 = scmp.eq.s32.totalorder %s31, 0
      %p58 = por %p56, %p57
      %s60 = sadd.s32 %s59, 1
      %p63 = scmp.eq.s32.totalorder %s25, 1
      %p64 = scmp.ne.s32.totalorder %s59, %s61
      %p65 = scmp.eq.s32.totalorder %s25, 0
      %p66 = por %p64, %p65
      %p67 = scmp.ne.s32.totalorder %s59, %s61
      %p68 = scmp.eq.s32.totalorder %s30, 1
      %p69 = por %p67, %p68
      %p70 = scmp.ne.s32.totalorder %s61, %s62
      %p71 = scmp.eq.s32.totalorder %s30, 0
      %p72 = por %p70, %p71
      %p73 = scmp.ne.s32.totalorder %s61, %s62
      %p74 = scmp.eq.s32.totalorder %s31, 1
      %p75 = por %p73, %p74
      %p77 = scmp.ne.s32.totalorder %s62, %s76
      %p78 = scmp.eq.s32.totalorder %s31, 0
      %p79 = por %p77, %p78
      %s81 = sadd.s32 %s80, 1
      %p84 = scmp.eq.s32.totalorder %s25, 1
      %p85 = scmp.ne.s32.totalorder %s80, %s82
      %p86 = scmp.eq.s32.totalorder %s25, 0
      %p87 = por %p85, %p86
      %p88 = scmp.ne.s32.totalorder %s80, %s82
      %p89 = scmp.eq.s32.totalorder %s30, 1
      %p90 = por %p88, %p89
      %p91 = scmp.ne.s32.totalorder %s82, %s83
      %p92 = scmp.eq.s32.totalorder %s30, 0
      %p93 = por %p91, %p92
      %p94 = scmp.ne.s32.totalorder %s82, %s83
      %p95 = scmp.eq.s32.totalorder %s31, 1
      %p96 = por %p94, %p95
      %p98 = scmp.ne.s32.totalorder %s83, %s97
      %p99 = scmp.eq.s32.totalorder %s31, 0
      %p100 = por %p98, %p99
      %s102 = sadd.s32 %s101, 1
      %p105 = scmp.eq.s32.totalorder %s25, 1
      %p106 = scmp.ne.s32.totalorder %s101, %s103
      %p107 = scmp.eq.s32.totalorder %s25, 0
      %p108 = por %p106, %p107
      %p109 = scmp.ne.s32.totalorder %s101, %s103
      %p110 = scmp.eq.s32.totalorder %s30, 1
      %p111 = por %p109, %p110
      %p112 = scmp.ne.s32.totalorder %s103, %s104
      %p113 = scmp.eq.s32.totalorder %s30, 0
      %p114 = por %p112, %p113
      %p115 = scmp.ne.s32.totalorder %s103, %s104
      %p116 = scmp.eq.s32.totalorder %s31, 1
      %p117 = por %p115, %p116
      %p119 = scmp.ne.s32.totalorder %s104, %s118
      %p120 = scmp.eq.s32.totalorder %s31, 0
      %p121 = por %p119, %p120
      %s123 = sadd.s32 %s122, 1
      %p126 = scmp.eq.s32.totalorder %s25, 1
      %p127 = scmp.ne.s32.totalorder %s122, %s124
      %p128 = scmp.eq.s32.totalorder %s25, 0
      %p129 = por %p127, %p128
      %p130 = scmp.ne.s32.totalorder %s122, %s124
      %p131 = scmp.eq.s32.totalorder %s30, 1
      %p132 = por %p130, %p131
      %p133 = scmp.ne.s32.totalorder %s124, %s125
      %p134 = scmp.eq.s32.totalorder %s30, 0
      %p135 = por %p133, %p134
      %p136 = scmp.ne.s32.totalorder %s124, %s125
      %p137 = scmp.eq.s32.totalorder %s31, 1
      %p138 = por %p136, %p137
      %p140 = scmp.ne.s32.totalorder %s125, %s139
      %p141 = scmp.eq.s32.totalorder %s31, 0
      %p142 = por %p140, %p141
      %s144 = sadd.s32 %s143, 1
      %p147 = scmp.eq.s32.totalorder %s25, 1
      %p148 = scmp.ne.s32.totalorder %s143, %s145
      %p149 = scmp.eq.s32.totalorder %s25, 0
      %p150 = por %p148, %p149
      %p151 = scmp.ne.s32.totalorder %s143, %s145
      %p152 = scmp.eq.s32.totalorder %s30, 1
      %p153 = por %p151, %p152
      %p154 = scmp.ne.s32.totalorder %s145, %s146
      %p155 = scmp.eq.s32.totalorder %s30, 0
      %p156 = por %p154, %p155
      %p157 = scmp.ne.s32.totalorder %s145, %s146
      %p158 = scmp.eq.s32.totalorder %s31, 1
      %p159 = por %p157, %p158
      %p161 = scmp.ne.s32.totalorder %s146, %s160
      %p162 = scmp.eq.s32.totalorder %s31, 0
      %p163 = por %p161, %p162
      %s165 = sadd.s32 %s164, 1
      %p168 = scmp.eq.s32.totalorder %s25, 1
      %p169 = scmp.ne.s32.totalorder %s164, %s166
      %p170 = scmp.eq.s32.totalorder %s25, 0
      %p171 = por %p169, %p170
      %p172 = scmp.ne.s32.totalorder %s164, %s166
      %p173 = scmp.eq.s32.totalorder %s30, 1
      %p174 = por %p172, %p173
      %p175 = scmp.ne.s32.totalorder %s166, %s167
      %p176 = scmp.eq.s32.totalorder %s30, 0
      %p177 = por %p175, %p176
      %p178 = scmp.ne.s32.totalorder %s166, %s167
      %p179 = scmp.eq.s32.totalorder %s31, 1
      %p180 = por %p178, %p179
      %p182 = scmp.ne.s32.totalorder %s167, %s181
      %p183 = scmp.eq.s32.totalorder %s31, 0
      %p184 = por %p182, %p183
      %s186 = sadd.s32 %s185, 1
      %p189 = scmp.eq.s32.totalorder %s25, 1
      %p190 = scmp.ne.s32.totalorder %s185, %s187
      %p191 = scmp.eq.s32.totalorder %s25, 0
      %p192 = por %p190, %p191
      %p193 = scmp.ne.s32.totalorder %s185, %s187
      %p194 = scmp.eq.s32.totalorder %s30, 1
      %p195 = por %p193, %p194
      %p196 = scmp.ne.s32.totalorder %s187, %s188
      %p197 = scmp.eq.s32.totalorder %s30, 0
      %p198 = por %p196, %p197
      %p199 = scmp.ne.s32.totalorder %s187, %s188
      %p200 = scmp.eq.s32.totalorder %s31, 1
      %p201 = por %p199, %p200
      %p203 = scmp.ne.s32.totalorder %s188, %s202
      %p204 = scmp.eq.s32.totalorder %s31, 0
      %p205 = por %p203, %p204
      %s207 = sadd.s32 %s206, 1
      %p210 = scmp.eq.s32.totalorder %s25, 1
      %p211 = scmp.ne.s32.totalorder %s206, %s208
      %p212 = scmp.eq.s32.totalorder %s25, 0
      %p213 = por %p211, %p212
      %p214 = scmp.ne.s32.totalorder %s206, %s208
      %p215 = scmp.eq.s32.totalorder %s30, 1
      %p216 = por %p214, %p215
      %p217 = scmp.ne.s32.totalorder %s208, %s209
      %p218 = scmp.eq.s32.totalorder %s30, 0
      %p219 = por %p217, %p218
      %p220 = scmp.ne.s32.totalorder %s208, %s209
      %p221 = scmp.eq.s32.totalorder %s31, 1
      %p222 = por %p220, %p221
      %p224 = scmp.ne.s32.totalorder %s209, %s223
      %p225 = scmp.eq.s32.totalorder %s31, 0
      %p226 = por %p224, %p225
      %s228 = sadd.s32 %s227, 1
      %p231 = scmp.eq.s32.totalorder %s25, 1
      %p232 = scmp.ne.s32.totalorder %s227, %s229
      %p233 = scmp.eq.s32.totalorder %s25, 0
      %p234 = por %p232, %p233
      %p235 = scmp.ne.s32.totalorder %s227, %s229
      %p236 = scmp.eq.s32.totalorder %s30, 1
      %p237 = por %p235, %p236
      %p238 = scmp.ne.s32.totalorder %s229, %s230
      %p239 = scmp.eq.s32.totalorder %s30, 0
      %p240 = por %p238, %p239
      %p241 = scmp.ne.s32.totalorder %s229, %s230
      %p242 = scmp.eq.s32.totalorder %s31, 1
      %p243 = por %p241, %p242
      %p245 = scmp.ne.s32.totalorder %s230, %s244
      %p246 = scmp.eq.s32.totalorder %s31, 0
      %p247 = por %p245, %p246
      %s249 = sadd.s32 %s248, 1
      %p252 = scmp.eq.s32.totalorder %s25, 1
      %p253 = scmp.ne.s32.totalorder %s248, %s250
      %p254 = scmp.eq.s32.totalorder %s25, 0
      %p255 = por %p253, %p254
      %p256 = scmp.ne.s32.totalorder %s248, %s250
      %p257 = scmp.eq.s32.totalorder %s30, 1
      %p258 = por %p256, %p257
      %p259 = scmp.ne.s32.totalorder %s250, %s251
      %p260 = scmp.eq.s32.totalorder %s30, 0
      %p261 = por %p259, %p260
      %p262 = scmp.ne.s32.totalorder %s250, %s251
      %p263 = scmp.eq.s32.totalorder %s31, 1
      %p264 = por %p262, %p263
      %p266 = scmp.ne.s32.totalorder %s251, %s265
      %p267 = scmp.eq.s32.totalorder %s31, 0
      %p268 = por %p266, %p267
      %s270 = sadd.s32 %s269, 1
      %p273 = scmp.eq.s32.totalorder %s25, 1
      %p274 = scmp.ne.s32.totalorder %s269, %s271
      %p275 = scmp.eq.s32.totalorder %s25, 0
      %p276 = por %p274, %p275
      %p277 = scmp.ne.s32.totalorder %s269, %s271
      %p278 = scmp.eq.s32.totalorder %s30, 1
      %p279 = por %p277, %p278
      %p280 = scmp.ne.s32.totalorder %s271, %s272
      %p281 = scmp.eq.s32.totalorder %s30, 0
      %p282 = por %p280, %p281
      %p283 = scmp.ne.s32.totalorder %s271, %s272
      %p284 = scmp.eq.s32.totalorder %s31, 1
      %p285 = por %p283, %p284
      %p287 = scmp.ne.s32.totalorder %s272, %s286
      %p288 = scmp.eq.s32.totalorder %s31, 0
      %p289 = por %p287, %p288
      %s290 = ssub.s32 %s25, %s32
      %p291 = scmp.eq.s32.totalorder %s290, 0
      %s293 = sadd.s32 %s292, 1
      %s294 = scalar_select %p291, %s292, %s293
      %p297 = pneg %p291
      %p298 = scmp.eq.s32.totalorder %s25, 1
      %p299 = por %p297, %p298
      %p300 = scmp.ne.s32.totalorder %s292, %s295
      %p301 = scmp.eq.s32.totalorder %s25, 0
      %p302 = por %p300, %p301
      %p303 = scmp.ne.s32.totalorder %s292, %s295
      %p304 = scmp.eq.s32.totalorder %s30, 1
      %p305 = por %p303, %p304
      %p306 = scmp.ne.s32.totalorder %s295, %s296
      %p307 = scmp.eq.s32.totalorder %s30, 0
      %p308 = por %p306, %p307
      %p309 = scmp.ne.s32.totalorder %s295, %s296
      %p310 = scmp.eq.s32.totalorder %s31, 1
      %p311 = por %p309, %p310
      %p313 = scmp.ne.s32.totalorder %s296, %s312
      %p314 = scmp.eq.s32.totalorder %s31, 0
      %p315 = por %p313, %p314
      %p316 = scmp.le.s32.totalorder 1, %s25
      %p317 = scmp.lt.s32.totalorder %s25, 3
      %p318 = pnand %p316, %p317
      %p319 = pneg %p318
      // Predicated region
      $region9: #{tpu_custom_call.1} parent=5 // pred_check
        _
      $region10: #{tpu_custom_call.1} parent=5 // pred_check_branch
        %321 = sbr.rel (%p318) target = $region12
      $region11: #{tpu_custom_call.1} parent=5 // pred_region
        %s322 = ssub.s32 %s25, 1
        // Predicated region
        $region13: #{tpu_custom_call.1} parent=11 // pred_check
          %p323 = pneg %p72
        $region14: #{tpu_custom_call.1} parent=11 // pred_check_branch
          %325 = sbr.rel (%p323) target = $region16
        $region15: #{tpu_custom_call.1} parent=11 // pred_region
          _
        $region16: #{tpu_custom_call.1} parent=11 // pred_fallthru
          _
        // Predicated region
        $region17: #{tpu_custom_call.1} parent=11 // pred_check
          %p326 = pneg %p93
        $region18: #{tpu_custom_call.1} parent=11 // pred_check_branch
          %328 = sbr.rel (%p326) target = $region20
        $region19: #{tpu_custom_call.1} parent=11 // pred_region
          _
        $region20: #{tpu_custom_call.1} parent=11 // pred_fallthru
          _
        // Predicated region
        $region21: #{tpu_custom_call.1} parent=11 // pred_check
          %p329 = pneg %p114
        $region22: #{tpu_custom_call.1} parent=11 // pred_check_branch
          %331 = sbr.rel (%p329) target = $region24
        $region23: #{tpu_custom_call.1} parent=11 // pred_region
          _
        $region24: #{tpu_custom_call.1} parent=11 // pred_fallthru
          _
        // Predicated region
        $region25: #{tpu_custom_call.1} parent=11 // pred_check
          %p332 = pneg %p135
        $region26: #{tpu_custom_call.1} parent=11 // pred_check_branch
          %334 = sbr.rel (%p332) target = $region28
        $region27: #{tpu_custom_call.1} parent=11 // pred_region
          %s336 = ssub.s32 4608, 4608
          %337 = vsyncadd [#allocation5], %s336
          %s338 = sshll.u32 [#allocation4], 4
          %s339 = int_to_ptr.vmem [resolvable:$true] %s338
          %344 = dma.hbm_to_vmem [thread:$0]  %s4, 4608, %s339, [#allocation5], 128, 128, 8
        $region28: #{tpu_custom_call.1} parent=11 // pred_fallthru
          _
        // Predicated region
        $region29: #{tpu_custom_call.1} parent=11 // pred_check
          %p345 = pneg %p156
        $region30: #{tpu_custom_call.1} parent=11 // pred_check_branch
          %347 = sbr.rel (%p345) target = $region32
        $region31: #{tpu_custom_call.1} parent=11 // pred_region
          _
        $region32: #{tpu_custom_call.1} parent=11 // pred_fallthru
          _
        // Predicated region
        $region33: #{tpu_custom_call.1} parent=11 // pred_check
          %p348 = pneg %p177
        $region34: #{tpu_custom_call.1} parent=11 // pred_check_branch
          %350 = sbr.rel (%p348) target = $region36
        $region35: #{tpu_custom_call.1} parent=11 // pred_region
          %s352 = ssub.s32 18432, 18432
          %353 = vsyncadd [#allocation8], %s352
          %s354 = sshll.u32 [#allocation7], 4
          %s355 = int_to_ptr.vmem [resolvable:$true] %s354
          %360 = dma.hbm_to_vmem [thread:$0]  %s6, 18432, %s355, [#allocation8], 128, 128, 8
        $region36: #{tpu_custom_call.1} parent=11 // pred_fallthru
          _
        // Predicated region
        $region37: #{tpu_custom_call.1} parent=11 // pred_check
          %p361 = pneg %p198
        $region38: #{tpu_custom_call.1} parent=11 // pred_check_branch
          %363 = sbr.rel (%p361) target = $region40
        $region39: #{tpu_custom_call.1} parent=11 // pred_region
          _
        $region40: #{tpu_custom_call.1} parent=11 // pred_fallthru
          _
        // Predicated region
        $region41: #{tpu_custom_call.1} parent=11 // pred_check
          %p364 = pneg %p219
        $region42: #{tpu_custom_call.1} parent=11 // pred_check_branch
          %366 = sbr.rel (%p364) target = $region44
        $region43: #{tpu_custom_call.1} parent=11 // pred_region
          %s368 = ssub.s32 6144, 6144
          %369 = vsyncadd [#allocation8], %s368
          %s370 = sshll.u32 [#allocation9], 4
          %s371 = int_to_ptr.vmem [resolvable:$true] %s370
          %376 = dma.hbm_to_vmem [thread:$0]  %s8, 6144, %s371, [#allocation8], 128, 128, 8
        $region44: #{tpu_custom_call.1} parent=11 // pred_fallthru
          _
        // Predicated region
        $region45: #{tpu_custom_call.1} parent=11 // pred_check
          %p377 = pneg %p240
        $region46: #{tpu_custom_call.1} parent=11 // pred_check_branch
          %379 = sbr.rel (%p377) target = $region48
        $region47: #{tpu_custom_call.1} parent=11 // pred_region
          _
        $region48: #{tpu_custom_call.1} parent=11 // pred_fallthru
          _
        // Predicated region
        $region49: #{tpu_custom_call.1} parent=11 // pred_check
          %p380 = pneg %p261
        $region50: #{tpu_custom_call.1} parent=11 // pred_check_branch
          %382 = sbr.rel (%p380) target = $region52
        $region51: #{tpu_custom_call.1} parent=11 // pred_region
          %s384 = ssub.s32 18432, 18432
          %385 = vsyncadd [#allocation11], %s384
          %s386 = sshll.u32 [#allocation10], 4
          %s387 = int_to_ptr.vmem [resolvable:$true] %s386
          %392 = dma.hbm_to_vmem [thread:$0]  %s10, 18432, %s387, [#allocation11], 128, 128, 8
        $region52: #{tpu_custom_call.1} parent=11 // pred_fallthru
          _
        // Predicated region
        $region53: #{tpu_custom_call.1} parent=11 // pred_check
          %p393 = pneg %p282
        $region54: #{tpu_custom_call.1} parent=11 // pred_check_branch
          %395 = sbr.rel (%p393) target = $region56
        $region55: #{tpu_custom_call.1} parent=11 // pred_region
          _
        $region56: #{tpu_custom_call.1} parent=11 // pred_fallthru
          _
      $region12: #{tpu_custom_call.1} parent=5 // pred_fallthru
        _
      %p396 = scmp.lt.s32.totalorder %s25, 2
      // Predicated region
      $region57: #{tpu_custom_call.1} parent=5 // pred_check
        %p397 = pneg %p396
      $region58: #{tpu_custom_call.1} parent=5 // pred_check_branch
        %399 = sbr.rel (%p397) target = $region60
      $region59: #{tpu_custom_call.1} parent=5 // pred_region
        // Predicated region
        $region61: #{tpu_custom_call.1} parent=59 // pred_check
          %p400 = pneg %p45
        $region62: #{tpu_custom_call.1} parent=59 // pred_check_branch
          %402 = sbr.rel (%p400) target = $region64
        $region63: #{tpu_custom_call.1} parent=59 // pred_region
          %p403 = scmp.lt.s32.totalorder %s25, 1
          %s404 = scalar_select %p403, %s25, 1
          %s405 = smul.addr %s404, 2
          %s406 = smul.addr %s405, 8
          %s407 = scalar_lea.vmem %s0, %s406
        $region64: #{tpu_custom_call.1} parent=59 // pred_fallthru
          _
      $region60: #{tpu_custom_call.1} parent=5 // pred_fallthru
        _
      %p408 = scmp.le.s32.totalorder 1, %s25
      %p409 = scmp.lt.s32.totalorder %s25, 3
      %p410 = pnand %p408, %p409
      %p411 = pneg %p410
      // Predicated region
      $region65: #{tpu_custom_call.1} parent=5 // pred_check
        _
      $region66: #{tpu_custom_call.1} parent=5 // pred_check_branch
        %413 = sbr.rel (%p410) target = $region68
      $region67: #{tpu_custom_call.1} parent=5 // pred_region
        %s414 = ssub.s32 %s25, 1
        // Predicated region
        $region69: #{tpu_custom_call.1} parent=67 // pred_check
          %p415 = pneg %p135
        $region70: #{tpu_custom_call.1} parent=67 // pred_check_branch
          %417 = sbr.rel (%p415) target = $region72
        $region71: #{tpu_custom_call.1} parent=67 // pred_region
          %418 = dma.done [#allocation5], 4608
        $region72: #{tpu_custom_call.1} parent=67 // pred_fallthru
          _
        // Predicated region
        $region73: #{tpu_custom_call.1} parent=67 // pred_check
          %p419 = pneg %p177
        $region74: #{tpu_custom_call.1} parent=67 // pred_check_branch
          %421 = sbr.rel (%p419) target = $region76
        $region75: #{tpu_custom_call.1} parent=67 // pred_region
          %422 = dma.done [#allocation8], 18432
        $region76: #{tpu_custom_call.1} parent=67 // pred_fallthru
          _
        // Predicated region
        $region77: #{tpu_custom_call.1} parent=67 // pred_check
          %p423 = pneg %p219
        $region78: #{tpu_custom_call.1} parent=67 // pred_check_branch
          %425 = sbr.rel (%p423) target = $region80
        $region79: #{tpu_custom_call.1} parent=67 // pred_region
          %426 = dma.done [#allocation8], 6144
        $region80: #{tpu_custom_call.1} parent=67 // pred_fallthru
          _
        // Predicated region
        $region81: #{tpu_custom_call.1} parent=67 // pred_check
          %p427 = pneg %p261
        $region82: #{tpu_custom_call.1} parent=67 // pred_check_branch
          %429 = sbr.rel (%p427) target = $region84
        $region83: #{tpu_custom_call.1} parent=67 // pred_region
          %430 = dma.done [#allocation11], 18432
        $region84: #{tpu_custom_call.1} parent=67 // pred_fallthru
          _
        %p431 = scmp.lt.s32.totalorder %s30, 1
        %s432 = scalar_select %p431, %s30, 1
        %s433 = smul.addr %s432, 2
        %s434 = smul.addr %s433, 8
        %s435 = scalar_lea.vmem %s0, %s434
        %p436 = pneg %p51
        %p437 = pneg %p48
        %p438 = pneg %p72
        %p439 = pneg %p69
        %p440 = pneg %p93
        %p441 = pneg %p90
        %p442 = pneg %p114
        %p443 = pneg %p111
        %p444 = pneg %p135
        %p445 = pneg %p132
        %p446 = pneg %p156
        %p447 = pneg %p153
        %p448 = pneg %p177
        %p449 = pneg %p174
        %p450 = pneg %p198
        %p451 = pneg %p195
        %p452 = pneg %p219
        %p453 = pneg %p216
        %p454 = pneg %p240
        %p455 = pneg %p237
        %p456 = pneg %p261
        %p457 = pneg %p258
        %p458 = pneg %p282
        %p459 = pneg %p279
        %p460 = pneg %p308
        %p461 = pneg %p305
        %s462 = sand.u32 %s295, 1
        %s463 = scalar_lea.sflag [#allocation6], %s462
        %s464 = sand.u32 %s295, 1
        %s465 = smul.addr %s464, 16
        %s466 = scalar_lea.vmem [#allocation12], %s465
        %p467 = scmp.lt.s32.totalorder %s30, 1
        %s468 = scalar_select %p467, %s30, 1
        %s469 = smul.addr %s468, 2
        %s470 = smul.addr %s469, 8
        %s471 = scalar_lea.vmem %s0, %s470
        %472 = vst [vmem:[#allocation2] sm:$0x1] 0.0
        %473 = vst [vmem:[#allocation2 + $0x11] sm:$0x1] 0.0
        %v474 = vld [vmem:[%s471] sm:$0xff]
        %v475 = vld [vmem:[%s471 + $0x8] sm:$0xff]
        %v476 = vld [vmem:[%s1] sm:$0xff]
        %v477 = vld [vmem:[%s1 + $0x8] sm:$0xff]
        %v478 = vld [vmem:[%s1 + $0x10] sm:$0xff]
        %v479 = vld [vmem:[%s1 + $0x18] sm:$0xff]
        %v480 = vld [vmem:[%s1 + $0x20] sm:$0xff]
        %v481 = vld [vmem:[%s1 + $0x28] sm:$0xff]
        %v482 = vld [vmem:[%s1 + $0x30] sm:$0xff]
        %v483 = vld [vmem:[%s1 + $0x38] sm:$0xff]
        %v484 = vld [vmem:[%s1 + $0x40] sm:$0xff]
        %v485 = vld [vmem:[%s1 + $0x48] sm:$0xff]
        %v486 = vld [vmem:[%s1 + $0x50] sm:$0xff]
        %v487 = vld [vmem:[%s1 + $0x58] sm:$0xff]
        %v488 = vld [vmem:[%s1 + $0x60] sm:$0xff]
        %v489 = vld [vmem:[%s1 + $0x68] sm:$0xff]
        %v490 = vld [vmem:[%s1 + $0x70] sm:$0xff]
        %v491 = vld [vmem:[%s1 + $0x78] sm:$0xff]
        %v492 = vld [vmem:[%s2] sm:$0x1]
        %v494 = vlaneseq
        %v495 = vshrl.u32 %v494, 7
        %v496 = vsub.s32 0, %v495
        %v497 = vrot.slane %v492, %v496
        %499 = vmatprep.subr.mxu0 0.0
        %500 = vmatpush1.msra.mxu0 %v476
        %501 = vmatprep.subr.mxu0 0.0
        %502 = vmatpush1.msra.mxu0 %v477
        %503 = vmatprep.subr.mxu0 0.0
        %504 = vmatpush1.msra.mxu0 %v478
        %505 = vmatprep.subr.mxu0 0.0
        %506 = vmatpush1.msra.mxu0 %v479
        %507 = vmatprep.subr.mxu0 0.0
        %508 = vmatpush1.msra.mxu0 %v480
        %509 = vmatprep.subr.mxu0 0.0
        %510 = vmatpush1.msra.mxu0 %v481
        %511 = vmatprep.subr.mxu0 0.0
        %512 = vmatpush1.msra.mxu0 %v482
        %513 = vmatprep.subr.mxu0 0.0
        %514 = vmatpush1.msra.mxu0 %v483
        %515 = vmatprep.subr.mxu0 0.0
        %516 = vmatpush1.msra.mxu0 %v484
        %517 = vmatprep.subr.mxu0 0.0
        %518 = vmatpush1.msra.mxu0 %v485
        %519 = vmatprep.subr.mxu0 0.0
        %520 = vmatpush1.msra.mxu0 %v486
        %521 = vmatprep.subr.mxu0 0.0
        %522 = vmatpush1.msra.mxu0 %v487
        %523 = vmatprep.subr.mxu0 0.0
        %524 = vmatpush1.msra.mxu0 %v488
        %525 = vmatprep.subr.mxu0 0.0
        %526 = vmatpush1.msra.mxu0 %v489
        %527 = vmatprep.subr.mxu0 0.0
        %528 = vmatpush1.msra.mxu0 %v490
        %529 = vmatprep.subr.mxu0 0.0
        %530 = vmatpush1.msra.mxu0 %v491
        %531 = vmatprep.subr.mxu0 0.0
        %532 = vmatpush1.msra.mxu0 0.0
        %533 = vmatprep.subr.mxu0 0.0
        %534 = vmatpush1.msra.mxu0 0.0
        %535 = vmatprep.subr.mxu0 0.0
        %536 = vmatpush1.msra.mxu0 0.0
        %537 = vmatprep.subr.mxu0 0.0
        %538 = vmatpush1.msra.mxu0 0.0
        %539 = vmatprep.subr.mxu0 0.0
        %540 = vmatpush1.msra.mxu0 0.0
        %541 = vmatprep.subr.mxu0 0.0
        %542 = vmatpush1.msra.mxu0 0.0
        %543 = vmatprep.subr.mxu0 0.0
        %544 = vmatpush1.msra.mxu0 0.0
        %545 = vmatprep.subr.mxu0 0.0
        %546 = vmatpush1.msra.mxu0 0.0
        %547 = vmatprep.subr.mxu0 0.0
        %548 = vmatpush1.msra.mxu0 0.0
        %549 = vmatprep.subr.mxu0 0.0
        %550 = vmatpush1.msra.mxu0 0.0
        %551 = vmatprep.subr.mxu0 0.0
        %552 = vmatpush1.msra.mxu0 0.0
        %553 = vmatprep.subr.mxu0 0.0
        %554 = vmatpush1.msra.mxu0 0.0
        %555 = vmatprep.subr.mxu0 0.0
        %556 = vmatpush1.msra.mxu0 0.0
        %557 = vmatprep.subr.mxu0 0.0
        %558 = vmatpush1.msra.mxu0 0.0
        %559 = vmatprep.subr.mxu0 0.0
        %560 = vmatpush1.msra.mxu0 0.0
        %561 = vmatprep.subr.mxu0 0.0
        %562 = vmatpush1.msra.mxu0 0.0
        %563 = vmatprep.mubr.f32.mxu0 0.0
        %564 = vmatmul.mubr.f32.gmra.mrb[0].mxu0 %v474
        %v565 = vpop.f32.mrb[0].mxu0
        %v566 = vadd.f32 %v497, %v565
        %v567 = vpop.f32.mrb[0].mxu0
        %568 = vmatprep.mubr.f32.mxu0 0.0
        %569 = vmatmul.mubr.f32.gmra.mrb[0].mxu0 %v475
        %v570 = vpop.f32.mrb[0].mxu0
        %v571 = vadd.f32 %v497, %v570
        %v572 = vpop.f32.mrb[0].mxu0
        %573 = vdwg.mxu0
        %s574 = sld [smem:[#allocation3]]
        %vm575 = vcmp.ge.f32.partialorder %v566, 0.0
        %vm576 = vcmp.ge.f32.partialorder %v571, 0.0
        %v577 = vstv %s574
        %v578 = vmul.f32 %v577, %v566
        %v579 = vmul.f32 %v577, %v571
        %v580 = vsel %vm575, %v566, %v578
        %v581 = vsel %vm576, %v571, %v579
        %582 = vst [vmem:[#allocation2 + $0x1] sm:$0xff] %v474
        %583 = vst [vmem:[#allocation2 + $0x9] sm:$0xff] %v475
        %v584 = vld [vmem:[#allocation2] sm:$0xff]
        %v585 = vld [vmem:[#allocation2 + $0x8] sm:$0xff]
        %v586 = vld [vmem:[#allocation2 + $0x10] sm:$0x3]
        %590 = vrot.lane.b32.xlu0 %v584, 8
        %v591 = vpop.permute.xlu0 %590
        %592 = vrot.lane.b32.xlu0 %v585, 8
        %v593 = vpop.permute.xlu0 %592
        %594 = vrot.lane.b32.xlu0 %v586, 8
        %v595 = vpop.permute.xlu0 %594
        %vm599 = vcmask 64512
        %v600 = vsel %vm599, 0.0, %v591
        %v601 = vsel %vm599, 0.0, %v593
        %v602 = vsel %vm599, 0.0, %v595
        %603 = vrot.lane.b32.xlu0 %v584, 120
        %v604 = vpop.permute.xlu0 %603
        %605 = vrot.lane.b32.xlu0 %v585, 120
        %v606 = vpop.permute.xlu0 %605
        %607 = vrot.lane.b32.xlu0 %v586, 120
        %v608 = vpop.permute.xlu0 %607
        %vm612 = vcmask 982016
        %v613 = vsel %vm612, %v604, 0.0
        %v614 = vsel %vm612, %v606, 0.0
        %v615 = vsel %vm612, %v608, 0.0
        %v616 = vld [vmem:[#allocation4] sm:$0xff]
        %v617 = vld [vmem:[#allocation4 + $0x8] sm:$0xff]
        %v618 = vld [vmem:[#allocation4 + $0x10] sm:$0xff]
        %v619 = vld [vmem:[#allocation4 + $0x18] sm:$0xff]
        %v620 = vld [vmem:[%s5] sm:$0x1]
        %v622 = vlaneseq
        %v623 = vshrl.u32 %v622, 7
        %v624 = vsub.s32 0, %v623
        %v625 = vrot.slane %v620, %v624
        %vm627 = vcmask 261120
        %v629 = vsel %vm627, %v580, 0
        %v632 = vsel %vm627, %v581, 0
        %634 = vmatprep.subr.mxu0 0.0
        %635 = vmatpush1.msra.mxu0 %v616
        %636 = vmatprep.subr.mxu0 0.0
        %637 = vmatpush1.msra.mxu0 %v617
        %638 = vmatprep.subr.mxu0 0.0
        %639 = vmatpush1.msra.mxu0 %v618
        %640 = vmatprep.subr.mxu0 0.0
        %641 = vmatpush1.msra.mxu0 %v619
        %642 = vmatprep.subr.mxu0 0.0
        %643 = vmatpush1.msra.mxu0 0.0
        %644 = vmatprep.subr.mxu0 0.0
        %645 = vmatpush1.msra.mxu0 0.0
        %646 = vmatprep.subr.mxu0 0.0
        %647 = vmatpush1.msra.mxu0 0.0
        %648 = vmatprep.subr.mxu0 0.0
        %649 = vmatpush1.msra.mxu0 0.0
        %650 = vmatprep.subr.mxu0 0.0
        %651 = vmatpush1.msra.mxu0 0.0
        %652 = vmatprep.subr.mxu0 0.0
        %653 = vmatpush1.msra.mxu0 0.0
        %654 = vmatprep.subr.mxu0 0.0
        %655 = vmatpush1.msra.mxu0 0.0
        %656 = vmatprep.subr.mxu0 0.0
        %657 = vmatpush1.msra.mxu0 0.0
        %658 = vmatprep.subr.mxu0 0.0
        %659 = vmatpush1.msra.mxu0 0.0
        %660 = vmatprep.subr.mxu0 0.0
        %661 = vmatpush1.msra.mxu0 0.0
        %662 = vmatprep.subr.mxu0 0.0
        %663 = vmatpush1.msra.mxu0 0.0
        %664 = vmatprep.subr.mxu0 0.0
        %665 = vmatpush1.msra.mxu0 0.0
        %666 = vmatprep.subr.mxu0 0.0
        %667 = vmatpush1.msra.mxu0 0.0
        %668 = vmatprep.subr.mxu0 0.0
        %669 = vmatpush1.msra.mxu0 0.0
        %670 = vmatprep.subr.mxu0 0.0
        %671 = vmatpush1.msra.mxu0 0.0
        %672 = vmatprep.subr.mxu0 0.0
        %673 = vmatpush1.msra.mxu0 0.0
        %674 = vmatprep.subr.mxu0 0.0
        %675 = vmatpush1.msra.mxu0 0.0
        %676 = vmatprep.subr.mxu0 0.0
        %677 = vmatpush1.msra.mxu0 0.0
        %678 = vmatprep.subr.mxu0 0.0
        %679 = vmatpush1.msra.mxu0 0.0
        %680 = vmatprep.subr.mxu0 0.0
        %681 = vmatpush1.msra.mxu0 0.0
        %682 = vmatprep.subr.mxu0 0.0
        %683 = vmatpush1.msra.mxu0 0.0
        %684 = vmatprep.subr.mxu0 0.0
        %685 = vmatpush1.msra.mxu0 0.0
        %686 = vmatprep.subr.mxu0 0.0
        %687 = vmatpush1.msra.mxu0 0.0
        %688 = vmatprep.subr.mxu0 0.0
        %689 = vmatpush1.msra.mxu0 0.0
        %690 = vmatprep.subr.mxu0 0.0
        %691 = vmatpush1.msra.mxu0 0.0
        %692 = vmatprep.subr.mxu0 0.0
        %693 = vmatpush1.msra.mxu0 0.0
        %694 = vmatprep.subr.mxu0 0.0
        %695 = vmatpush1.msra.mxu0 0.0
        %696 = vmatprep.subr.mxu0 0.0
        %697 = vmatpush1.msra.mxu0 0.0
        %698 = vmatprep.mubr.f32.mxu0 0.0
        %699 = vmatmul.mubr.f32.gmra.mrb[0].mxu0 %v629
        %v700 = vpop.f32.mrb[0].mxu0
        %v701 = vadd.f32 %v625, %v700
        %v702 = vpop.f32.mrb[0].mxu0
        %703 = vmatprep.mubr.f32.mxu0 0.0
        %704 = vmatmul.mubr.f32.gmra.mrb[0].mxu0 %v632
        %v705 = vpop.f32.mrb[0].mxu0
        %v706 = vadd.f32 %v625, %v705
        %v707 = vpop.f32.mrb[0].mxu0
        %708 = vdwg.mxu0
        %v709 = vmul.f32 %v701, %v600
        %v710 = vmul.f32 %v706, %v601
        %v711 = vadd.f32 %v709, 0.0
        %v712 = vadd.f32 %v710, 0.0
        %s713 = scalar_lea.vmem [#allocation4], 32
        %v714 = vld [vmem:[%s713] sm:$0xff]
        %v715 = vld [vmem:[%s713 + $0x8] sm:$0xff]
        %v716 = vld [vmem:[%s713 + $0x10] sm:$0xff]
        %v717 = vld [vmem:[%s713 + $0x18] sm:$0xff]
        %s718 = scalar_lea.vmem %s5, 1
        %v719 = vld [vmem:[%s718] sm:$0x1]
        %v721 = vlaneseq
        %v722 = vshrl.u32 %v721, 7
        %v723 = vsub.s32 0, %v722
        %v724 = vrot.slane %v719, %v723
        %726 = vmatprep.subr.mxu0 0.0
        %727 = vmatpush1.msra.mxu0 %v714
        %728 = vmatprep.subr.mxu0 0.0
        %729 = vmatpush1.msra.mxu0 %v715
        %730 = vmatprep.subr.mxu0 0.0
        %731 = vmatpush1.msra.mxu0 %v716
        %732 = vmatprep.subr.mxu0 0.0
        %733 = vmatpush1.msra.mxu0 %v717
        %734 = vmatprep.subr.mxu0 0.0
        %735 = vmatpush1.msra.mxu0 0.0
        %736 = vmatprep.subr.mxu0 0.0
        %737 = vmatpush1.msra.mxu0 0.0
        %738 = vmatprep.subr.mxu0 0.0
        %739 = vmatpush1.msra.mxu0 0.0
        %740 = vmatprep.subr.mxu0 0.0
        %741 = vmatpush1.msra.mxu0 0.0
        %742 = vmatprep.subr.mxu0 0.0
        %743 = vmatpush1.msra.mxu0 0.0
        %744 = vmatprep.subr.mxu0 0.0
        %745 = vmatpush1.msra.mxu0 0.0
        %746 = vmatprep.subr.mxu0 0.0
        %747 = vmatpush1.msra.mxu0 0.0
        %748 = vmatprep.subr.mxu0 0.0
        %749 = vmatpush1.msra.mxu0 0.0
        %750 = vmatprep.subr.mxu0 0.0
        %751 = vmatpush1.msra.mxu0 0.0
        %752 = vmatprep.subr.mxu0 0.0
        %753 = vmatpush1.msra.mxu0 0.0
        %754 = vmatprep.subr.mxu0 0.0
        %755 = vmatpush1.msra.mxu0 0.0
        %756 = vmatprep.subr.mxu0 0.0
        %757 = vmatpush1.msra.mxu0 0.0
        %758 = vmatprep.subr.mxu0 0.0
        %759 = vmatpush1.msra.mxu0 0.0
        %760 = vmatprep.subr.mxu0 0.0
        %761 = vmatpush1.msra.mxu0 0.0
        %762 = vmatprep.subr.mxu0 0.0
        %763 = vmatpush1.msra.mxu0 0.0
        %764 = vmatprep.subr.mxu0 0.0
        %765 = vmatpush1.msra.mxu0 0.0
        %766 = vmatprep.subr.mxu0 0.0
        %767 = vmatpush1.msra.mxu0 0.0
        %768 = vmatprep.subr.mxu0 0.0
        %769 = vmatpush1.msra.mxu0 0.0
        %770 = vmatprep.subr.mxu0 0.0
        %771 = vmatpush1.msra.mxu0 0.0
        %772 = vmatprep.subr.mxu0 0.0
        %773 = vmatpush1.msra.mxu0 0.0
        %774 = vmatprep.subr.mxu0 0.0
        %775 = vmatpush1.msra.mxu0 0.0
        %776 = vmatprep.subr.mxu0 0.0
        %777 = vmatpush1.msra.mxu0 0.0
        %778 = vmatprep.subr.mxu0 0.0
        %779 = vmatpush1.msra.mxu0 0.0
        %780 = vmatprep.subr.mxu0 0.0
        %781 = vmatpush1.msra.mxu0 0.0
        %782 = vmatprep.subr.mxu0 0.0
        %783 = vmatpush1.msra.mxu0 0.0
        %784 = vmatprep.subr.mxu0 0.0
        %785 = vmatpush1.msra.mxu0 0.0
        %786 = vmatprep.subr.mxu0 0.0
        %787 = vmatpush1.msra.mxu0 0.0
        %788 = vmatprep.subr.mxu0 0.0
        %789 = vmatpush1.msra.mxu0 0.0
        %790 = vmatprep.mubr.f32.mxu0 0.0
        %791 = vmatmul.mubr.f32.gmra.mrb[0].mxu0 %v629
        %v792 = vpop.f32.mrb[0].mxu0
        %v793 = vadd.f32 %v724, %v792
        %v794 = vpop.f32.mrb[0].mxu0
        %795 = vmatprep.mubr.f32.mxu0 0.0
        %796 = vmatmul.mubr.f32.gmra.mrb[0].mxu0 %v632
        %v797 = vpop.f32.mrb[0].mxu0
        %v798 = vadd.f32 %v724, %v797
        %v799 = vpop.f32.mrb[0].mxu0
        %800 = vdwg.mxu0
        %v801 = vmul.f32 %v793, %v584
        %v802 = vmul.f32 %v798, %v585
        %v803 = vadd.f32 %v711, %v801
        %v804 = vadd.f32 %v712, %v802
        %s805 = scalar_lea.vmem [#allocation4], 64
        %v806 = vld [vmem:[%s805] sm:$0xff]
        %v807 = vld [vmem:[%s805 + $0x8] sm:$0xff]
        %v808 = vld [vmem:[%s805 + $0x10] sm:$0xff]
        %v809 = vld [vmem:[%s805 + $0x18] sm:$0xff]
        %s810 = scalar_lea.vmem %s5, 2
        %v811 = vld [vmem:[%s810] sm:$0x1]
        %v813 = vlaneseq
        %v814 = vshrl.u32 %v813, 7
        %v815 = vsub.s32 0, %v814
        %v816 = vrot.slane %v811, %v815
        %818 = vmatprep.subr.mxu0 0.0
        %819 = vmatpush1.msra.mxu0 %v806
        %820 = vmatprep.subr.mxu0 0.0
        %821 = vmatpush1.msra.mxu0 %v807
        %822 = vmatprep.subr.mxu0 0.0
        %823 = vmatpush1.msra.mxu0 %v808
        %824 = vmatprep.subr.mxu0 0.0
        %825 = vmatpush1.msra.mxu0 %v809
        %826 = vmatprep.subr.mxu0 0.0
        %827 = vmatpush1.msra.mxu0 0.0
        %828 = vmatprep.subr.mxu0 0.0
        %829 = vmatpush1.msra.mxu0 0.0
        %830 = vmatprep.subr.mxu0 0.0
        %831 = vmatpush1.msra.mxu0 0.0
        %832 = vmatprep.subr.mxu0 0.0
        %833 = vmatpush1.msra.mxu0 0.0
        %834 = vmatprep.subr.mxu0 0.0
        %835 = vmatpush1.msra.mxu0 0.0
        %836 = vmatprep.subr.mxu0 0.0
        %837 = vmatpush1.msra.mxu0 0.0
        %838 = vmatprep.subr.mxu0 0.0
        %839 = vmatpush1.msra.mxu0 0.0
        %840 = vmatprep.subr.mxu0 0.0
        %841 = vmatpush1.msra.mxu0 0.0
        %842 = vmatprep.subr.mxu0 0.0
        %843 = vmatpush1.msra.mxu0 0.0
        %844 = vmatprep.subr.mxu0 0.0
        %845 = vmatpush1.msra.mxu0 0.0
        %846 = vmatprep.subr.mxu0 0.0
        %847 = vmatpush1.msra.mxu0 0.0
        %848 = vmatprep.subr.mxu0 0.0
        %849 = vmatpush1.msra.mxu0 0.0
        %850 = vmatprep.subr.mxu0 0.0
        %851 = vmatpush1.msra.mxu0 0.0
        %852 = vmatprep.subr.mxu0 0.0
        %853 = vmatpush1.msra.mxu0 0.0
        %854 = vmatprep.subr.mxu0 0.0
        %855 = vmatpush1.msra.mxu0 0.0
        %856 = vmatprep.subr.mxu0 0.0
        %857 = vmatpush1.msra.mxu0 0.0
        %858 = vmatprep.subr.mxu0 0.0
        %859 = vmatpush1.msra.mxu0 0.0
        %860 = vmatprep.subr.mxu0 0.0
        %861 = vmatpush1.msra.mxu0 0.0
        %862 = vmatprep.subr.mxu0 0.0
        %863 = vmatpush1.msra.mxu0 0.0
        %864 = vmatprep.subr.mxu0 0.0
        %865 = vmatpush1.msra.mxu0 0.0
        %866 = vmatprep.subr.mxu0 0.0
        %867 = vmatpush1.msra.mxu0 0.0
        %868 = vmatprep.subr.mxu0 0.0
        %869 = vmatpush1.msra.mxu0 0.0
        %870 = vmatprep.subr.mxu0 0.0
        %871 = vmatpush1.msra.mxu0 0.0
        %872 = vmatprep.subr.mxu0 0.0
        %873 = vmatpush1.msra.mxu0 0.0
        %874 = vmatprep.subr.mxu0 0.0
        %875 = vmatpush1.msra.mxu0 0.0
        %876 = vmatprep.subr.mxu0 0.0
        %877 = vmatpush1.msra.mxu0 0.0
        %878 = vmatprep.subr.mxu0 0.0
        %879 = vmatpush1.msra.mxu0 0.0
        %880 = vmatprep.subr.mxu0 0.0
        %881 = vmatpush1.msra.mxu0 0.0
        %882 = vmatprep.mubr.f32.mxu0 0.0
        %883 = vmatmul.mubr.f32.gmra.mrb[0].mxu0 %v629
        %v884 = vpop.f32.mrb[0].mxu0
        %v885 = vadd.f32 %v816, %v884
        %v886 = vpop.f32.mrb[0].mxu0
        %887 = vmatprep.mubr.f32.mxu0 0.0
        %888 = vmatmul.mubr.f32.gmra.mrb[0].mxu0 %v632
        %v889 = vpop.f32.mrb[0].mxu0
        %v890 = vadd.f32 %v816, %v889
        %v891 = vpop.f32.mrb[0].mxu0
        %892 = vdwg.mxu0
        %v893 = vmul.f32 %v885, %v613
        %v894 = vmul.f32 %v890, %v614
        %v895 = vadd.f32 %v803, %v893
        %v896 = vadd.f32 %v804, %v894
        %s897 = scalar_lea.vmem [#allocation4], 96
        %v898 = vld [vmem:[%s897] sm:$0xff]
        %v899 = vld [vmem:[%s897 + $0x8] sm:$0xff]
        %v900 = vld [vmem:[%s897 + $0x10] sm:$0xff]
        %v901 = vld [vmem:[%s897 + $0x18] sm:$0xff]
        %s902 = scalar_lea.vmem %s5, 3
        %v903 = vld [vmem:[%s902] sm:$0x1]
        %v905 = vlaneseq
        %v906 = vshrl.u32 %v905, 7
        %v907 = vsub.s32 0, %v906
        %v908 = vrot.slane %v903, %v907
        %910 = vmatprep.subr.mxu0 0.0
        %911 = vmatpush1.msra.mxu0 %v898
        %912 = vmatprep.subr.mxu0 0.0
        %913 = vmatpush1.msra.mxu0 %v899
        %914 = vmatprep.subr.mxu0 0.0
        %915 = vmatpush1.msra.mxu0 %v900
        %916 = vmatprep.subr.mxu0 0.0
        %917 = vmatpush1.msra.mxu0 %v901
        %918 = vmatprep.subr.mxu0 0.0
        %919 = vmatpush1.msra.mxu0 0.0
        %920 = vmatprep.subr.mxu0 0.0
        %921 = vmatpush1.msra.mxu0 0.0
        %922 = vmatprep.subr.mxu0 0.0
        %923 = vmatpush1.msra.mxu0 0.0
        %924 = vmatprep.subr.mxu0 0.0
        %925 = vmatpush1.msra.mxu0 0.0
        %926 = vmatprep.subr.mxu0 0.0
        %927 = vmatpush1.msra.mxu0 0.0
        %928 = vmatprep.subr.mxu0 0.0
        %929 = vmatpush1.msra.mxu0 0.0
        %930 = vmatprep.subr.mxu0 0.0
        %931 = vmatpush1.msra.mxu0 0.0
        %932 = vmatprep.subr.mxu0 0.0
        %933 = vmatpush1.msra.mxu0 0.0
        %934 = vmatprep.subr.mxu0 0.0
        %935 = vmatpush1.msra.mxu0 0.0
        %936 = vmatprep.subr.mxu0 0.0
        %937 = vmatpush1.msra.mxu0 0.0
        %938 = vmatprep.subr.mxu0 0.0
        %939 = vmatpush1.msra.mxu0 0.0
        %940 = vmatprep.subr.mxu0 0.0
        %941 = vmatpush1.msra.mxu0 0.0
        %942 = vmatprep.subr.mxu0 0.0
        %943 = vmatpush1.msra.mxu0 0.0
        %944 = vmatprep.subr.mxu0 0.0
        %945 = vmatpush1.msra.mxu0 0.0
        %946 = vmatprep.subr.mxu0 0.0
        %947 = vmatpush1.msra.mxu0 0.0
        %948 = vmatprep.subr.mxu0 0.0
        %949 = vmatpush1.msra.mxu0 0.0
        %950 = vmatprep.subr.mxu0 0.0
        %951 = vmatpush1.msra.mxu0 0.0
        %952 = vmatprep.subr.mxu0 0.0
        %953 = vmatpush1.msra.mxu0 0.0
        %954 = vmatprep.subr.mxu0 0.0
        %955 = vmatpush1.msra.mxu0 0.0
        %956 = vmatprep.subr.mxu0 0.0
        %957 = vmatpush1.msra.mxu0 0.0
        %958 = vmatprep.subr.mxu0 0.0
        %959 = vmatpush1.msra.mxu0 0.0
        %960 = vmatprep.subr.mxu0 0.0
        %961 = vmatpush1.msra.mxu0 0.0
        %962 = vmatprep.subr.mxu0 0.0
        %963 = vmatpush1.msra.mxu0 0.0
        %964 = vmatprep.subr.mxu0 0.0
        %965 = vmatpush1.msra.mxu0 0.0
        %966 = vmatprep.subr.mxu0 0.0
        %967 = vmatpush1.msra.mxu0 0.0
        %968 = vmatprep.subr.mxu0 0.0
        %969 = vmatpush1.msra.mxu0 0.0
        %970 = vmatprep.subr.mxu0 0.0
        %971 = vmatpush1.msra.mxu0 0.0
        %972 = vmatprep.subr.mxu0 0.0
        %973 = vmatpush1.msra.mxu0 0.0
        %974 = vmatprep.mubr.f32.mxu0 0.0
        %975 = vmatmul.mubr.f32.gmra.mrb[0].mxu0 %v629
        %v976 = vpop.f32.mrb[0].mxu0
        %v977 = vadd.f32 %v908, %v976
        %v978 = vpop.f32.mrb[0].mxu0
        %979 = vmatprep.mubr.f32.mxu0 0.0
        %980 = vmatmul.mubr.f32.gmra.mrb[0].mxu0 %v632
        %v981 = vpop.f32.mrb[0].mxu0
        %v982 = vadd.f32 %v908, %v981
        %v983 = vpop.f32.mrb[0].mxu0
        %984 = vdwg.mxu0
        %vm988 = vcmask 1046528
        %v989 = vrot.slane %v600, 1
        %v990 = vrot.slane %v601, 1
        %v991 = vsel %vm988, %v989, %v990
        %v992 = vrot.slane %v602, 1
        %v993 = vsel %vm988, %v990, %v992
        %v996 = vmul.f32 %v977, %v991
        %v997 = vmul.f32 %v982, %v993
        %v998 = vadd.f32 %v895, %v996
        %v999 = vadd.f32 %v896, %v997
        %s1000 = scalar_lea.vmem [#allocation4], 128
        %v1001 = vld [vmem:[%s1000] sm:$0xff]
        %v1002 = vld [vmem:[%s1000 + $0x8] sm:$0xff]
        %v1003 = vld [vmem:[%s1000 + $0x10] sm:$0xff]
        %v1004 = vld [vmem:[%s1000 + $0x18] sm:$0xff]
        %s1005 = scalar_lea.vmem %s5, 4
        %v1006 = vld [vmem:[%s1005] sm:$0x1]
        %v1008 = vlaneseq
        %v1009 = vshrl.u32 %v1008, 7
        %v1010 = vsub.s32 0, %v1009
        %v1011 = vrot.slane %v1006, %v1010
        %1013 = vmatprep.subr.mxu0 0.0
        %1014 = vmatpush1.msra.mxu0 %v1001
        %1015 = vmatprep.subr.mxu0 0.0
        %1016 = vmatpush1.msra.mxu0 %v1002
        %1017 = vmatprep.subr.mxu0 0.0
        %1018 = vmatpush1.msra.mxu0 %v1003
        %1019 = vmatprep.subr.mxu0 0.0
        %1020 = vmatpush1.msra.mxu0 %v1004
        %1021 = vmatprep.subr.mxu0 0.0
        %1022 = vmatpush1.msra.mxu0 0.0
        %1023 = vmatprep.subr.mxu0 0.0
        %1024 = vmatpush1.msra.mxu0 0.0
        %1025 = vmatprep.subr.mxu0 0.0
        %1026 = vmatpush1.msra.mxu0 0.0
        %1027 = vmatprep.subr.mxu0 0.0
        %1028 = vmatpush1.msra.mxu0 0.0
        %1029 = vmatprep.subr.mxu0 0.0
        %1030 = vmatpush1.msra.mxu0 0.0
        %1031 = vmatprep.subr.mxu0 0.0
        %1032 = vmatpush1.msra.mxu0 0.0
        %1033 = vmatprep.subr.mxu0 0.0
        %1034 = vmatpush1.msra.mxu0 0.0
        %1035 = vmatprep.subr.mxu0 0.0
        %1036 = vmatpush1.msra.mxu0 0.0
        %1037 = vmatprep.subr.mxu0 0.0
        %1038 = vmatpush1.msra.mxu0 0.0
        %1039 = vmatprep.subr.mxu0 0.0
        %1040 = vmatpush1.msra.mxu0 0.0
        %1041 = vmatprep.subr.mxu0 0.0
        %1042 = vmatpush1.msra.mxu0 0.0
        %1043 = vmatprep.subr.mxu0 0.0
        %1044 = vmatpush1.msra.mxu0 0.0
        %1045 = vmatprep.subr.mxu0 0.0
        %1046 = vmatpush1.msra.mxu0 0.0
        %1047 = vmatprep.subr.mxu0 0.0
        %1048 = vmatpush1.msra.mxu0 0.0
        %1049 = vmatprep.subr.mxu0 0.0
        %1050 = vmatpush1.msra.mxu0 0.0
        %1051 = vmatprep.subr.mxu0 0.0
        %1052 = vmatpush1.msra.mxu0 0.0
        %1053 = vmatprep.subr.mxu0 0.0
        %1054 = vmatpush1.msra.mxu0 0.0
        %1055 = vmatprep.subr.mxu0 0.0
        %1056 = vmatpush1.msra.mxu0 0.0
        %1057 = vmatprep.subr.mxu0 0.0
        %1058 = vmatpush1.msra.mxu0 0.0
        %1059 = vmatprep.subr.mxu0 0.0
        %1060 = vmatpush1.msra.mxu0 0.0
        %1061 = vmatprep.subr.mxu0 0.0
        %1062 = vmatpush1.msra.mxu0 0.0
        %1063 = vmatprep.subr.mxu0 0.0
        %1064 = vmatpush1.msra.mxu0 0.0
        %1065 = vmatprep.subr.mxu0 0.0
        %1066 = vmatpush1.msra.mxu0 0.0
        %1067 = vmatprep.subr.mxu0 0.0
        %1068 = vmatpush1.msra.mxu0 0.0
        %1069 = vmatprep.subr.mxu0 0.0
        %1070 = vmatpush1.msra.mxu0 0.0
        %1071 = vmatprep.subr.mxu0 0.0
        %1072 = vmatpush1.msra.mxu0 0.0
        %1073 = vmatprep.subr.mxu0 0.0
        %1074 = vmatpush1.msra.mxu0 0.0
        %1075 = vmatprep.subr.mxu0 0.0
        %1076 = vmatpush1.msra.mxu0 0.0
        %1077 = vmatprep.mubr.f32.mxu0 0.0
        %1078 = vmatmul.mubr.f32.gmra.mrb[0].mxu0 %v629
        %v1079 = vpop.f32.mrb[0].mxu0
        %v1080 = vadd.f32 %v1011, %v1079
        %v1081 = vpop.f32.mrb[0].mxu0
        %1082 = vmatprep.mubr.f32.mxu0 0.0
        %1083 = vmatmul.mubr.f32.gmra.mrb[0].mxu0 %v632
        %v1084 = vpop.f32.mrb[0].mxu0
        %v1085 = vadd.f32 %v1011, %v1084
        %v1086 = vpop.f32.mrb[0].mxu0
        %1087 = vdwg.mxu0
        %v1088 = vrot.slane %v584, 1
        %v1089 = vrot.slane %v585, 1
        %v1090 = vsel %vm988, %v1088, %v1089
        %v1091 = vrot.slane %v586, 1
        %v1092 = vsel %vm988, %v1089, %v1091
        %v1095 = vmul.f32 %v1080, %v1090
        %v1096 = vmul.f32 %v1085, %v1092
        %v1097 = vadd.f32 %v998, %v1095
        %v1098 = vadd.f32 %v999, %v1096
        %s1099 = scalar_lea.vmem [#allocation4], 160
        %v1100 = vld [vmem:[%s1099] sm:$0xff]
        %v1101 = vld [vmem:[%s1099 + $0x8] sm:$0xff]
        %v1102 = vld [vmem:[%s1099 + $0x10] sm:$0xff]
        %v1103 = vld [vmem:[%s1099 + $0x18] sm:$0xff]
        %s1104 = scalar_lea.vmem %s5, 5
        %v1105 = vld [vmem:[%s1104] sm:$0x1]
        %v1107 = vlaneseq
        %v1108 = vshrl.u32 %v1107, 7
        %v1109 = vsub.s32 0, %v1108
        %v1110 = vrot.slane %v1105, %v1109
        %1112 = vmatprep.subr.mxu0 0.0
        %1113 = vmatpush1.msra.mxu0 %v1100
        %1114 = vmatprep.subr.mxu0 0.0
        %1115 = vmatpush1.msra.mxu0 %v1101
        %1116 = vmatprep.subr.mxu0 0.0
        %1117 = vmatpush1.msra.mxu0 %v1102
        %1118 = vmatprep.subr.mxu0 0.0
        %1119 = vmatpush1.msra.mxu0 %v1103
        %1120 = vmatprep.subr.mxu0 0.0
        %1121 = vmatpush1.msra.mxu0 0.0
        %1122 = vmatprep.subr.mxu0 0.0
        %1123 = vmatpush1.msra.mxu0 0.0
        %1124 = vmatprep.subr.mxu0 0.0
        %1125 = vmatpush1.msra.mxu0 0.0
        %1126 = vmatprep.subr.mxu0 0.0
        %1127 = vmatpush1.msra.mxu0 0.0
        %1128 = vmatprep.subr.mxu0 0.0
        %1129 = vmatpush1.msra.mxu0 0.0
        %1130 = vmatprep.subr.mxu0 0.0
        %1131 = vmatpush1.msra.mxu0 0.0
        %1132 = vmatprep.subr.mxu0 0.0
        %1133 = vmatpush1.msra.mxu0 0.0
        %1134 = vmatprep.subr.mxu0 0.0
        %1135 = vmatpush1.msra.mxu0 0.0
        %1136 = vmatprep.subr.mxu0 0.0
        %1137 = vmatpush1.msra.mxu0 0.0
        %1138 = vmatprep.subr.mxu0 0.0
        %1139 = vmatpush1.msra.mxu0 0.0
        %1140 = vmatprep.subr.mxu0 0.0
        %1141 = vmatpush1.msra.mxu0 0.0
        %1142 = vmatprep.subr.mxu0 0.0
        %1143 = vmatpush1.msra.mxu0 0.0
        %1144 = vmatprep.subr.mxu0 0.0
        %1145 = vmatpush1.msra.mxu0 0.0
        %1146 = vmatprep.subr.mxu0 0.0
        %1147 = vmatpush1.msra.mxu0 0.0
        %1148 = vmatprep.subr.mxu0 0.0
        %1149 = vmatpush1.msra.mxu0 0.0
        %1150 = vmatprep.subr.mxu0 0.0
        %1151 = vmatpush1.msra.mxu0 0.0
        %1152 = vmatprep.subr.mxu0 0.0
        %1153 = vmatpush1.msra.mxu0 0.0
        %1154 = vmatprep.subr.mxu0 0.0
        %1155 = vmatpush1.msra.mxu0 0.0
        %1156 = vmatprep.subr.mxu0 0.0
        %1157 = vmatpush1.msra.mxu0 0.0
        %1158 = vmatprep.subr.mxu0 0.0
        %1159 = vmatpush1.msra.mxu0 0.0
        %1160 = vmatprep.subr.mxu0 0.0
        %1161 = vmatpush1.msra.mxu0 0.0
        %1162 = vmatprep.subr.mxu0 0.0
        %1163 = vmatpush1.msra.mxu0 0.0
        %1164 = vmatprep.subr.mxu0 0.0
        %1165 = vmatpush1.msra.mxu0 0.0
        %1166 = vmatprep.subr.mxu0 0.0
        %1167 = vmatpush1.msra.mxu0 0.0
        %1168 = vmatprep.subr.mxu0 0.0
        %1169 = vmatpush1.msra.mxu0 0.0
        %1170 = vmatprep.subr.mxu0 0.0
        %1171 = vmatpush1.msra.mxu0 0.0
        %1172 = vmatprep.subr.mxu0 0.0
        %1173 = vmatpush1.msra.mxu0 0.0
        %1174 = vmatprep.subr.mxu0 0.0
        %1175 = vmatpush1.msra.mxu0 0.0
        %1176 = vmatprep.mubr.f32.mxu0 0.0
        %1177 = vmatmul.mubr.f32.gmra.mrb[0].mxu0 %v629
        %v1178 = vpop.f32.mrb[0].mxu0
        %v1179 = vadd.f32 %v1110, %v1178
        %v1180 = vpop.f32.mrb[0].mxu0
        %1181 = vmatprep.mubr.f32.mxu0 0.0
        %1182 = vmatmul.mubr.f32.gmra.mrb[0].mxu0 %v632
        %v1183 = vpop.f32.mrb[0].mxu0
        %v1184 = vadd.f32 %v1110, %v1183
        %v1185 = vpop.f32.mrb[0].mxu0
        %1186 = vdwg.mxu0
        %v1190 = vrot.slane %v613, 1
        %v1191 = vrot.slane %v614, 1
        %v1192 = vsel %vm988, %v1190, %v1191
        %v1193 = vrot.slane %v615, 1
        %v1194 = vsel %vm988, %v1191, %v1193
        %v1197 = vmul.f32 %v1179, %v1192
        %v1198 = vmul.f32 %v1184, %v1194
        %v1199 = vadd.f32 %v1097, %v1197
        %v1200 = vadd.f32 %v1098, %v1198
        %s1201 = scalar_lea.vmem [#allocation4], 192
        %v1202 = vld [vmem:[%s1201] sm:$0xff]
        %v1203 = vld [vmem:[%s1201 + $0x8] sm:$0xff]
        %v1204 = vld [vmem:[%s1201 + $0x10] sm:$0xff]
        %v1205 = vld [vmem:[%s1201 + $0x18] sm:$0xff]
        %s1206 = scalar_lea.vmem %s5, 6
        %v1207 = vld [vmem:[%s1206] sm:$0x1]
        %v1209 = vlaneseq
        %v1210 = vshrl.u32 %v1209, 7
        %v1211 = vsub.s32 0, %v1210
        %v1212 = vrot.slane %v1207, %v1211
        %1214 = vmatprep.subr.mxu0 0.0
        %1215 = vmatpush1.msra.mxu0 %v1202
        %1216 = vmatprep.subr.mxu0 0.0
        %1217 = vmatpush1.msra.mxu0 %v1203
        %1218 = vmatprep.subr.mxu0 0.0
        %1219 = vmatpush1.msra.mxu0 %v1204
        %1220 = vmatprep.subr.mxu0 0.0
        %1221 = vmatpush1.msra.mxu0 %v1205
        %1222 = vmatprep.subr.mxu0 0.0
        %1223 = vmatpush1.msra.mxu0 0.0
        %1224 = vmatprep.subr.mxu0 0.0
        %1225 = vmatpush1.msra.mxu0 0.0
        %1226 = vmatprep.subr.mxu0 0.0
        %1227 = vmatpush1.msra.mxu0 0.0
        %1228 = vmatprep.subr.mxu0 0.0
        %1229 = vmatpush1.msra.mxu0 0.0
        %1230 = vmatprep.subr.mxu0 0.0
        %1231 = vmatpush1.msra.mxu0 0.0
        %1232 = vmatprep.subr.mxu0 0.0
        %1233 = vmatpush1.msra.mxu0 0.0
        %1234 = vmatprep.subr.mxu0 0.0
        %1235 = vmatpush1.msra.mxu0 0.0
        %1236 = vmatprep.subr.mxu0 0.0
        %1237 = vmatpush1.msra.mxu0 0.0
        %1238 = vmatprep.subr.mxu0 0.0
        %1239 = vmatpush1.msra.mxu0 0.0
        %1240 = vmatprep.subr.mxu0 0.0
        %1241 = vmatpush1.msra.mxu0 0.0
        %1242 = vmatprep.subr.mxu0 0.0
        %1243 = vmatpush1.msra.mxu0 0.0
        %1244 = vmatprep.subr.mxu0 0.0
        %1245 = vmatpush1.msra.mxu0 0.0
        %1246 = vmatprep.subr.mxu0 0.0
        %1247 = vmatpush1.msra.mxu0 0.0
        %1248 = vmatprep.subr.mxu0 0.0
        %1249 = vmatpush1.msra.mxu0 0.0
        %1250 = vmatprep.subr.mxu0 0.0
        %1251 = vmatpush1.msra.mxu0 0.0
        %1252 = vmatprep.subr.mxu0 0.0
        %1253 = vmatpush1.msra.mxu0 0.0
        %1254 = vmatprep.subr.mxu0 0.0
        %1255 = vmatpush1.msra.mxu0 0.0
        %1256 = vmatprep.subr.mxu0 0.0
        %1257 = vmatpush1.msra.mxu0 0.0
        %1258 = vmatprep.subr.mxu0 0.0
        %1259 = vmatpush1.msra.mxu0 0.0
        %1260 = vmatprep.subr.mxu0 0.0
        %1261 = vmatpush1.msra.mxu0 0.0
        %1262 = vmatprep.subr.mxu0 0.0
        %1263 = vmatpush1.msra.mxu0 0.0
        %1264 = vmatprep.subr.mxu0 0.0
        %1265 = vmatpush1.msra.mxu0 0.0
        %1266 = vmatprep.subr.mxu0 0.0
        %1267 = vmatpush1.msra.mxu0 0.0
        %1268 = vmatprep.subr.mxu0 0.0
        %1269 = vmatpush1.msra.mxu0 0.0
        %1270 = vmatprep.subr.mxu0 0.0
        %1271 = vmatpush1.msra.mxu0 0.0
        %1272 = vmatprep.subr.mxu0 0.0
        %1273 = vmatpush1.msra.mxu0 0.0
        %1274 = vmatprep.subr.mxu0 0.0
        %1275 = vmatpush1.msra.mxu0 0.0
        %1276 = vmatprep.subr.mxu0 0.0
        %1277 = vmatpush1.msra.mxu0 0.0
        %1278 = vmatprep.mubr.f32.mxu0 0.0
        %1279 = vmatmul.mubr.f32.gmra.mrb[0].mxu0 %v629
        %v1280 = vpop.f32.mrb[0].mxu0
        %v1281 = vadd.f32 %v1212, %v1280
        %v1282 = vpop.f32.mrb[0].mxu0
        %1283 = vmatprep.mubr.f32.mxu0 0.0
        %1284 = vmatmul.mubr.f32.gmra.mrb[0].mxu0 %v632
        %v1285 = vpop.f32.mrb[0].mxu0
        %v1286 = vadd.f32 %v1212, %v1285
        %v1287 = vpop.f32.mrb[0].mxu0
        %1288 = vdwg.mxu0
        %vm1289 = vcmask 1045504
        %v1290 = vrot.slane %v600, 2
        %v1291 = vrot.slane %v601, 2
        %v1292 = vsel %vm1289, %v1290, %v1291
        %v1293 = vrot.slane %v602, 2
        %v1294 = vsel %vm1289, %v1291, %v1293
        %v1297 = vmul.f32 %v1281, %v1292
        %v1298 = vmul.f32 %v1286, %v1294
        %v1299 = vadd.f32 %v1199, %v1297
        %v1300 = vadd.f32 %v1200, %v1298
        %s1301 = scalar_lea.vmem [#allocation4], 224
        %v1302 = vld [vmem:[%s1301] sm:$0xff]
        %v1303 = vld [vmem:[%s1301 + $0x8] sm:$0xff]
        %v1304 = vld [vmem:[%s1301 + $0x10] sm:$0xff]
        %v1305 = vld [vmem:[%s1301 + $0x18] sm:$0xff]
        %s1306 = scalar_lea.vmem %s5, 7
        %v1307 = vld [vmem:[%s1306] sm:$0x1]
        %v1309 = vlaneseq
        %v1310 = vshrl.u32 %v1309, 7
        %v1311 = vsub.s32 0, %v1310
        %v1312 = vrot.slane %v1307, %v1311
        %1314 = vmatprep.subr.mxu0 0.0
        %1315 = vmatpush1.msra.mxu0 %v1302
        %1316 = vmatprep.subr.mxu0 0.0
        %1317 = vmatpush1.msra.mxu0 %v1303
        %1318 = vmatprep.subr.mxu0 0.0
        %1319 = vmatpush1.msra.mxu0 %v1304
        %1320 = vmatprep.subr.mxu0 0.0
        %1321 = vmatpush1.msra.mxu0 %v1305
        %1322 = vmatprep.subr.mxu0 0.0
        %1323 = vmatpush1.msra.mxu0 0.0
        %1324 = vmatprep.subr.mxu0 0.0
        %1325 = vmatpush1.msra.mxu0 0.0
        %1326 = vmatprep.subr.mxu0 0.0
        %1327 = vmatpush1.msra.mxu0 0.0
        %1328 = vmatprep.subr.mxu0 0.0
        %1329 = vmatpush1.msra.mxu0 0.0
        %1330 = vmatprep.subr.mxu0 0.0
        %1331 = vmatpush1.msra.mxu0 0.0
        %1332 = vmatprep.subr.mxu0 0.0
        %1333 = vmatpush1.msra.mxu0 0.0
        %1334 = vmatprep.subr.mxu0 0.0
        %1335 = vmatpush1.msra.mxu0 0.0
        %1336 = vmatprep.subr.mxu0 0.0
        %1337 = vmatpush1.msra.mxu0 0.0
        %1338 = vmatprep.subr.mxu0 0.0
        %1339 = vmatpush1.msra.mxu0 0.0
        %1340 = vmatprep.subr.mxu0 0.0
        %1341 = vmatpush1.msra.mxu0 0.0
        %1342 = vmatprep.subr.mxu0 0.0
        %1343 = vmatpush1.msra.mxu0 0.0
        %1344 = vmatprep.subr.mxu0 0.0
        %1345 = vmatpush1.msra.mxu0 0.0
        %1346 = vmatprep.subr.mxu0 0.0
        %1347 = vmatpush1.msra.mxu0 0.0
        %1348 = vmatprep.subr.mxu0 0.0
        %1349 = vmatpush1.msra.mxu0 0.0
        %1350 = vmatprep.subr.mxu0 0.0
        %1351 = vmatpush1.msra.mxu0 0.0
        %1352 = vmatprep.subr.mxu0 0.0
        %1353 = vmatpush1.msra.mxu0 0.0
        %1354 = vmatprep.subr.mxu0 0.0
        %1355 = vmatpush1.msra.mxu0 0.0
        %1356 = vmatprep.subr.mxu0 0.0
        %1357 = vmatpush1.msra.mxu0 0.0
        %1358 = vmatprep.subr.mxu0 0.0
        %1359 = vmatpush1.msra.mxu0 0.0
        %1360 = vmatprep.subr.mxu0 0.0
        %1361 = vmatpush1.msra.mxu0 0.0
        %1362 = vmatprep.subr.mxu0 0.0
        %1363 = vmatpush1.msra.mxu0 0.0
        %1364 = vmatprep.subr.mxu0 0.0
        %1365 = vmatpush1.msra.mxu0 0.0
        %1366 = vmatprep.subr.mxu0 0.0
        %1367 = vmatpush1.msra.mxu0 0.0
        %1368 = vmatprep.subr.mxu0 0.0
        %1369 = vmatpush1.msra.mxu0 0.0
        %1370 = vmatprep.subr.mxu0 0.0
        %1371 = vmatpush1.msra.mxu0 0.0
        %1372 = vmatprep.subr.mxu0 0.0
        %1373 = vmatpush1.msra.mxu0 0.0
        %1374 = vmatprep.subr.mxu0 0.0
        %1375 = vmatpush1.msra.mxu0 0.0
        %1376 = vmatprep.subr.mxu0 0.0
        %1377 = vmatpush1.msra.mxu0 0.0
        %1378 = vmatprep.mubr.f32.mxu0 0.0
        %1379 = vmatmul.mubr.f32.gmra.mrb[0].mxu0 %v629
        %v1380 = vpop.f32.mrb[0].mxu0
        %v1381 = vadd.f32 %v1312, %v1380
        %v1382 = vpop.f32.mrb[0].mxu0
        %1383 = vmatprep.mubr.f32.mxu0 0.0
        %1384 = vmatmul.mubr.f32.gmra.mrb[0].mxu0 %v632
        %v1385 = vpop.f32.mrb[0].mxu0
        %v1386 = vadd.f32 %v1312, %v1385
        %v1387 = vpop.f32.mrb[0].mxu0
        %1388 = vdwg.mxu0
        %v1389 = vrot.slane %v584, 2
        %v1390 = vrot.slane %v585, 2
        %v1391 = vsel %vm1289, %v1389, %v1390
        %v1392 = vrot.slane %v586, 2
        %v1393 = vsel %vm1289, %v1390, %v1392
        %v1396 = vmul.f32 %v1381, %v1391
        %v1397 = vmul.f32 %v1386, %v1393
        %v1398 = vadd.f32 %v1299, %v1396
        %v1399 = vadd.f32 %v1300, %v1397
        %s1400 = scalar_lea.vmem [#allocation4], 256
        %v1401 = vld [vmem:[%s1400] sm:$0xff]
        %v1402 = vld [vmem:[%s1400 + $0x8] sm:$0xff]
        %v1403 = vld [vmem:[%s1400 + $0x10] sm:$0xff]
        %v1404 = vld [vmem:[%s1400 + $0x18] sm:$0xff]
        %s1405 = scalar_lea.vmem %s5, 8
        %v1406 = vld [vmem:[%s1405] sm:$0x1]
        %v1408 = vlaneseq
        %v1409 = vshrl.u32 %v1408, 7
        %v1410 = vsub.s32 0, %v1409
        %v1411 = vrot.slane %v1406, %v1410
        %1413 = vmatprep.subr.mxu0 0.0
        %1414 = vmatpush1.msra.mxu0 %v1401
        %1415 = vmatprep.subr.mxu0 0.0
        %1416 = vmatpush1.msra.mxu0 %v1402
        %1417 = vmatprep.subr.mxu0 0.0
        %1418 = vmatpush1.msra.mxu0 %v1403
        %1419 = vmatprep.subr.mxu0 0.0
        %1420 = vmatpush1.msra.mxu0 %v1404
        %1421 = vmatprep.subr.mxu0 0.0
        %1422 = vmatpush1.msra.mxu0 0.0
        %1423 = vmatprep.subr.mxu0 0.0
        %1424 = vmatpush1.msra.mxu0 0.0
        %1425 = vmatprep.subr.mxu0 0.0
        %1426 = vmatpush1.msra.mxu0 0.0
        %1427 = vmatprep.subr.mxu0 0.0
        %1428 = vmatpush1.msra.mxu0 0.0
        %1429 = vmatprep.subr.mxu0 0.0
        %1430 = vmatpush1.msra.mxu0 0.0
        %1431 = vmatprep.subr.mxu0 0.0
        %1432 = vmatpush1.msra.mxu0 0.0
        %1433 = vmatprep.subr.mxu0 0.0
        %1434 = vmatpush1.msra.mxu0 0.0
        %1435 = vmatprep.subr.mxu0 0.0
        %1436 = vmatpush1.msra.mxu0 0.0
        %1437 = vmatprep.subr.mxu0 0.0
        %1438 = vmatpush1.msra.mxu0 0.0
        %1439 = vmatprep.subr.mxu0 0.0
        %1440 = vmatpush1.msra.mxu0 0.0
        %1441 = vmatprep.subr.mxu0 0.0
        %1442 = vmatpush1.msra.mxu0 0.0
        %1443 = vmatprep.subr.mxu0 0.0
        %1444 = vmatpush1.msra.mxu0 0.0
        %1445 = vmatprep.subr.mxu0 0.0
        %1446 = vmatpush1.msra.mxu0 0.0
        %1447 = vmatprep.subr.mxu0 0.0
        %1448 = vmatpush1.msra.mxu0 0.0
        %1449 = vmatprep.subr.mxu0 0.0
        %1450 = vmatpush1.msra.mxu0 0.0
        %1451 = vmatprep.subr.mxu0 0.0
        %1452 = vmatpush1.msra.mxu0 0.0
        %1453 = vmatprep.subr.mxu0 0.0
        %1454 = vmatpush1.msra.mxu0 0.0
        %1455 = vmatprep.subr.mxu0 0.0
        %1456 = vmatpush1.msra.mxu0 0.0
        %1457 = vmatprep.subr.mxu0 0.0
        %1458 = vmatpush1.msra.mxu0 0.0
        %1459 = vmatprep.subr.mxu0 0.0
        %1460 = vmatpush1.msra.mxu0 0.0
        %1461 = vmatprep.subr.mxu0 0.0
        %1462 = vmatpush1.msra.mxu0 0.0
        %1463 = vmatprep.subr.mxu0 0.0
        %1464 = vmatpush1.msra.mxu0 0.0
        %1465 = vmatprep.subr.mxu0 0.0
        %1466 = vmatpush1.msra.mxu0 0.0
        %1467 = vmatprep.subr.mxu0 0.0
        %1468 = vmatpush1.msra.mxu0 0.0
        %1469 = vmatprep.subr.mxu0 0.0
        %1470 = vmatpush1.msra.mxu0 0.0
        %1471 = vmatprep.subr.mxu0 0.0
        %1472 = vmatpush1.msra.mxu0 0.0
        %1473 = vmatprep.subr.mxu0 0.0
        %1474 = vmatpush1.msra.mxu0 0.0
        %1475 = vmatprep.subr.mxu0 0.0
        %1476 = vmatpush1.msra.mxu0 0.0
        %1477 = vmatprep.mubr.f32.mxu0 0.0
        %1478 = vmatmul.mubr.f32.gmra.mrb[0].mxu0 %v629
        %v1479 = vpop.f32.mrb[0].mxu0
        %v1480 = vadd.f32 %v1411, %v1479
        %v1481 = vpop.f32.mrb[0].mxu0
        %1482 = vmatprep.mubr.f32.mxu0 0.0
        %1483 = vmatmul.mubr.f32.gmra.mrb[0].mxu0 %v632
        %v1484 = vpop.f32.mrb[0].mxu0
        %v1485 = vadd.f32 %v1411, %v1484
        %v1486 = vpop.f32.mrb[0].mxu0
        %1487 = vdwg.mxu0
        %v1488 = vrot.slane %v613, 2
        %v1489 = vrot.slane %v614, 2
        %v1490 = vsel %vm1289, %v1488, %v1489
        %v1491 = vrot.slane %v615, 2
        %v1492 = vsel %vm1289, %v1489, %v1491
        %v1495 = vmul.f32 %v1480, %v1490
        %v1496 = vmul.f32 %v1485, %v1492
        %v1497 = vadd.f32 %v1398, %v1495
        %v1498 = vadd.f32 %v1399, %v1496
        %1499 = vst [vmem:[#allocation2 + $0x1] sm:$0xff] %v1497
        %1500 = vst [vmem:[#allocation2 + $0x9] sm:$0xff] %v1498
        %v1501 = vld [vmem:[#allocation2] sm:$0xff]
        %v1502 = vld [vmem:[#allocation2 + $0x8] sm:$0xff]
        %v1503 = vld [vmem:[#allocation2 + $0x10] sm:$0x3]
        %1507 = vrot.lane.b32.xlu0 %v1501, 8
        %v1508 = vpop.permute.xlu0 %1507
        %1509 = vrot.lane.b32.xlu0 %v1502, 8
        %v1510 = vpop.permute.xlu0 %1509
        %1511 = vrot.lane.b32.xlu0 %v1503, 8
        %v1512 = vpop.permute.xlu0 %1511
        %v1516 = vsel %vm599, 0.0, %v1508
        %v1517 = vsel %vm599, 0.0, %v1510
        %v1518 = vsel %vm599, 0.0, %v1512
        %1519 = vrot.lane.b32.xlu0 %v1501, 120
        %v1520 = vpop.permute.xlu0 %1519
        %1521 = vrot.lane.b32.xlu0 %v1502, 120
        %v1522 = vpop.permute.xlu0 %1521
        %1523 = vrot.lane.b32.xlu0 %v1503, 120
        %v1524 = vpop.permute.xlu0 %1523
        %v1528 = vsel %vm612, %v1520, 0.0
        %v1529 = vsel %vm612, %v1522, 0.0
        %v1530 = vsel %vm612, %v1524, 0.0
        %v1531 = vld [vmem:[%s7] sm:$0x1]
        %v1533 = vlaneseq
        %v1534 = vshrl.u32 %v1533, 7
        %v1535 = vsub.s32 0, %v1534
        %v1536 = vrot.slane %v1531, %v1535
        %v1538 = vld [vmem:[#allocation7] sm:$0xff]
        %v1539 = vld [vmem:[#allocation7 + $0x8] sm:$0xff]
        %v1540 = vld [vmem:[#allocation7 + $0x10] sm:$0xff]
        %v1541 = vld [vmem:[#allocation7 + $0x18] sm:$0xff]
        %v1542 = vld [vmem:[#allocation7 + $0x20] sm:$0xff]
        %v1543 = vld [vmem:[#allocation7 + $0x28] sm:$0xff]
        %v1544 = vld [vmem:[#allocation7 + $0x30] sm:$0xff]
        %v1545 = vld [vmem:[#allocation7 + $0x38] sm:$0xff]
        %v1546 = vld [vmem:[#allocation7 + $0x40] sm:$0xff]
        %v1547 = vld [vmem:[#allocation7 + $0x48] sm:$0xff]
        %v1548 = vld [vmem:[#allocation7 + $0x50] sm:$0xff]
        %v1549 = vld [vmem:[#allocation7 + $0x58] sm:$0xff]
        %v1550 = vld [vmem:[#allocation7 + $0x60] sm:$0xff]
        %v1551 = vld [vmem:[#allocation7 + $0x68] sm:$0xff]
        %v1552 = vld [vmem:[#allocation7 + $0x70] sm:$0xff]
        %v1553 = vld [vmem:[#allocation7 + $0x78] sm:$0xff]
        %1554 = vmatprep.subr.mxu0 0.0
        %1555 = vmatpush1.msra.mxu0 %v1538
        %1556 = vmatprep.subr.mxu0 0.0
        %1557 = vmatpush1.msra.mxu0 %v1539
        %1558 = vmatprep.subr.mxu0 0.0
        %1559 = vmatpush1.msra.mxu0 %v1540
        %1560 = vmatprep.subr.mxu0 0.0
        %1561 = vmatpush1.msra.mxu0 %v1541
        %1562 = vmatprep.subr.mxu0 0.0
        %1563 = vmatpush1.msra.mxu0 %v1542
        %1564 = vmatprep.subr.mxu0 0.0
        %1565 = vmatpush1.msra.mxu0 %v1543
        %1566 = vmatprep.subr.mxu0 0.0
        %1567 = vmatpush1.msra.mxu0 %v1544
        %1568 = vmatprep.subr.mxu0 0.0
        %1569 = vmatpush1.msra.mxu0 %v1545
        %1570 = vmatprep.subr.mxu0 0.0
        %1571 = vmatpush1.msra.mxu0 %v1546
        %1572 = vmatprep.subr.mxu0 0.0
        %1573 = vmatpush1.msra.mxu0 %v1547
        %1574 = vmatprep.subr.mxu0 0.0
        %1575 = vmatpush1.msra.mxu0 %v1548
        %1576 = vmatprep.subr.mxu0 0.0
        %1577 = vmatpush1.msra.mxu0 %v1549
        %1578 = vmatprep.subr.mxu0 0.0
        %1579 = vmatpush1.msra.mxu0 %v1550
        %1580 = vmatprep.subr.mxu0 0.0
        %1581 = vmatpush1.msra.mxu0 %v1551
        %1582 = vmatprep.subr.mxu0 0.0
        %1583 = vmatpush1.msra.mxu0 %v1552
        %1584 = vmatprep.subr.mxu0 0.0
        %1585 = vmatpush1.msra.mxu0 %v1553
        %1586 = vmatprep.subr.mxu0 0.0
        %1587 = vmatpush1.msra.mxu0 0.0
        %1588 = vmatprep.subr.mxu0 0.0
        %1589 = vmatpush1.msra.mxu0 0.0
        %1590 = vmatprep.subr.mxu0 0.0
        %1591 = vmatpush1.msra.mxu0 0.0
        %1592 = vmatprep.subr.mxu0 0.0
        %1593 = vmatpush1.msra.mxu0 0.0
        %1594 = vmatprep.subr.mxu0 0.0
        %1595 = vmatpush1.msra.mxu0 0.0
        %1596 = vmatprep.subr.mxu0 0.0
        %1597 = vmatpush1.msra.mxu0 0.0
        %1598 = vmatprep.subr.mxu0 0.0
        %1599 = vmatpush1.msra.mxu0 0.0
        %1600 = vmatprep.subr.mxu0 0.0
        %1601 = vmatpush1.msra.mxu0 0.0
        %1602 = vmatprep.subr.mxu0 0.0
        %1603 = vmatpush1.msra.mxu0 0.0
        %1604 = vmatprep.subr.mxu0 0.0
        %1605 = vmatpush1.msra.mxu0 0.0
        %1606 = vmatprep.subr.mxu0 0.0
        %1607 = vmatpush1.msra.mxu0 0.0
        %1608 = vmatprep.subr.mxu0 0.0
        %1609 = vmatpush1.msra.mxu0 0.0
        %1610 = vmatprep.subr.mxu0 0.0
        %1611 = vmatpush1.msra.mxu0 0.0
        %1612 = vmatprep.subr.mxu0 0.0
        %1613 = vmatpush1.msra.mxu0 0.0
        %1614 = vmatprep.subr.mxu0 0.0
        %1615 = vmatpush1.msra.mxu0 0.0
        %1616 = vmatprep.subr.mxu0 0.0
        %1617 = vmatpush1.msra.mxu0 0.0
        %1618 = vmatprep.mubr.f32.mxu0 0.0
        %1619 = vmatmul.mubr.f32.gmra.mrb[0].mxu0 %v1516
        %v1620 = vpop.f32.mrb[0].mxu0
        %v1621 = vadd.f32 0.0, %v1620
        %v1622 = vpop.f32.mrb[0].mxu0
        %1623 = vmatprep.mubr.f32.mxu0 0.0
        %1624 = vmatmul.mubr.f32.gmra.mrb[0].mxu0 %v1517
        %v1625 = vpop.f32.mrb[0].mxu0
        %v1626 = vadd.f32 0.0, %v1625
        %v1627 = vpop.f32.mrb[0].mxu0
        %1628 = vdwg.mxu0
        %v1629 = vadd.f32 %v1536, %v1621
        %v1630 = vadd.f32 %v1536, %v1626
        %s1631 = scalar_lea.vmem [#allocation7], 128
        %v1632 = vld [vmem:[%s1631] sm:$0xff]
        %v1633 = vld [vmem:[%s1631 + $0x8] sm:$0xff]
        %v1634 = vld [vmem:[%s1631 + $0x10] sm:$0xff]
        %v1635 = vld [vmem:[%s1631 + $0x18] sm:$0xff]
        %v1636 = vld [vmem:[%s1631 + $0x20] sm:$0xff]
        %v1637 = vld [vmem:[%s1631 + $0x28] sm:$0xff]
        %v1638 = vld [vmem:[%s1631 + $0x30] sm:$0xff]
        %v1639 = vld [vmem:[%s1631 + $0x38] sm:$0xff]
        %v1640 = vld [vmem:[%s1631 + $0x40] sm:$0xff]
        %v1641 = vld [vmem:[%s1631 + $0x48] sm:$0xff]
        %v1642 = vld [vmem:[%s1631 + $0x50] sm:$0xff]
        %v1643 = vld [vmem:[%s1631 + $0x58] sm:$0xff]
        %v1644 = vld [vmem:[%s1631 + $0x60] sm:$0xff]
        %v1645 = vld [vmem:[%s1631 + $0x68] sm:$0xff]
        %v1646 = vld [vmem:[%s1631 + $0x70] sm:$0xff]
        %v1647 = vld [vmem:[%s1631 + $0x78] sm:$0xff]
        %1648 = vmatprep.subr.mxu0 0.0
        %1649 = vmatpush1.msra.mxu0 %v1632
        %1650 = vmatprep.subr.mxu0 0.0
        %1651 = vmatpush1.msra.mxu0 %v1633
        %1652 = vmatprep.subr.mxu0 0.0
        %1653 = vmatpush1.msra.mxu0 %v1634
        %1654 = vmatprep.subr.mxu0 0.0
        %1655 = vmatpush1.msra.mxu0 %v1635
        %1656 = vmatprep.subr.mxu0 0.0
        %1657 = vmatpush1.msra.mxu0 %v1636
        %1658 = vmatprep.subr.mxu0 0.0
        %1659 = vmatpush1.msra.mxu0 %v1637
        %1660 = vmatprep.subr.mxu0 0.0
        %1661 = vmatpush1.msra.mxu0 %v1638
        %1662 = vmatprep.subr.mxu0 0.0
        %1663 = vmatpush1.msra.mxu0 %v1639
        %1664 = vmatprep.subr.mxu0 0.0
        %1665 = vmatpush1.msra.mxu0 %v1640
        %1666 = vmatprep.subr.mxu0 0.0
        %1667 = vmatpush1.msra.mxu0 %v1641
        %1668 = vmatprep.subr.mxu0 0.0
        %1669 = vmatpush1.msra.mxu0 %v1642
        %1670 = vmatprep.subr.mxu0 0.0
        %1671 = vmatpush1.msra.mxu0 %v1643
        %1672 = vmatprep.subr.mxu0 0.0
        %1673 = vmatpush1.msra.mxu0 %v1644
        %1674 = vmatprep.subr.mxu0 0.0
        %1675 = vmatpush1.msra.mxu0 %v1645
        %1676 = vmatprep.subr.mxu0 0.0
        %1677 = vmatpush1.msra.mxu0 %v1646
        %1678 = vmatprep.subr.mxu0 0.0
        %1679 = vmatpush1.msra.mxu0 %v1647
        %1680 = vmatprep.subr.mxu0 0.0
        %1681 = vmatpush1.msra.mxu0 0.0
        %1682 = vmatprep.subr.mxu0 0.0
        %1683 = vmatpush1.msra.mxu0 0.0
        %1684 = vmatprep.subr.mxu0 0.0
        %1685 = vmatpush1.msra.mxu0 0.0
        %1686 = vmatprep.subr.mxu0 0.0
        %1687 = vmatpush1.msra.mxu0 0.0
        %1688 = vmatprep.subr.mxu0 0.0
        %1689 = vmatpush1.msra.mxu0 0.0
        %1690 = vmatprep.subr.mxu0 0.0
        %1691 = vmatpush1.msra.mxu0 0.0
        %1692 = vmatprep.subr.mxu0 0.0
        %1693 = vmatpush1.msra.mxu0 0.0
        %1694 = vmatprep.subr.mxu0 0.0
        %1695 = vmatpush1.msra.mxu0 0.0
        %1696 = vmatprep.subr.mxu0 0.0
        %1697 = vmatpush1.msra.mxu0 0.0
        %1698 = vmatprep.subr.mxu0 0.0
        %1699 = vmatpush1.msra.mxu0 0.0
        %1700 = vmatprep.subr.mxu0 0.0
        %1701 = vmatpush1.msra.mxu0 0.0
        %1702 = vmatprep.subr.mxu0 0.0
        %1703 = vmatpush1.msra.mxu0 0.0
        %1704 = vmatprep.subr.mxu0 0.0
        %1705 = vmatpush1.msra.mxu0 0.0
        %1706 = vmatprep.subr.mxu0 0.0
        %1707 = vmatpush1.msra.mxu0 0.0
        %1708 = vmatprep.subr.mxu0 0.0
        %1709 = vmatpush1.msra.mxu0 0.0
        %1710 = vmatprep.subr.mxu0 0.0
        %1711 = vmatpush1.msra.mxu0 0.0
        %1712 = vmatprep.mubr.f32.mxu0 0.0
        %1713 = vmatmul.mubr.f32.gmra.mrb[0].mxu0 %v1501
        %v1714 = vpop.f32.mrb[0].mxu0
        %v1715 = vadd.f32 0.0, %v1714
        %v1716 = vpop.f32.mrb[0].mxu0
        %1717 = vmatprep.mubr.f32.mxu0 0.0
        %1718 = vmatmul.mubr.f32.gmra.mrb[0].mxu0 %v1502
        %v1719 = vpop.f32.mrb[0].mxu0
        %v1720 = vadd.f32 0.0, %v1719
        %v1721 = vpop.f32.mrb[0].mxu0
        %1722 = vdwg.mxu0
        %v1723 = vadd.f32 %v1629, %v1715
        %v1724 = vadd.f32 %v1630, %v1720
        %s1725 = scalar_lea.vmem [#allocation7], 256
        %v1726 = vld [vmem:[%s1725] sm:$0xff]
        %v1727 = vld [vmem:[%s1725 + $0x8] sm:$0xff]
        %v1728 = vld [vmem:[%s1725 + $0x10] sm:$0xff]
        %v1729 = vld [vmem:[%s1725 + $0x18] sm:$0xff]
        %v1730 = vld [vmem:[%s1725 + $0x20] sm:$0xff]
        %v1731 = vld [vmem:[%s1725 + $0x28] sm:$0xff]
        %v1732 = vld [vmem:[%s1725 + $0x30] sm:$0xff]
        %v1733 = vld [vmem:[%s1725 + $0x38] sm:$0xff]
        %v1734 = vld [vmem:[%s1725 + $0x40] sm:$0xff]
        %v1735 = vld [vmem:[%s1725 + $0x48] sm:$0xff]
        %v1736 = vld [vmem:[%s1725 + $0x50] sm:$0xff]
        %v1737 = vld [vmem:[%s1725 + $0x58] sm:$0xff]
        %v1738 = vld [vmem:[%s1725 + $0x60] sm:$0xff]
        %v1739 = vld [vmem:[%s1725 + $0x68] sm:$0xff]
        %v1740 = vld [vmem:[%s1725 + $0x70] sm:$0xff]
        %v1741 = vld [vmem:[%s1725 + $0x78] sm:$0xff]
        %1742 = vmatprep.subr.mxu0 0.0
        %1743 = vmatpush1.msra.mxu0 %v1726
        %1744 = vmatprep.subr.mxu0 0.0
        %1745 = vmatpush1.msra.mxu0 %v1727
        %1746 = vmatprep.subr.mxu0 0.0
        %1747 = vmatpush1.msra.mxu0 %v1728
        %1748 = vmatprep.subr.mxu0 0.0
        %1749 = vmatpush1.msra.mxu0 %v1729
        %1750 = vmatprep.subr.mxu0 0.0
        %1751 = vmatpush1.msra.mxu0 %v1730
        %1752 = vmatprep.subr.mxu0 0.0
        %1753 = vmatpush1.msra.mxu0 %v1731
        %1754 = vmatprep.subr.mxu0 0.0
        %1755 = vmatpush1.msra.mxu0 %v1732
        %1756 = vmatprep.subr.mxu0 0.0
        %1757 = vmatpush1.msra.mxu0 %v1733
        %1758 = vmatprep.subr.mxu0 0.0
        %1759 = vmatpush1.msra.mxu0 %v1734
        %1760 = vmatprep.subr.mxu0 0.0
        %1761 = vmatpush1.msra.mxu0 %v1735
        %1762 = vmatprep.subr.mxu0 0.0
        %1763 = vmatpush1.msra.mxu0 %v1736
        %1764 = vmatprep.subr.mxu0 0.0
        %1765 = vmatpush1.msra.mxu0 %v1737
        %1766 = vmatprep.subr.mxu0 0.0
        %1767 = vmatpush1.msra.mxu0 %v1738
        %1768 = vmatprep.subr.mxu0 0.0
        %1769 = vmatpush1.msra.mxu0 %v1739
        %1770 = vmatprep.subr.mxu0 0.0
        %1771 = vmatpush1.msra.mxu0 %v1740
        %1772 = vmatprep.subr.mxu0 0.0
        %1773 = vmatpush1.msra.mxu0 %v1741
        %1774 = vmatprep.subr.mxu0 0.0
        %1775 = vmatpush1.msra.mxu0 0.0
        %1776 = vmatprep.subr.mxu0 0.0
        %1777 = vmatpush1.msra.mxu0 0.0
        %1778 = vmatprep.subr.mxu0 0.0
        %1779 = vmatpush1.msra.mxu0 0.0
        %1780 = vmatprep.subr.mxu0 0.0
        %1781 = vmatpush1.msra.mxu0 0.0
        %1782 = vmatprep.subr.mxu0 0.0
        %1783 = vmatpush1.msra.mxu0 0.0
        %1784 = vmatprep.subr.mxu0 0.0
        %1785 = vmatpush1.msra.mxu0 0.0
        %1786 = vmatprep.subr.mxu0 0.0
        %1787 = vmatpush1.msra.mxu0 0.0
        %1788 = vmatprep.subr.mxu0 0.0
        %1789 = vmatpush1.msra.mxu0 0.0
        %1790 = vmatprep.subr.mxu0 0.0
        %1791 = vmatpush1.msra.mxu0 0.0
        %1792 = vmatprep.subr.mxu0 0.0
        %1793 = vmatpush1.msra.mxu0 0.0
        %1794 = vmatprep.subr.mxu0 0.0
        %1795 = vmatpush1.msra.mxu0 0.0
        %1796 = vmatprep.subr.mxu0 0.0
        %1797 = vmatpush1.msra.mxu0 0.0
        %1798 = vmatprep.subr.mxu0 0.0
        %1799 = vmatpush1.msra.mxu0 0.0
        %1800 = vmatprep.subr.mxu0 0.0
        %1801 = vmatpush1.msra.mxu0 0.0
        %1802 = vmatprep.subr.mxu0 0.0
        %1803 = vmatpush1.msra.mxu0 0.0
        %1804 = vmatprep.subr.mxu0 0.0
        %1805 = vmatpush1.msra.mxu0 0.0
        %1806 = vmatprep.mubr.f32.mxu0 0.0
        %1807 = vmatmul.mubr.f32.gmra.mrb[0].mxu0 %v1528
        %v1808 = vpop.f32.mrb[0].mxu0
        %v1809 = vadd.f32 0.0, %v1808
        %v1810 = vpop.f32.mrb[0].mxu0
        %1811 = vmatprep.mubr.f32.mxu0 0.0
        %1812 = vmatmul.mubr.f32.gmra.mrb[0].mxu0 %v1529
        %v1813 = vpop.f32.mrb[0].mxu0
        %v1814 = vadd.f32 0.0, %v1813
        %v1815 = vpop.f32.mrb[0].mxu0
        %1816 = vdwg.mxu0
        %v1817 = vadd.f32 %v1723, %v1809
        %v1818 = vadd.f32 %v1724, %v1814
        %s1819 = scalar_lea.vmem [#allocation7], 384
        %v1820 = vld [vmem:[%s1819] sm:$0xff]
        %v1821 = vld [vmem:[%s1819 + $0x8] sm:$0xff]
        %v1822 = vld [vmem:[%s1819 + $0x10] sm:$0xff]
        %v1823 = vld [vmem:[%s1819 + $0x18] sm:$0xff]
        %v1824 = vld [vmem:[%s1819 + $0x20] sm:$0xff]
        %v1825 = vld [vmem:[%s1819 + $0x28] sm:$0xff]
        %v1826 = vld [vmem:[%s1819 + $0x30] sm:$0xff]
        %v1827 = vld [vmem:[%s1819 + $0x38] sm:$0xff]
        %v1828 = vld [vmem:[%s1819 + $0x40] sm:$0xff]
        %v1829 = vld [vmem:[%s1819 + $0x48] sm:$0xff]
        %v1830 = vld [vmem:[%s1819 + $0x50] sm:$0xff]
        %v1831 = vld [vmem:[%s1819 + $0x58] sm:$0xff]
        %v1832 = vld [vmem:[%s1819 + $0x60] sm:$0xff]
        %v1833 = vld [vmem:[%s1819 + $0x68] sm:$0xff]
        %v1834 = vld [vmem:[%s1819 + $0x70] sm:$0xff]
        %v1835 = vld [vmem:[%s1819 + $0x78] sm:$0xff]
        %v1839 = vrot.slane %v1516, 1
        %v1840 = vrot.slane %v1517, 1
        %v1841 = vsel %vm988, %v1839, %v1840
        %v1842 = vrot.slane %v1518, 1
        %v1843 = vsel %vm988, %v1840, %v1842
        %1846 = vmatprep.subr.mxu0 0.0
        %1847 = vmatpush1.msra.mxu0 %v1820
        %1848 = vmatprep.subr.mxu0 0.0
        %1849 = vmatpush1.msra.mxu0 %v1821
        %1850 = vmatprep.subr.mxu0 0.0
        %1851 = vmatpush1.msra.mxu0 %v1822
        %1852 = vmatprep.subr.mxu0 0.0
        %1853 = vmatpush1.msra.mxu0 %v1823
        %1854 = vmatprep.subr.mxu0 0.0
        %1855 = vmatpush1.msra.mxu0 %v1824
        %1856 = vmatprep.subr.mxu0 0.0
        %1857 = vmatpush1.msra.mxu0 %v1825
        %1858 = vmatprep.subr.mxu0 0.0
        %1859 = vmatpush1.msra.mxu0 %v1826
        %1860 = vmatprep.subr.mxu0 0.0
        %1861 = vmatpush1.msra.mxu0 %v1827
        %1862 = vmatprep.subr.mxu0 0.0
        %1863 = vmatpush1.msra.mxu0 %v1828
        %1864 = vmatprep.subr.mxu0 0.0
        %1865 = vmatpush1.msra.mxu0 %v1829
        %1866 = vmatprep.subr.mxu0 0.0
        %1867 = vmatpush1.msra.mxu0 %v1830
        %1868 = vmatprep.subr.mxu0 0.0
        %1869 = vmatpush1.msra.mxu0 %v1831
        %1870 = vmatprep.subr.mxu0 0.0
        %1871 = vmatpush1.msra.mxu0 %v1832
        %1872 = vmatprep.subr.mxu0 0.0
        %1873 = vmatpush1.msra.mxu0 %v1833
        %1874 = vmatprep.subr.mxu0 0.0
        %1875 = vmatpush1.msra.mxu0 %v1834
        %1876 = vmatprep.subr.mxu0 0.0
        %1877 = vmatpush1.msra.mxu0 %v1835
        %1878 = vmatprep.subr.mxu0 0.0
        %1879 = vmatpush1.msra.mxu0 0.0
        %1880 = vmatprep.subr.mxu0 0.0
        %1881 = vmatpush1.msra.mxu0 0.0
        %1882 = vmatprep.subr.mxu0 0.0
        %1883 = vmatpush1.msra.mxu0 0.0
        %1884 = vmatprep.subr.mxu0 0.0
        %1885 = vmatpush1.msra.mxu0 0.0
        %1886 = vmatprep.subr.mxu0 0.0
        %1887 = vmatpush1.msra.mxu0 0.0
        %1888 = vmatprep.subr.mxu0 0.0
        %1889 = vmatpush1.msra.mxu0 0.0
        %1890 = vmatprep.subr.mxu0 0.0
        %1891 = vmatpush1.msra.mxu0 0.0
        %1892 = vmatprep.subr.mxu0 0.0
        %1893 = vmatpush1.msra.mxu0 0.0
        %1894 = vmatprep.subr.mxu0 0.0
        %1895 = vmatpush1.msra.mxu0 0.0
        %1896 = vmatprep.subr.mxu0 0.0
        %1897 = vmatpush1.msra.mxu0 0.0
        %1898 = vmatprep.subr.mxu0 0.0
        %1899 = vmatpush1.msra.mxu0 0.0
        %1900 = vmatprep.subr.mxu0 0.0
        %1901 = vmatpush1.msra.mxu0 0.0
        %1902 = vmatprep.subr.mxu0 0.0
        %1903 = vmatpush1.msra.mxu0 0.0
        %1904 = vmatprep.subr.mxu0 0.0
        %1905 = vmatpush1.msra.mxu0 0.0
        %1906 = vmatprep.subr.mxu0 0.0
        %1907 = vmatpush1.msra.mxu0 0.0
        %1908 = vmatprep.subr.mxu0 0.0
        %1909 = vmatpush1.msra.mxu0 0.0
        %1910 = vmatprep.mubr.f32.mxu0 0.0
        %1911 = vmatmul.mubr.f32.gmra.mrb[0].mxu0 %v1841
        %v1912 = vpop.f32.mrb[0].mxu0
        %v1913 = vadd.f32 0.0, %v1912
        %v1914 = vpop.f32.mrb[0].mxu0
        %1915 = vmatprep.mubr.f32.mxu0 0.0
        %1916 = vmatmul.mubr.f32.gmra.mrb[0].mxu0 %v1843
        %v1917 = vpop.f32.mrb[0].mxu0
        %v1918 = vadd.f32 0.0, %v1917
        %v1919 = vpop.f32.mrb[0].mxu0
        %1920 = vdwg.mxu0
        %v1921 = vadd.f32 %v1817, %v1913
        %v1922 = vadd.f32 %v1818, %v1918
        %s1923 = scalar_lea.vmem [#allocation7], 512
        %v1924 = vld [vmem:[%s1923] sm:$0xff]
        %v1925 = vld [vmem:[%s1923 + $0x8] sm:$0xff]
        %v1926 = vld [vmem:[%s1923 + $0x10] sm:$0xff]
        %v1927 = vld [vmem:[%s1923 + $0x18] sm:$0xff]
        %v1928 = vld [vmem:[%s1923 + $0x20] sm:$0xff]
        %v1929 = vld [vmem:[%s1923 + $0x28] sm:$0xff]
        %v1930 = vld [vmem:[%s1923 + $0x30] sm:$0xff]
        %v1931 = vld [vmem:[%s1923 + $0x38] sm:$0xff]
        %v1932 = vld [vmem:[%s1923 + $0x40] sm:$0xff]
        %v1933 = vld [vmem:[%s1923 + $0x48] sm:$0xff]
        %v1934 = vld [vmem:[%s1923 + $0x50] sm:$0xff]
        %v1935 = vld [vmem:[%s1923 + $0x58] sm:$0xff]
        %v1936 = vld [vmem:[%s1923 + $0x60] sm:$0xff]
        %v1937 = vld [vmem:[%s1923 + $0x68] sm:$0xff]
        %v1938 = vld [vmem:[%s1923 + $0x70] sm:$0xff]
        %v1939 = vld [vmem:[%s1923 + $0x78] sm:$0xff]
        %v1940 = vrot.slane %v1501, 1
        %v1941 = vrot.slane %v1502, 1
        %v1942 = vsel %vm988, %v1940, %v1941
        %v1943 = vrot.slane %v1503, 1
        %v1944 = vsel %vm988, %v1941, %v1943
        %1947 = vmatprep.subr.mxu0 0.0
        %1948 = vmatpush1.msra.mxu0 %v1924
        %1949 = vmatprep.subr.mxu0 0.0
        %1950 = vmatpush1.msra.mxu0 %v1925
        %1951 = vmatprep.subr.mxu0 0.0
        %1952 = vmatpush1.msra.mxu0 %v1926
        %1953 = vmatprep.subr.mxu0 0.0
        %1954 = vmatpush1.msra.mxu0 %v1927
        %1955 = vmatprep.subr.mxu0 0.0
        %1956 = vmatpush1.msra.mxu0 %v1928
        %1957 = vmatprep.subr.mxu0 0.0
        %1958 = vmatpush1.msra.mxu0 %v1929
        %1959 = vmatprep.subr.mxu0 0.0
        %1960 = vmatpush1.msra.mxu0 %v1930
        %1961 = vmatprep.subr.mxu0 0.0
        %1962 = vmatpush1.msra.mxu0 %v1931
        %1963 = vmatprep.subr.mxu0 0.0
        %1964 = vmatpush1.msra.mxu0 %v1932
        %1965 = vmatprep.subr.mxu0 0.0
        %1966 = vmatpush1.msra.mxu0 %v1933
        %1967 = vmatprep.subr.mxu0 0.0
        %1968 = vmatpush1.msra.mxu0 %v1934
        %1969 = vmatprep.subr.mxu0 0.0
        %1970 = vmatpush1.msra.mxu0 %v1935
        %1971 = vmatprep.subr.mxu0 0.0
        %1972 = vmatpush1.msra.mxu0 %v1936
        %1973 = vmatprep.subr.mxu0 0.0
        %1974 = vmatpush1.msra.mxu0 %v1937
        %1975 = vmatprep.subr.mxu0 0.0
        %1976 = vmatpush1.msra.mxu0 %v1938
        %1977 = vmatprep.subr.mxu0 0.0
        %1978 = vmatpush1.msra.mxu0 %v1939
        %1979 = vmatprep.subr.mxu0 0.0
        %1980 = vmatpush1.msra.mxu0 0.0
        %1981 = vmatprep.subr.mxu0 0.0
        %1982 = vmatpush1.msra.mxu0 0.0
        %1983 = vmatprep.subr.mxu0 0.0
        %1984 = vmatpush1.msra.mxu0 0.0
        %1985 = vmatprep.subr.mxu0 0.0
        %1986 = vmatpush1.msra.mxu0 0.0
        %1987 = vmatprep.subr.mxu0 0.0
        %1988 = vmatpush1.msra.mxu0 0.0
        %1989 = vmatprep.subr.mxu0 0.0
        %1990 = vmatpush1.msra.mxu0 0.0
        %1991 = vmatprep.subr.mxu0 0.0
        %1992 = vmatpush1.msra.mxu0 0.0
        %1993 = vmatprep.subr.mxu0 0.0
        %1994 = vmatpush1.msra.mxu0 0.0
        %1995 = vmatprep.subr.mxu0 0.0
        %1996 = vmatpush1.msra.mxu0 0.0
        %1997 = vmatprep.subr.mxu0 0.0
        %1998 = vmatpush1.msra.mxu0 0.0
        %1999 = vmatprep.subr.mxu0 0.0
        %2000 = vmatpush1.msra.mxu0 0.0
        %2001 = vmatprep.subr.mxu0 0.0
        %2002 = vmatpush1.msra.mxu0 0.0
        %2003 = vmatprep.subr.mxu0 0.0
        %2004 = vmatpush1.msra.mxu0 0.0
        %2005 = vmatprep.subr.mxu0 0.0
        %2006 = vmatpush1.msra.mxu0 0.0
        %2007 = vmatprep.subr.mxu0 0.0
        %2008 = vmatpush1.msra.mxu0 0.0
        %2009 = vmatprep.subr.mxu0 0.0
        %2010 = vmatpush1.msra.mxu0 0.0
        %2011 = vmatprep.mubr.f32.mxu0 0.0
        %2012 = vmatmul.mubr.f32.gmra.mrb[0].mxu0 %v1942
        %v2013 = vpop.f32.mrb[0].mxu0
        %v2014 = vadd.f32 0.0, %v2013
        %v2015 = vpop.f32.mrb[0].mxu0
        %2016 = vmatprep.mubr.f32.mxu0 0.0
        %2017 = vmatmul.mubr.f32.gmra.mrb[0].mxu0 %v1944
        %v2018 = vpop.f32.mrb[0].mxu0
        %v2019 = vadd.f32 0.0, %v2018
        %v2020 = vpop.f32.mrb[0].mxu0
        %2021 = vdwg.mxu0
        %v2022 = vadd.f32 %v1921, %v2014
        %v2023 = vadd.f32 %v1922, %v2019
        %s2024 = scalar_lea.vmem [#allocation7], 640
        %v2025 = vld [vmem:[%s2024] sm:$0xff]
        %v2026 = vld [vmem:[%s2024 + $0x8] sm:$0xff]
        %v2027 = vld [vmem:[%s2024 + $0x10] sm:$0xff]
        %v2028 = vld [vmem:[%s2024 + $0x18] sm:$0xff]
        %v2029 = vld [vmem:[%s2024 + $0x20] sm:$0xff]
        %v2030 = vld [vmem:[%s2024 + $0x28] sm:$0xff]
        %v2031 = vld [vmem:[%s2024 + $0x30] sm:$0xff]
        %v2032 = vld [vmem:[%s2024 + $0x38] sm:$0xff]
        %v2033 = vld [vmem:[%s2024 + $0x40] sm:$0xff]
        %v2034 = vld [vmem:[%s2024 + $0x48] sm:$0xff]
        %v2035 = vld [vmem:[%s2024 + $0x50] sm:$0xff]
        %v2036 = vld [vmem:[%s2024 + $0x58] sm:$0xff]
        %v2037 = vld [vmem:[%s2024 + $0x60] sm:$0xff]
        %v2038 = vld [vmem:[%s2024 + $0x68] sm:$0xff]
        %v2039 = vld [vmem:[%s2024 + $0x70] sm:$0xff]
        %v2040 = vld [vmem:[%s2024 + $0x78] sm:$0xff]
        %v2044 = vrot.slane %v1528, 1
        %v2045 = vrot.slane %v1529, 1
        %v2046 = vsel %vm988, %v2044, %v2045
        %v2047 = vrot.slane %v1530, 1
        %v2048 = vsel %vm988, %v2045, %v2047
        %2051 = vmatprep.subr.mxu0 0.0
        %2052 = vmatpush1.msra.mxu0 %v2025
        %2053 = vmatprep.subr.mxu0 0.0
        %2054 = vmatpush1.msra.mxu0 %v2026
        %2055 = vmatprep.subr.mxu0 0.0
        %2056 = vmatpush1.msra.mxu0 %v2027
        %2057 = vmatprep.subr.mxu0 0.0
        %2058 = vmatpush1.msra.mxu0 %v2028
        %2059 = vmatprep.subr.mxu0 0.0
        %2060 = vmatpush1.msra.mxu0 %v2029
        %2061 = vmatprep.subr.mxu0 0.0
        %2062 = vmatpush1.msra.mxu0 %v2030
        %2063 = vmatprep.subr.mxu0 0.0
        %2064 = vmatpush1.msra.mxu0 %v2031
        %2065 = vmatprep.subr.mxu0 0.0
        %2066 = vmatpush1.msra.mxu0 %v2032
        %2067 = vmatprep.subr.mxu0 0.0
        %2068 = vmatpush1.msra.mxu0 %v2033
        %2069 = vmatprep.subr.mxu0 0.0
        %2070 = vmatpush1.msra.mxu0 %v2034
        %2071 = vmatprep.subr.mxu0 0.0
        %2072 = vmatpush1.msra.mxu0 %v2035
        %2073 = vmatprep.subr.mxu0 0.0
        %2074 = vmatpush1.msra.mxu0 %v2036
        %2075 = vmatprep.subr.mxu0 0.0
        %2076 = vmatpush1.msra.mxu0 %v2037
        %2077 = vmatprep.subr.mxu0 0.0
        %2078 = vmatpush1.msra.mxu0 %v2038
        %2079 = vmatprep.subr.mxu0 0.0
        %2080 = vmatpush1.msra.mxu0 %v2039
        %2081 = vmatprep.subr.mxu0 0.0
        %2082 = vmatpush1.msra.mxu0 %v2040
        %2083 = vmatprep.subr.mxu0 0.0
        %2084 = vmatpush1.msra.mxu0 0.0
        %2085 = vmatprep.subr.mxu0 0.0
        %2086 = vmatpush1.msra.mxu0 0.0
        %2087 = vmatprep.subr.mxu0 0.0
        %2088 = vmatpush1.msra.mxu0 0.0
        %2089 = vmatprep.subr.mxu0 0.0
        %2090 = vmatpush1.msra.mxu0 0.0
        %2091 = vmatprep.subr.mxu0 0.0
        %2092 = vmatpush1.msra.mxu0 0.0
        %2093 = vmatprep.subr.mxu0 0.0
        %2094 = vmatpush1.msra.mxu0 0.0
        %2095 = vmatprep.subr.mxu0 0.0
        %2096 = vmatpush1.msra.mxu0 0.0
        %2097 = vmatprep.subr.mxu0 0.0
        %2098 = vmatpush1.msra.mxu0 0.0
        %2099 = vmatprep.subr.mxu0 0.0
        %2100 = vmatpush1.msra.mxu0 0.0
        %2101 = vmatprep.subr.mxu0 0.0
        %2102 = vmatpush1.msra.mxu0 0.0
        %2103 = vmatprep.subr.mxu0 0.0
        %2104 = vmatpush1.msra.mxu0 0.0
        %2105 = vmatprep.subr.mxu0 0.0
        %2106 = vmatpush1.msra.mxu0 0.0
        %2107 = vmatprep.subr.mxu0 0.0
        %2108 = vmatpush1.msra.mxu0 0.0
        %2109 = vmatprep.subr.mxu0 0.0
        %2110 = vmatpush1.msra.mxu0 0.0
        %2111 = vmatprep.subr.mxu0 0.0
        %2112 = vmatpush1.msra.mxu0 0.0
        %2113 = vmatprep.subr.mxu0 0.0
        %2114 = vmatpush1.msra.mxu0 0.0
        %2115 = vmatprep.mubr.f32.mxu0 0.0
        %2116 = vmatmul.mubr.f32.gmra.mrb[0].mxu0 %v2046
        %v2117 = vpop.f32.mrb[0].mxu0
        %v2118 = vadd.f32 0.0, %v2117
        %v2119 = vpop.f32.mrb[0].mxu0
        %2120 = vmatprep.mubr.f32.mxu0 0.0
        %2121 = vmatmul.mubr.f32.gmra.mrb[0].mxu0 %v2048
        %v2122 = vpop.f32.mrb[0].mxu0
        %v2123 = vadd.f32 0.0, %v2122
        %v2124 = vpop.f32.mrb[0].mxu0
        %2125 = vdwg.mxu0
        %v2126 = vadd.f32 %v2022, %v2118
        %v2127 = vadd.f32 %v2023, %v2123
        %s2128 = scalar_lea.vmem [#allocation7], 768
        %v2129 = vld [vmem:[%s2128] sm:$0xff]
        %v2130 = vld [vmem:[%s2128 + $0x8] sm:$0xff]
        %v2131 = vld [vmem:[%s2128 + $0x10] sm:$0xff]
        %v2132 = vld [vmem:[%s2128 + $0x18] sm:$0xff]
        %v2133 = vld [vmem:[%s2128 + $0x20] sm:$0xff]
        %v2134 = vld [vmem:[%s2128 + $0x28] sm:$0xff]
        %v2135 = vld [vmem:[%s2128 + $0x30] sm:$0xff]
        %v2136 = vld [vmem:[%s2128 + $0x38] sm:$0xff]
        %v2137 = vld [vmem:[%s2128 + $0x40] sm:$0xff]
        %v2138 = vld [vmem:[%s2128 + $0x48] sm:$0xff]
        %v2139 = vld [vmem:[%s2128 + $0x50] sm:$0xff]
        %v2140 = vld [vmem:[%s2128 + $0x58] sm:$0xff]
        %v2141 = vld [vmem:[%s2128 + $0x60] sm:$0xff]
        %v2142 = vld [vmem:[%s2128 + $0x68] sm:$0xff]
        %v2143 = vld [vmem:[%s2128 + $0x70] sm:$0xff]
        %v2144 = vld [vmem:[%s2128 + $0x78] sm:$0xff]
        %v2145 = vrot.slane %v1516, 2
        %v2146 = vrot.slane %v1517, 2
        %v2147 = vsel %vm1289, %v2145, %v2146
        %v2148 = vrot.slane %v1518, 2
        %v2149 = vsel %vm1289, %v2146, %v2148
        %2152 = vmatprep.subr.mxu0 0.0
        %2153 = vmatpush1.msra.mxu0 %v2129
        %2154 = vmatprep.subr.mxu0 0.0
        %2155 = vmatpush1.msra.mxu0 %v2130
        %2156 = vmatprep.subr.mxu0 0.0
        %2157 = vmatpush1.msra.mxu0 %v2131
        %2158 = vmatprep.subr.mxu0 0.0
        %2159 = vmatpush1.msra.mxu0 %v2132
        %2160 = vmatprep.subr.mxu0 0.0
        %2161 = vmatpush1.msra.mxu0 %v2133
        %2162 = vmatprep.subr.mxu0 0.0
        %2163 = vmatpush1.msra.mxu0 %v2134
        %2164 = vmatprep.subr.mxu0 0.0
        %2165 = vmatpush1.msra.mxu0 %v2135
        %2166 = vmatprep.subr.mxu0 0.0
        %2167 = vmatpush1.msra.mxu0 %v2136
        %2168 = vmatprep.subr.mxu0 0.0
        %2169 = vmatpush1.msra.mxu0 %v2137
        %2170 = vmatprep.subr.mxu0 0.0
        %2171 = vmatpush1.msra.mxu0 %v2138
        %2172 = vmatprep.subr.mxu0 0.0
        %2173 = vmatpush1.msra.mxu0 %v2139
        %2174 = vmatprep.subr.mxu0 0.0
        %2175 = vmatpush1.msra.mxu0 %v2140
        %2176 = vmatprep.subr.mxu0 0.0
        %2177 = vmatpush1.msra.mxu0 %v2141
        %2178 = vmatprep.subr.mxu0 0.0
        %2179 = vmatpush1.msra.mxu0 %v2142
        %2180 = vmatprep.subr.mxu0 0.0
        %2181 = vmatpush1.msra.mxu0 %v2143
        %2182 = vmatprep.subr.mxu0 0.0
        %2183 = vmatpush1.msra.mxu0 %v2144
        %2184 = vmatprep.subr.mxu0 0.0
        %2185 = vmatpush1.msra.mxu0 0.0
        %2186 = vmatprep.subr.mxu0 0.0
        %2187 = vmatpush1.msra.mxu0 0.0
        %2188 = vmatprep.subr.mxu0 0.0
        %2189 = vmatpush1.msra.mxu0 0.0
        %2190 = vmatprep.subr.mxu0 0.0
        %2191 = vmatpush1.msra.mxu0 0.0
        %2192 = vmatprep.subr.mxu0 0.0
        %2193 = vmatpush1.msra.mxu0 0.0
        %2194 = vmatprep.subr.mxu0 0.0
        %2195 = vmatpush1.msra.mxu0 0.0
        %2196 = vmatprep.subr.mxu0 0.0
        %2197 = vmatpush1.msra.mxu0 0.0
        %2198 = vmatprep.subr.mxu0 0.0
        %2199 = vmatpush1.msra.mxu0 0.0
        %2200 = vmatprep.subr.mxu0 0.0
        %2201 = vmatpush1.msra.mxu0 0.0
        %2202 = vmatprep.subr.mxu0 0.0
        %2203 = vmatpush1.msra.mxu0 0.0
        %2204 = vmatprep.subr.mxu0 0.0
        %2205 = vmatpush1.msra.mxu0 0.0
        %2206 = vmatprep.subr.mxu0 0.0
        %2207 = vmatpush1.msra.mxu0 0.0
        %2208 = vmatprep.subr.mxu0 0.0
        %2209 = vmatpush1.msra.mxu0 0.0
        %2210 = vmatprep.subr.mxu0 0.0
        %2211 = vmatpush1.msra.mxu0 0.0
        %2212 = vmatprep.subr.mxu0 0.0
        %2213 = vmatpush1.msra.mxu0 0.0
        %2214 = vmatprep.subr.mxu0 0.0
        %2215 = vmatpush1.msra.mxu0 0.0
        %2216 = vmatprep.mubr.f32.mxu0 0.0
        %2217 = vmatmul.mubr.f32.gmra.mrb[0].mxu0 %v2147
        %v2218 = vpop.f32.mrb[0].mxu0
        %v2219 = vadd.f32 0.0, %v2218
        %v2220 = vpop.f32.mrb[0].mxu0
        %2221 = vmatprep.mubr.f32.mxu0 0.0
        %2222 = vmatmul.mubr.f32.gmra.mrb[0].mxu0 %v2149
        %v2223 = vpop.f32.mrb[0].mxu0
        %v2224 = vadd.f32 0.0, %v2223
        %v2225 = vpop.f32.mrb[0].mxu0
        %2226 = vdwg.mxu0
        %v2227 = vadd.f32 %v2126, %v2219
        %v2228 = vadd.f32 %v2127, %v2224
        %s2229 = scalar_lea.vmem [#allocation7], 896
        %v2230 = vld [vmem:[%s2229] sm:$0xff]
        %v2231 = vld [vmem:[%s2229 + $0x8] sm:$0xff]
        %v2232 = vld [vmem:[%s2229 + $0x10] sm:$0xff]
        %v2233 = vld [vmem:[%s2229 + $0x18] sm:$0xff]
        %v2234 = vld [vmem:[%s2229 + $0x20] sm:$0xff]
        %v2235 = vld [vmem:[%s2229 + $0x28] sm:$0xff]
        %v2236 = vld [vmem:[%s2229 + $0x30] sm:$0xff]
        %v2237 = vld [vmem:[%s2229 + $0x38] sm:$0xff]
        %v2238 = vld [vmem:[%s2229 + $0x40] sm:$0xff]
        %v2239 = vld [vmem:[%s2229 + $0x48] sm:$0xff]
        %v2240 = vld [vmem:[%s2229 + $0x50] sm:$0xff]
        %v2241 = vld [vmem:[%s2229 + $0x58] sm:$0xff]
        %v2242 = vld [vmem:[%s2229 + $0x60] sm:$0xff]
        %v2243 = vld [vmem:[%s2229 + $0x68] sm:$0xff]
        %v2244 = vld [vmem:[%s2229 + $0x70] sm:$0xff]
        %v2245 = vld [vmem:[%s2229 + $0x78] sm:$0xff]
        %v2246 = vrot.slane %v1501, 2
        %v2247 = vrot.slane %v1502, 2
        %v2248 = vsel %vm1289, %v2246, %v2247
        %v2249 = vrot.slane %v1503, 2
        %v2250 = vsel %vm1289, %v2247, %v2249
        %2253 = vmatprep.subr.mxu0 0.0
        %2254 = vmatpush1.msra.mxu0 %v2230
        %2255 = vmatprep.subr.mxu0 0.0
        %2256 = vmatpush1.msra.mxu0 %v2231
        %2257 = vmatprep.subr.mxu0 0.0
        %2258 = vmatpush1.msra.mxu0 %v2232
        %2259 = vmatprep.subr.mxu0 0.0
        %2260 = vmatpush1.msra.mxu0 %v2233
        %2261 = vmatprep.subr.mxu0 0.0
        %2262 = vmatpush1.msra.mxu0 %v2234
        %2263 = vmatprep.subr.mxu0 0.0
        %2264 = vmatpush1.msra.mxu0 %v2235
        %2265 = vmatprep.subr.mxu0 0.0
        %2266 = vmatpush1.msra.mxu0 %v2236
        %2267 = vmatprep.subr.mxu0 0.0
        %2268 = vmatpush1.msra.mxu0 %v2237
        %2269 = vmatprep.subr.mxu0 0.0
        %2270 = vmatpush1.msra.mxu0 %v2238
        %2271 = vmatprep.subr.mxu0 0.0
        %2272 = vmatpush1.msra.mxu0 %v2239
        %2273 = vmatprep.subr.mxu0 0.0
        %2274 = vmatpush1.msra.mxu0 %v2240
        %2275 = vmatprep.subr.mxu0 0.0
        %2276 = vmatpush1.msra.mxu0 %v2241
        %2277 = vmatprep.subr.mxu0 0.0
        %2278 = vmatpush1.msra.mxu0 %v2242
        %2279 = vmatprep.subr.mxu0 0.0
        %2280 = vmatpush1.msra.mxu0 %v2243
        %2281 = vmatprep.subr.mxu0 0.0
        %2282 = vmatpush1.msra.mxu0 %v2244
        %2283 = vmatprep.subr.mxu0 0.0
        %2284 = vmatpush1.msra.mxu0 %v2245
        %2285 = vmatprep.subr.mxu0 0.0
        %2286 = vmatpush1.msra.mxu0 0.0
        %2287 = vmatprep.subr.mxu0 0.0
        %2288 = vmatpush1.msra.mxu0 0.0
        %2289 = vmatprep.subr.mxu0 0.0
        %2290 = vmatpush1.msra.mxu0 0.0
        %2291 = vmatprep.subr.mxu0 0.0
        %2292 = vmatpush1.msra.mxu0 0.0
        %2293 = vmatprep.subr.mxu0 0.0
        %2294 = vmatpush1.msra.mxu0 0.0
        %2295 = vmatprep.subr.mxu0 0.0
        %2296 = vmatpush1.msra.mxu0 0.0
        %2297 = vmatprep.subr.mxu0 0.0
        %2298 = vmatpush1.msra.mxu0 0.0
        %2299 = vmatprep.subr.mxu0 0.0
        %2300 = vmatpush1.msra.mxu0 0.0
        %2301 = vmatprep.subr.mxu0 0.0
        %2302 = vmatpush1.msra.mxu0 0.0
        %2303 = vmatprep.subr.mxu0 0.0
        %2304 = vmatpush1.msra.mxu0 0.0
        %2305 = vmatprep.subr.mxu0 0.0
        %2306 = vmatpush1.msra.mxu0 0.0
        %2307 = vmatprep.subr.mxu0 0.0
        %2308 = vmatpush1.msra.mxu0 0.0
        %2309 = vmatprep.subr.mxu0 0.0
        %2310 = vmatpush1.msra.mxu0 0.0
        %2311 = vmatprep.subr.mxu0 0.0
        %2312 = vmatpush1.msra.mxu0 0.0
        %2313 = vmatprep.subr.mxu0 0.0
        %2314 = vmatpush1.msra.mxu0 0.0
        %2315 = vmatprep.subr.mxu0 0.0
        %2316 = vmatpush1.msra.mxu0 0.0
        %2317 = vmatprep.mubr.f32.mxu0 0.0
        %2318 = vmatmul.mubr.f32.gmra.mrb[0].mxu0 %v2248
        %v2319 = vpop.f32.mrb[0].mxu0
        %v2320 = vadd.f32 0.0, %v2319
        %v2321 = vpop.f32.mrb[0].mxu0
        %2322 = vmatprep.mubr.f32.mxu0 0.0
        %2323 = vmatmul.mubr.f32.gmra.mrb[0].mxu0 %v2250
        %v2324 = vpop.f32.mrb[0].mxu0
        %v2325 = vadd.f32 0.0, %v2324
        %v2326 = vpop.f32.mrb[0].mxu0
        %2327 = vdwg.mxu0
        %v2328 = vadd.f32 %v2227, %v2320
        %v2329 = vadd.f32 %v2228, %v2325
        %s2330 = scalar_lea.vmem [#allocation7], 1024
        %v2331 = vld [vmem:[%s2330] sm:$0xff]
        %v2332 = vld [vmem:[%s2330 + $0x8] sm:$0xff]
        %v2333 = vld [vmem:[%s2330 + $0x10] sm:$0xff]
        %v2334 = vld [vmem:[%s2330 + $0x18] sm:$0xff]
        %v2335 = vld [vmem:[%s2330 + $0x20] sm:$0xff]
        %v2336 = vld [vmem:[%s2330 + $0x28] sm:$0xff]
        %v2337 = vld [vmem:[%s2330 + $0x30] sm:$0xff]
        %v2338 = vld [vmem:[%s2330 + $0x38] sm:$0xff]
        %v2339 = vld [vmem:[%s2330 + $0x40] sm:$0xff]
        %v2340 = vld [vmem:[%s2330 + $0x48] sm:$0xff]
        %v2341 = vld [vmem:[%s2330 + $0x50] sm:$0xff]
        %v2342 = vld [vmem:[%s2330 + $0x58] sm:$0xff]
        %v2343 = vld [vmem:[%s2330 + $0x60] sm:$0xff]
        %v2344 = vld [vmem:[%s2330 + $0x68] sm:$0xff]
        %v2345 = vld [vmem:[%s2330 + $0x70] sm:$0xff]
        %v2346 = vld [vmem:[%s2330 + $0x78] sm:$0xff]
        %v2347 = vrot.slane %v1528, 2
        %v2348 = vrot.slane %v1529, 2
        %v2349 = vsel %vm1289, %v2347, %v2348
        %v2350 = vrot.slane %v1530, 2
        %v2351 = vsel %vm1289, %v2348, %v2350
        %2354 = vmatprep.subr.mxu0 0.0
        %2355 = vmatpush1.msra.mxu0 %v2331
        %2356 = vmatprep.subr.mxu0 0.0
        %2357 = vmatpush1.msra.mxu0 %v2332
        %2358 = vmatprep.subr.mxu0 0.0
        %2359 = vmatpush1.msra.mxu0 %v2333
        %2360 = vmatprep.subr.mxu0 0.0
        %2361 = vmatpush1.msra.mxu0 %v2334
        %2362 = vmatprep.subr.mxu0 0.0
        %2363 = vmatpush1.msra.mxu0 %v2335
        %2364 = vmatprep.subr.mxu0 0.0
        %2365 = vmatpush1.msra.mxu0 %v2336
        %2366 = vmatprep.subr.mxu0 0.0
        %2367 = vmatpush1.msra.mxu0 %v2337
        %2368 = vmatprep.subr.mxu0 0.0
        %2369 = vmatpush1.msra.mxu0 %v2338
        %2370 = vmatprep.subr.mxu0 0.0
        %2371 = vmatpush1.msra.mxu0 %v2339
        %2372 = vmatprep.subr.mxu0 0.0
        %2373 = vmatpush1.msra.mxu0 %v2340
        %2374 = vmatprep.subr.mxu0 0.0
        %2375 = vmatpush1.msra.mxu0 %v2341
        %2376 = vmatprep.subr.mxu0 0.0
        %2377 = vmatpush1.msra.mxu0 %v2342
        %2378 = vmatprep.subr.mxu0 0.0
        %2379 = vmatpush1.msra.mxu0 %v2343
        %2380 = vmatprep.subr.mxu0 0.0
        %2381 = vmatpush1.msra.mxu0 %v2344
        %2382 = vmatprep.subr.mxu0 0.0
        %2383 = vmatpush1.msra.mxu0 %v2345
        %2384 = vmatprep.subr.mxu0 0.0
        %2385 = vmatpush1.msra.mxu0 %v2346
        %2386 = vmatprep.subr.mxu0 0.0
        %2387 = vmatpush1.msra.mxu0 0.0
        %2388 = vmatprep.subr.mxu0 0.0
        %2389 = vmatpush1.msra.mxu0 0.0
        %2390 = vmatprep.subr.mxu0 0.0
        %2391 = vmatpush1.msra.mxu0 0.0
        %2392 = vmatprep.subr.mxu0 0.0
        %2393 = vmatpush1.msra.mxu0 0.0
        %2394 = vmatprep.subr.mxu0 0.0
        %2395 = vmatpush1.msra.mxu0 0.0
        %2396 = vmatprep.subr.mxu0 0.0
        %2397 = vmatpush1.msra.mxu0 0.0
        %2398 = vmatprep.subr.mxu0 0.0
        %2399 = vmatpush1.msra.mxu0 0.0
        %2400 = vmatprep.subr.mxu0 0.0
        %2401 = vmatpush1.msra.mxu0 0.0
        %2402 = vmatprep.subr.mxu0 0.0
        %2403 = vmatpush1.msra.mxu0 0.0
        %2404 = vmatprep.subr.mxu0 0.0
        %2405 = vmatpush1.msra.mxu0 0.0
        %2406 = vmatprep.subr.mxu0 0.0
        %2407 = vmatpush1.msra.mxu0 0.0
        %2408 = vmatprep.subr.mxu0 0.0
        %2409 = vmatpush1.msra.mxu0 0.0
        %2410 = vmatprep.subr.mxu0 0.0
        %2411 = vmatpush1.msra.mxu0 0.0
        %2412 = vmatprep.subr.mxu0 0.0
        %2413 = vmatpush1.msra.mxu0 0.0
        %2414 = vmatprep.subr.mxu0 0.0
        %2415 = vmatpush1.msra.mxu0 0.0
        %2416 = vmatprep.subr.mxu0 0.0
        %2417 = vmatpush1.msra.mxu0 0.0
        %2418 = vmatprep.mubr.f32.mxu0 0.0
        %2419 = vmatmul.mubr.f32.gmra.mrb[0].mxu0 %v2349
        %v2420 = vpop.f32.mrb[0].mxu0
        %v2421 = vadd.f32 0.0, %v2420
        %v2422 = vpop.f32.mrb[0].mxu0
        %2423 = vmatprep.mubr.f32.mxu0 0.0
        %2424 = vmatmul.mubr.f32.gmra.mrb[0].mxu0 %v2351
        %v2425 = vpop.f32.mrb[0].mxu0
        %v2426 = vadd.f32 0.0, %v2425
        %v2427 = vpop.f32.mrb[0].mxu0
        %2428 = vdwg.mxu0
        %v2429 = vadd.f32 %v2328, %v2421
        %v2430 = vadd.f32 %v2329, %v2426
        %v2431 = vld [vmem:[#allocation9] sm:$0xff]
        %v2432 = vld [vmem:[#allocation9 + $0x8] sm:$0xff]
        %v2433 = vld [vmem:[#allocation9 + $0x10] sm:$0xff]
        %v2434 = vld [vmem:[#allocation9 + $0x18] sm:$0xff]
        %v2435 = vld [vmem:[#allocation9 + $0x20] sm:$0xff]
        %v2436 = vld [vmem:[#allocation9 + $0x28] sm:$0xff]
        %v2437 = vld [vmem:[#allocation9 + $0x30] sm:$0xff]
        %v2438 = vld [vmem:[#allocation9 + $0x38] sm:$0xff]
        %v2439 = vld [vmem:[#allocation9 + $0x40] sm:$0xff]
        %v2440 = vld [vmem:[#allocation9 + $0x48] sm:$0xff]
        %v2441 = vld [vmem:[#allocation9 + $0x50] sm:$0xff]
        %v2442 = vld [vmem:[#allocation9 + $0x58] sm:$0xff]
        %v2443 = vld [vmem:[#allocation9 + $0x60] sm:$0xff]
        %v2444 = vld [vmem:[#allocation9 + $0x68] sm:$0xff]
        %v2445 = vld [vmem:[#allocation9 + $0x70] sm:$0xff]
        %v2446 = vld [vmem:[#allocation9 + $0x78] sm:$0xff]
        %s2447 = scalar_lea.vmem [#allocation9], 128
        %v2448 = vld [vmem:[%s2447] sm:$0xff]
        %v2449 = vld [vmem:[%s2447 + $0x8] sm:$0xff]
        %v2450 = vld [vmem:[%s2447 + $0x10] sm:$0xff]
        %v2451 = vld [vmem:[%s2447 + $0x18] sm:$0xff]
        %v2452 = vld [vmem:[%s2447 + $0x20] sm:$0xff]
        %v2453 = vld [vmem:[%s2447 + $0x28] sm:$0xff]
        %v2454 = vld [vmem:[%s2447 + $0x30] sm:$0xff]
        %v2455 = vld [vmem:[%s2447 + $0x38] sm:$0xff]
        %v2456 = vld [vmem:[%s2447 + $0x40] sm:$0xff]
        %v2457 = vld [vmem:[%s2447 + $0x48] sm:$0xff]
        %v2458 = vld [vmem:[%s2447 + $0x50] sm:$0xff]
        %v2459 = vld [vmem:[%s2447 + $0x58] sm:$0xff]
        %v2460 = vld [vmem:[%s2447 + $0x60] sm:$0xff]
        %v2461 = vld [vmem:[%s2447 + $0x68] sm:$0xff]
        %v2462 = vld [vmem:[%s2447 + $0x70] sm:$0xff]
        %v2463 = vld [vmem:[%s2447 + $0x78] sm:$0xff]
        %2464 = vmatprep.subr.mxu0 0.0
        %2465 = vmatpush1.msra.mxu0 %v2448
        %2466 = vmatprep.subr.mxu0 0.0
        %2467 = vmatpush1.msra.mxu0 %v2449
        %2468 = vmatprep.subr.mxu0 0.0
        %2469 = vmatpush1.msra.mxu0 %v2450
        %2470 = vmatprep.subr.mxu0 0.0
        %2471 = vmatpush1.msra.mxu0 %v2451
        %2472 = vmatprep.subr.mxu0 0.0
        %2473 = vmatpush1.msra.mxu0 %v2452
        %2474 = vmatprep.subr.mxu0 0.0
        %2475 = vmatpush1.msra.mxu0 %v2453
        %2476 = vmatprep.subr.mxu0 0.0
        %2477 = vmatpush1.msra.mxu0 %v2454
        %2478 = vmatprep.subr.mxu0 0.0
        %2479 = vmatpush1.msra.mxu0 %v2455
        %2480 = vmatprep.subr.mxu0 0.0
        %2481 = vmatpush1.msra.mxu0 %v2456
        %2482 = vmatprep.subr.mxu0 0.0
        %2483 = vmatpush1.msra.mxu0 %v2457
        %2484 = vmatprep.subr.mxu0 0.0
        %2485 = vmatpush1.msra.mxu0 %v2458
        %2486 = vmatprep.subr.mxu0 0.0
        %2487 = vmatpush1.msra.mxu0 %v2459
        %2488 = vmatprep.subr.mxu0 0.0
        %2489 = vmatpush1.msra.mxu0 %v2460
        %2490 = vmatprep.subr.mxu0 0.0
        %2491 = vmatpush1.msra.mxu0 %v2461
        %2492 = vmatprep.subr.mxu0 0.0
        %2493 = vmatpush1.msra.mxu0 %v2462
        %2494 = vmatprep.subr.mxu0 0.0
        %2495 = vmatpush1.msra.mxu0 %v2463
        %2496 = vmatprep.subr.mxu0 0.0
        %2497 = vmatpush1.msra.mxu0 0.0
        %2498 = vmatprep.subr.mxu0 0.0
        %2499 = vmatpush1.msra.mxu0 0.0
        %2500 = vmatprep.subr.mxu0 0.0
        %2501 = vmatpush1.msra.mxu0 0.0
        %2502 = vmatprep.subr.mxu0 0.0
        %2503 = vmatpush1.msra.mxu0 0.0
        %2504 = vmatprep.subr.mxu0 0.0
        %2505 = vmatpush1.msra.mxu0 0.0
        %2506 = vmatprep.subr.mxu0 0.0
        %2507 = vmatpush1.msra.mxu0 0.0
        %2508 = vmatprep.subr.mxu0 0.0
        %2509 = vmatpush1.msra.mxu0 0.0
        %2510 = vmatprep.subr.mxu0 0.0
        %2511 = vmatpush1.msra.mxu0 0.0
        %2512 = vmatprep.subr.mxu0 0.0
        %2513 = vmatpush1.msra.mxu0 0.0
        %2514 = vmatprep.subr.mxu0 0.0
        %2515 = vmatpush1.msra.mxu0 0.0
        %2516 = vmatprep.subr.mxu0 0.0
        %2517 = vmatpush1.msra.mxu0 0.0
        %2518 = vmatprep.subr.mxu0 0.0
        %2519 = vmatpush1.msra.mxu0 0.0
        %2520 = vmatprep.subr.mxu0 0.0
        %2521 = vmatpush1.msra.mxu0 0.0
        %2522 = vmatprep.subr.mxu0 0.0
        %2523 = vmatpush1.msra.mxu0 0.0
        %2524 = vmatprep.subr.mxu0 0.0
        %2525 = vmatpush1.msra.mxu0 0.0
        %2526 = vmatprep.subr.mxu0 0.0
        %2527 = vmatpush1.msra.mxu0 0.0
        %2528 = vmatprep.mubr.f32.mxu0 0.0
        %2529 = vmatmul.mubr.f32.gmra.mrb[0].mxu0 %v1497
        %v2530 = vpop.f32.mrb[0].mxu0
        %v2531 = vadd.f32 0.0, %v2530
        %v2532 = vpop.f32.mrb[0].mxu0
        %2533 = vmatprep.mubr.f32.mxu0 0.0
        %2534 = vmatmul.mubr.f32.gmra.mrb[0].mxu0 %v1498
        %v2535 = vpop.f32.mrb[0].mxu0
        %v2536 = vadd.f32 0.0, %v2535
        %v2537 = vpop.f32.mrb[0].mxu0
        %2538 = vdwg.mxu0
        %2539 = vmatprep.subr.mxu0 0.0
        %2540 = vmatpush1.msra.mxu0 %v2431
        %2541 = vmatprep.subr.mxu0 0.0
        %2542 = vmatpush1.msra.mxu0 %v2432
        %2543 = vmatprep.subr.mxu0 0.0
        %2544 = vmatpush1.msra.mxu0 %v2433
        %2545 = vmatprep.subr.mxu0 0.0
        %2546 = vmatpush1.msra.mxu0 %v2434
        %2547 = vmatprep.subr.mxu0 0.0
        %2548 = vmatpush1.msra.mxu0 %v2435
        %2549 = vmatprep.subr.mxu0 0.0
        %2550 = vmatpush1.msra.mxu0 %v2436
        %2551 = vmatprep.subr.mxu0 0.0
        %2552 = vmatpush1.msra.mxu0 %v2437
        %2553 = vmatprep.subr.mxu0 0.0
        %2554 = vmatpush1.msra.mxu0 %v2438
        %2555 = vmatprep.subr.mxu0 0.0
        %2556 = vmatpush1.msra.mxu0 %v2439
        %2557 = vmatprep.subr.mxu0 0.0
        %2558 = vmatpush1.msra.mxu0 %v2440
        %2559 = vmatprep.subr.mxu0 0.0
        %2560 = vmatpush1.msra.mxu0 %v2441
        %2561 = vmatprep.subr.mxu0 0.0
        %2562 = vmatpush1.msra.mxu0 %v2442
        %2563 = vmatprep.subr.mxu0 0.0
        %2564 = vmatpush1.msra.mxu0 %v2443
        %2565 = vmatprep.subr.mxu0 0.0
        %2566 = vmatpush1.msra.mxu0 %v2444
        %2567 = vmatprep.subr.mxu0 0.0
        %2568 = vmatpush1.msra.mxu0 %v2445
        %2569 = vmatprep.subr.mxu0 0.0
        %2570 = vmatpush1.msra.mxu0 %v2446
        %2571 = vmatprep.subr.mxu0 0.0
        %2572 = vmatpush1.msra.mxu0 0.0
        %2573 = vmatprep.subr.mxu0 0.0
        %2574 = vmatpush1.msra.mxu0 0.0
        %2575 = vmatprep.subr.mxu0 0.0
        %2576 = vmatpush1.msra.mxu0 0.0
        %2577 = vmatprep.subr.mxu0 0.0
        %2578 = vmatpush1.msra.mxu0 0.0
        %2579 = vmatprep.subr.mxu0 0.0
        %2580 = vmatpush1.msra.mxu0 0.0
        %2581 = vmatprep.subr.mxu0 0.0
        %2582 = vmatpush1.msra.mxu0 0.0
        %2583 = vmatprep.subr.mxu0 0.0
        %2584 = vmatpush1.msra.mxu0 0.0
        %2585 = vmatprep.subr.mxu0 0.0
        %2586 = vmatpush1.msra.mxu0 0.0
        %2587 = vmatprep.subr.mxu0 0.0
        %2588 = vmatpush1.msra.mxu0 0.0
        %2589 = vmatprep.subr.mxu0 0.0
        %2590 = vmatpush1.msra.mxu0 0.0
        %2591 = vmatprep.subr.mxu0 0.0
        %2592 = vmatpush1.msra.mxu0 0.0
        %2593 = vmatprep.subr.mxu0 0.0
        %2594 = vmatpush1.msra.mxu0 0.0
        %2595 = vmatprep.subr.mxu0 0.0
        %2596 = vmatpush1.msra.mxu0 0.0
        %2597 = vmatprep.subr.mxu0 0.0
        %2598 = vmatpush1.msra.mxu0 0.0
        %2599 = vmatprep.subr.mxu0 0.0
        %2600 = vmatpush1.msra.mxu0 0.0
        %2601 = vmatprep.subr.mxu0 0.0
        %2602 = vmatpush1.msra.mxu0 0.0
        %2603 = vmatprep.mubr.f32.mxu0 0.0
        %2604 = vmatmul.mubr.f32.gmra.mrb[0].mxu0 %v474
        %v2605 = vpop.f32.mrb[0].mxu0
        %v2606 = vadd.f32 %v2531, %v2605
        %v2607 = vpop.f32.mrb[0].mxu0
        %2608 = vmatprep.mubr.f32.mxu0 0.0
        %2609 = vmatmul.mubr.f32.gmra.mrb[0].mxu0 %v475
        %v2610 = vpop.f32.mrb[0].mxu0
        %v2611 = vadd.f32 %v2536, %v2610
        %v2612 = vpop.f32.mrb[0].mxu0
        %2613 = vdwg.mxu0
        %s2614 = scalar_lea.vmem [#allocation9], 256
        %v2615 = vld [vmem:[%s2614] sm:$0xff]
        %v2616 = vld [vmem:[%s2614 + $0x8] sm:$0xff]
        %v2617 = vld [vmem:[%s2614 + $0x10] sm:$0xff]
        %v2618 = vld [vmem:[%s2614 + $0x18] sm:$0xff]
        %v2619 = vld [vmem:[%s2614 + $0x20] sm:$0xff]
        %v2620 = vld [vmem:[%s2614 + $0x28] sm:$0xff]
        %v2621 = vld [vmem:[%s2614 + $0x30] sm:$0xff]
        %v2622 = vld [vmem:[%s2614 + $0x38] sm:$0xff]
        %v2623 = vld [vmem:[%s2614 + $0x40] sm:$0xff]
        %v2624 = vld [vmem:[%s2614 + $0x48] sm:$0xff]
        %v2625 = vld [vmem:[%s2614 + $0x50] sm:$0xff]
        %v2626 = vld [vmem:[%s2614 + $0x58] sm:$0xff]
        %v2627 = vld [vmem:[%s2614 + $0x60] sm:$0xff]
        %v2628 = vld [vmem:[%s2614 + $0x68] sm:$0xff]
        %v2629 = vld [vmem:[%s2614 + $0x70] sm:$0xff]
        %v2630 = vld [vmem:[%s2614 + $0x78] sm:$0xff]
        %2631 = vmatprep.subr.mxu0 0.0
        %2632 = vmatpush1.msra.mxu0 %v2615
        %2633 = vmatprep.subr.mxu0 0.0
        %2634 = vmatpush1.msra.mxu0 %v2616
        %2635 = vmatprep.subr.mxu0 0.0
        %2636 = vmatpush1.msra.mxu0 %v2617
        %2637 = vmatprep.subr.mxu0 0.0
        %2638 = vmatpush1.msra.mxu0 %v2618
        %2639 = vmatprep.subr.mxu0 0.0
        %2640 = vmatpush1.msra.mxu0 %v2619
        %2641 = vmatprep.subr.mxu0 0.0
        %2642 = vmatpush1.msra.mxu0 %v2620
        %2643 = vmatprep.subr.mxu0 0.0
        %2644 = vmatpush1.msra.mxu0 %v2621
        %2645 = vmatprep.subr.mxu0 0.0
        %2646 = vmatpush1.msra.mxu0 %v2622
        %2647 = vmatprep.subr.mxu0 0.0
        %2648 = vmatpush1.msra.mxu0 %v2623
        %2649 = vmatprep.subr.mxu0 0.0
        %2650 = vmatpush1.msra.mxu0 %v2624
        %2651 = vmatprep.subr.mxu0 0.0
        %2652 = vmatpush1.msra.mxu0 %v2625
        %2653 = vmatprep.subr.mxu0 0.0
        %2654 = vmatpush1.msra.mxu0 %v2626
        %2655 = vmatprep.subr.mxu0 0.0
        %2656 = vmatpush1.msra.mxu0 %v2627
        %2657 = vmatprep.subr.mxu0 0.0
        %2658 = vmatpush1.msra.mxu0 %v2628
        %2659 = vmatprep.subr.mxu0 0.0
        %2660 = vmatpush1.msra.mxu0 %v2629
        %2661 = vmatprep.subr.mxu0 0.0
        %2662 = vmatpush1.msra.mxu0 %v2630
        %2663 = vmatprep.subr.mxu0 0.0
        %2664 = vmatpush1.msra.mxu0 0.0
        %2665 = vmatprep.subr.mxu0 0.0
        %2666 = vmatpush1.msra.mxu0 0.0
        %2667 = vmatprep.subr.mxu0 0.0
        %2668 = vmatpush1.msra.mxu0 0.0
        %2669 = vmatprep.subr.mxu0 0.0
        %2670 = vmatpush1.msra.mxu0 0.0
        %2671 = vmatprep.subr.mxu0 0.0
        %2672 = vmatpush1.msra.mxu0 0.0
        %2673 = vmatprep.subr.mxu0 0.0
        %2674 = vmatpush1.msra.mxu0 0.0
        %2675 = vmatprep.subr.mxu0 0.0
        %2676 = vmatpush1.msra.mxu0 0.0
        %2677 = vmatprep.subr.mxu0 0.0
        %2678 = vmatpush1.msra.mxu0 0.0
        %2679 = vmatprep.subr.mxu0 0.0
        %2680 = vmatpush1.msra.mxu0 0.0
        %2681 = vmatprep.subr.mxu0 0.0
        %2682 = vmatpush1.msra.mxu0 0.0
        %2683 = vmatprep.subr.mxu0 0.0
        %2684 = vmatpush1.msra.mxu0 0.0
        %2685 = vmatprep.subr.mxu0 0.0
        %2686 = vmatpush1.msra.mxu0 0.0
        %2687 = vmatprep.subr.mxu0 0.0
        %2688 = vmatpush1.msra.mxu0 0.0
        %2689 = vmatprep.subr.mxu0 0.0
        %2690 = vmatpush1.msra.mxu0 0.0
        %2691 = vmatprep.subr.mxu0 0.0
        %2692 = vmatpush1.msra.mxu0 0.0
        %2693 = vmatprep.subr.mxu0 0.0
        %2694 = vmatpush1.msra.mxu0 0.0
        %2695 = vmatprep.mubr.f32.mxu0 0.0
        %2696 = vmatmul.mubr.f32.gmra.mrb[0].mxu0 %v2429
        %v2697 = vpop.f32.mrb[0].mxu0
        %v2698 = vadd.f32 0.0, %v2697
        %v2699 = vpop.f32.mrb[0].mxu0
        %2700 = vmatprep.mubr.f32.mxu0 0.0
        %2701 = vmatmul.mubr.f32.gmra.mrb[0].mxu0 %v2430
        %v2702 = vpop.f32.mrb[0].mxu0
        %v2703 = vadd.f32 0.0, %v2702
        %v2704 = vpop.f32.mrb[0].mxu0
        %2705 = vdwg.mxu0
        %v2706 = vadd.f32 %v2606, %v2698
        %v2707 = vadd.f32 %v2611, %v2703
        %v2708 = vld [vmem:[%s9] sm:$0x1]
        %v2710 = vlaneseq
        %v2711 = vshrl.u32 %v2710, 7
        %v2712 = vsub.s32 0, %v2711
        %v2713 = vrot.slane %v2708, %v2712
        %v2715 = vadd.f32 %v2706, %v2713
        %v2716 = vadd.f32 %v2707, %v2713
        %v2717 = vmax.f32 %v2715, 0.0
        %v2718 = vmax.f32 %v2716, 0.0
        %2719 = vst [vmem:[#allocation2 + $0x1] sm:$0xff] %v2717
        %2720 = vst [vmem:[#allocation2 + $0x9] sm:$0xff] %v2718
        %v2721 = vld [vmem:[#allocation2] sm:$0xff]
        %v2722 = vld [vmem:[#allocation2 + $0x8] sm:$0xff]
        %v2723 = vld [vmem:[#allocation2 + $0x10] sm:$0x3]
        %2727 = vrot.lane.b32.xlu0 %v2721, 8
        %v2728 = vpop.permute.xlu0 %2727
        %2729 = vrot.lane.b32.xlu0 %v2722, 8
        %v2730 = vpop.permute.xlu0 %2729
        %2731 = vrot.lane.b32.xlu0 %v2723, 8
        %v2732 = vpop.permute.xlu0 %2731
        %v2736 = vsel %vm599, 0.0, %v2728
        %v2737 = vsel %vm599, 0.0, %v2730
        %v2738 = vsel %vm599, 0.0, %v2732
        %2739 = vrot.lane.b32.xlu0 %v2721, 120
        %v2740 = vpop.permute.xlu0 %2739
        %2741 = vrot.lane.b32.xlu0 %v2722, 120
        %v2742 = vpop.permute.xlu0 %2741
        %2743 = vrot.lane.b32.xlu0 %v2723, 120
        %v2744 = vpop.permute.xlu0 %2743
        %v2748 = vsel %vm612, %v2740, 0.0
        %v2749 = vsel %vm612, %v2742, 0.0
        %v2750 = vsel %vm612, %v2744, 0.0
        %v2751 = vld [vmem:[%s11] sm:$0x1]
        %v2753 = vlaneseq
        %v2754 = vshrl.u32 %v2753, 7
        %v2755 = vsub.s32 0, %v2754
        %v2756 = vrot.slane %v2751, %v2755
        %v2758 = vld [vmem:[#allocation10] sm:$0xff]
        %v2759 = vld [vmem:[#allocation10 + $0x8] sm:$0xff]
        %v2760 = vld [vmem:[#allocation10 + $0x10] sm:$0xff]
        %v2761 = vld [vmem:[#allocation10 + $0x18] sm:$0xff]
        %v2762 = vld [vmem:[#allocation10 + $0x20] sm:$0xff]
        %v2763 = vld [vmem:[#allocation10 + $0x28] sm:$0xff]
        %v2764 = vld [vmem:[#allocation10 + $0x30] sm:$0xff]
        %v2765 = vld [vmem:[#allocation10 + $0x38] sm:$0xff]
        %v2766 = vld [vmem:[#allocation10 + $0x40] sm:$0xff]
        %v2767 = vld [vmem:[#allocation10 + $0x48] sm:$0xff]
        %v2768 = vld [vmem:[#allocation10 + $0x50] sm:$0xff]
        %v2769 = vld [vmem:[#allocation10 + $0x58] sm:$0xff]
        %v2770 = vld [vmem:[#allocation10 + $0x60] sm:$0xff]
        %v2771 = vld [vmem:[#allocation10 + $0x68] sm:$0xff]
        %v2772 = vld [vmem:[#allocation10 + $0x70] sm:$0xff]
        %v2773 = vld [vmem:[#allocation10 + $0x78] sm:$0xff]
        %2774 = vmatprep.subr.mxu0 0.0
        %2775 = vmatpush1.msra.mxu0 %v2758
        %2776 = vmatprep.subr.mxu0 0.0
        %2777 = vmatpush1.msra.mxu0 %v2759
        %2778 = vmatprep.subr.mxu0 0.0
        %2779 = vmatpush1.msra.mxu0 %v2760
        %2780 = vmatprep.subr.mxu0 0.0
        %2781 = vmatpush1.msra.mxu0 %v2761
        %2782 = vmatprep.subr.mxu0 0.0
        %2783 = vmatpush1.msra.mxu0 %v2762
        %2784 = vmatprep.subr.mxu0 0.0
        %2785 = vmatpush1.msra.mxu0 %v2763
        %2786 = vmatprep.subr.mxu0 0.0
        %2787 = vmatpush1.msra.mxu0 %v2764
        %2788 = vmatprep.subr.mxu0 0.0
        %2789 = vmatpush1.msra.mxu0 %v2765
        %2790 = vmatprep.subr.mxu0 0.0
        %2791 = vmatpush1.msra.mxu0 %v2766
        %2792 = vmatprep.subr.mxu0 0.0
        %2793 = vmatpush1.msra.mxu0 %v2767
        %2794 = vmatprep.subr.mxu0 0.0
        %2795 = vmatpush1.msra.mxu0 %v2768
        %2796 = vmatprep.subr.mxu0 0.0
        %2797 = vmatpush1.msra.mxu0 %v2769
        %2798 = vmatprep.subr.mxu0 0.0
        %2799 = vmatpush1.msra.mxu0 %v2770
        %2800 = vmatprep.subr.mxu0 0.0
        %2801 = vmatpush1.msra.mxu0 %v2771
        %2802 = vmatprep.subr.mxu0 0.0
        %2803 = vmatpush1.msra.mxu0 %v2772
        %2804 = vmatprep.subr.mxu0 0.0
        %2805 = vmatpush1.msra.mxu0 %v2773
        %2806 = vmatprep.subr.mxu0 0.0
        %2807 = vmatpush1.msra.mxu0 0.0
        %2808 = vmatprep.subr.mxu0 0.0
        %2809 = vmatpush1.msra.mxu0 0.0
        %2810 = vmatprep.subr.mxu0 0.0
        %2811 = vmatpush1.msra.mxu0 0.0
        %2812 = vmatprep.subr.mxu0 0.0
        %2813 = vmatpush1.msra.mxu0 0.0
        %2814 = vmatprep.subr.mxu0 0.0
        %2815 = vmatpush1.msra.mxu0 0.0
        %2816 = vmatprep.subr.mxu0 0.0
        %2817 = vmatpush1.msra.mxu0 0.0
        %2818 = vmatprep.subr.mxu0 0.0
        %2819 = vmatpush1.msra.mxu0 0.0
        %2820 = vmatprep.subr.mxu0 0.0
        %2821 = vmatpush1.msra.mxu0 0.0
        %2822 = vmatprep.subr.mxu0 0.0
        %2823 = vmatpush1.msra.mxu0 0.0
        %2824 = vmatprep.subr.mxu0 0.0
        %2825 = vmatpush1.msra.mxu0 0.0
        %2826 = vmatprep.subr.mxu0 0.0
        %2827 = vmatpush1.msra.mxu0 0.0
        %2828 = vmatprep.subr.mxu0 0.0
        %2829 = vmatpush1.msra.mxu0 0.0
        %2830 = vmatprep.subr.mxu0 0.0
        %2831 = vmatpush1.msra.mxu0 0.0
        %2832 = vmatprep.subr.mxu0 0.0
        %2833 = vmatpush1.msra.mxu0 0.0
        %2834 = vmatprep.subr.mxu0 0.0
        %2835 = vmatpush1.msra.mxu0 0.0
        %2836 = vmatprep.subr.mxu0 0.0
        %2837 = vmatpush1.msra.mxu0 0.0
        %2838 = vmatprep.mubr.f32.mxu0 0.0
        %2839 = vmatmul.mubr.f32.gmra.mrb[0].mxu0 %v2736
        %v2840 = vpop.f32.mrb[0].mxu0
        %v2841 = vadd.f32 0.0, %v2840
        %v2842 = vpop.f32.mrb[0].mxu0
        %2843 = vmatprep.mubr.f32.mxu0 0.0
        %2844 = vmatmul.mubr.f32.gmra.mrb[0].mxu0 %v2737
        %v2845 = vpop.f32.mrb[0].mxu0
        %v2846 = vadd.f32 0.0, %v2845
        %v2847 = vpop.f32.mrb[0].mxu0
        %2848 = vdwg.mxu0
        %v2849 = vadd.f32 %v2756, %v2841
        %v2850 = vadd.f32 %v2756, %v2846
        %s2851 = scalar_lea.vmem [#allocation10], 128
        %v2852 = vld [vmem:[%s2851] sm:$0xff]
        %v2853 = vld [vmem:[%s2851 + $0x8] sm:$0xff]
        %v2854 = vld [vmem:[%s2851 + $0x10] sm:$0xff]
        %v2855 = vld [vmem:[%s2851 + $0x18] sm:$0xff]
        %v2856 = vld [vmem:[%s2851 + $0x20] sm:$0xff]
        %v2857 = vld [vmem:[%s2851 + $0x28] sm:$0xff]
        %v2858 = vld [vmem:[%s2851 + $0x30] sm:$0xff]
        %v2859 = vld [vmem:[%s2851 + $0x38] sm:$0xff]
        %v2860 = vld [vmem:[%s2851 + $0x40] sm:$0xff]
        %v2861 = vld [vmem:[%s2851 + $0x48] sm:$0xff]
        %v2862 = vld [vmem:[%s2851 + $0x50] sm:$0xff]
        %v2863 = vld [vmem:[%s2851 + $0x58] sm:$0xff]
        %v2864 = vld [vmem:[%s2851 + $0x60] sm:$0xff]
        %v2865 = vld [vmem:[%s2851 + $0x68] sm:$0xff]
        %v2866 = vld [vmem:[%s2851 + $0x70] sm:$0xff]
        %v2867 = vld [vmem:[%s2851 + $0x78] sm:$0xff]
        %2868 = vmatprep.subr.mxu0 0.0
        %2869 = vmatpush1.msra.mxu0 %v2852
        %2870 = vmatprep.subr.mxu0 0.0
        %2871 = vmatpush1.msra.mxu0 %v2853
        %2872 = vmatprep.subr.mxu0 0.0
        %2873 = vmatpush1.msra.mxu0 %v2854
        %2874 = vmatprep.subr.mxu0 0.0
        %2875 = vmatpush1.msra.mxu0 %v2855
        %2876 = vmatprep.subr.mxu0 0.0
        %2877 = vmatpush1.msra.mxu0 %v2856
        %2878 = vmatprep.subr.mxu0 0.0
        %2879 = vmatpush1.msra.mxu0 %v2857
        %2880 = vmatprep.subr.mxu0 0.0
        %2881 = vmatpush1.msra.mxu0 %v2858
        %2882 = vmatprep.subr.mxu0 0.0
        %2883 = vmatpush1.msra.mxu0 %v2859
        %2884 = vmatprep.subr.mxu0 0.0
        %2885 = vmatpush1.msra.mxu0 %v2860
        %2886 = vmatprep.subr.mxu0 0.0
        %2887 = vmatpush1.msra.mxu0 %v2861
        %2888 = vmatprep.subr.mxu0 0.0
        %2889 = vmatpush1.msra.mxu0 %v2862
        %2890 = vmatprep.subr.mxu0 0.0
        %2891 = vmatpush1.msra.mxu0 %v2863
        %2892 = vmatprep.subr.mxu0 0.0
        %2893 = vmatpush1.msra.mxu0 %v2864
        %2894 = vmatprep.subr.mxu0 0.0
        %2895 = vmatpush1.msra.mxu0 %v2865
        %2896 = vmatprep.subr.mxu0 0.0
        %2897 = vmatpush1.msra.mxu0 %v2866
        %2898 = vmatprep.subr.mxu0 0.0
        %2899 = vmatpush1.msra.mxu0 %v2867
        %2900 = vmatprep.subr.mxu0 0.0
        %2901 = vmatpush1.msra.mxu0 0.0
        %2902 = vmatprep.subr.mxu0 0.0
        %2903 = vmatpush1.msra.mxu0 0.0
        %2904 = vmatprep.subr.mxu0 0.0
        %2905 = vmatpush1.msra.mxu0 0.0
        %2906 = vmatprep.subr.mxu0 0.0
        %2907 = vmatpush1.msra.mxu0 0.0
        %2908 = vmatprep.subr.mxu0 0.0
        %2909 = vmatpush1.msra.mxu0 0.0
        %2910 = vmatprep.subr.mxu0 0.0
        %2911 = vmatpush1.msra.mxu0 0.0
        %2912 = vmatprep.subr.mxu0 0.0
        %2913 = vmatpush1.msra.mxu0 0.0
        %2914 = vmatprep.subr.mxu0 0.0
        %2915 = vmatpush1.msra.mxu0 0.0
        %2916 = vmatprep.subr.mxu0 0.0
        %2917 = vmatpush1.msra.mxu0 0.0
        %2918 = vmatprep.subr.mxu0 0.0
        %2919 = vmatpush1.msra.mxu0 0.0
        %2920 = vmatprep.subr.mxu0 0.0
        %2921 = vmatpush1.msra.mxu0 0.0
        %2922 = vmatprep.subr.mxu0 0.0
        %2923 = vmatpush1.msra.mxu0 0.0
        %2924 = vmatprep.subr.mxu0 0.0
        %2925 = vmatpush1.msra.mxu0 0.0
        %2926 = vmatprep.subr.mxu0 0.0
        %2927 = vmatpush1.msra.mxu0 0.0
        %2928 = vmatprep.subr.mxu0 0.0
        %2929 = vmatpush1.msra.mxu0 0.0
        %2930 = vmatprep.subr.mxu0 0.0
        %2931 = vmatpush1.msra.mxu0 0.0
        %2932 = vmatprep.mubr.f32.mxu0 0.0
        %2933 = vmatmul.mubr.f32.gmra.mrb[0].mxu0 %v2721
        %v2934 = vpop.f32.mrb[0].mxu0
        %v2935 = vadd.f32 0.0, %v2934
        %v2936 = vpop.f32.mrb[0].mxu0
        %2937 = vmatprep.mubr.f32.mxu0 0.0
        %2938 = vmatmul.mubr.f32.gmra.mrb[0].mxu0 %v2722
        %v2939 = vpop.f32.mrb[0].mxu0
        %v2940 = vadd.f32 0.0, %v2939
        %v2941 = vpop.f32.mrb[0].mxu0
        %2942 = vdwg.mxu0
        %v2943 = vadd.f32 %v2849, %v2935
        %v2944 = vadd.f32 %v2850, %v2940
        %s2945 = scalar_lea.vmem [#allocation10], 256
        %v2946 = vld [vmem:[%s2945] sm:$0xff]
        %v2947 = vld [vmem:[%s2945 + $0x8] sm:$0xff]
        %v2948 = vld [vmem:[%s2945 + $0x10] sm:$0xff]
        %v2949 = vld [vmem:[%s2945 + $0x18] sm:$0xff]
        %v2950 = vld [vmem:[%s2945 + $0x20] sm:$0xff]
        %v2951 = vld [vmem:[%s2945 + $0x28] sm:$0xff]
        %v2952 = vld [vmem:[%s2945 + $0x30] sm:$0xff]
        %v2953 = vld [vmem:[%s2945 + $0x38] sm:$0xff]
        %v2954 = vld [vmem:[%s2945 + $0x40] sm:$0xff]
        %v2955 = vld [vmem:[%s2945 + $0x48] sm:$0xff]
        %v2956 = vld [vmem:[%s2945 + $0x50] sm:$0xff]
        %v2957 = vld [vmem:[%s2945 + $0x58] sm:$0xff]
        %v2958 = vld [vmem:[%s2945 + $0x60] sm:$0xff]
        %v2959 = vld [vmem:[%s2945 + $0x68] sm:$0xff]
        %v2960 = vld [vmem:[%s2945 + $0x70] sm:$0xff]
        %v2961 = vld [vmem:[%s2945 + $0x78] sm:$0xff]
        %2962 = vmatprep.subr.mxu0 0.0
        %2963 = vmatpush1.msra.mxu0 %v2946
        %2964 = vmatprep.subr.mxu0 0.0
        %2965 = vmatpush1.msra.mxu0 %v2947
        %2966 = vmatprep.subr.mxu0 0.0
        %2967 = vmatpush1.msra.mxu0 %v2948
        %2968 = vmatprep.subr.mxu0 0.0
        %2969 = vmatpush1.msra.mxu0 %v2949
        %2970 = vmatprep.subr.mxu0 0.0
        %2971 = vmatpush1.msra.mxu0 %v2950
        %2972 = vmatprep.subr.mxu0 0.0
        %2973 = vmatpush1.msra.mxu0 %v2951
        %2974 = vmatprep.subr.mxu0 0.0
        %2975 = vmatpush1.msra.mxu0 %v2952
        %2976 = vmatprep.subr.mxu0 0.0
        %2977 = vmatpush1.msra.mxu0 %v2953
        %2978 = vmatprep.subr.mxu0 0.0
        %2979 = vmatpush1.msra.mxu0 %v2954
        %2980 = vmatprep.subr.mxu0 0.0
        %2981 = vmatpush1.msra.mxu0 %v2955
        %2982 = vmatprep.subr.mxu0 0.0
        %2983 = vmatpush1.msra.mxu0 %v2956
        %2984 = vmatprep.subr.mxu0 0.0
        %2985 = vmatpush1.msra.mxu0 %v2957
        %2986 = vmatprep.subr.mxu0 0.0
        %2987 = vmatpush1.msra.mxu0 %v2958
        %2988 = vmatprep.subr.mxu0 0.0
        %2989 = vmatpush1.msra.mxu0 %v2959
        %2990 = vmatprep.subr.mxu0 0.0
        %2991 = vmatpush1.msra.mxu0 %v2960
        %2992 = vmatprep.subr.mxu0 0.0
        %2993 = vmatpush1.msra.mxu0 %v2961
        %2994 = vmatprep.subr.mxu0 0.0
        %2995 = vmatpush1.msra.mxu0 0.0
        %2996 = vmatprep.subr.mxu0 0.0
        %2997 = vmatpush1.msra.mxu0 0.0
        %2998 = vmatprep.subr.mxu0 0.0
        %2999 = vmatpush1.msra.mxu0 0.0
        %3000 = vmatprep.subr.mxu0 0.0
        %3001 = vmatpush1.msra.mxu0 0.0
        %3002 = vmatprep.subr.mxu0 0.0
        %3003 = vmatpush1.msra.mxu0 0.0
        %3004 = vmatprep.subr.mxu0 0.0
        %3005 = vmatpush1.msra.mxu0 0.0
        %3006 = vmatprep.subr.mxu0 0.0
        %3007 = vmatpush1.msra.mxu0 0.0
        %3008 = vmatprep.subr.mxu0 0.0
        %3009 = vmatpush1.msra.mxu0 0.0
        %3010 = vmatprep.subr.mxu0 0.0
        %3011 = vmatpush1.msra.mxu0 0.0
        %3012 = vmatprep.subr.mxu0 0.0
        %3013 = vmatpush1.msra.mxu0 0.0
        %3014 = vmatprep.subr.mxu0 0.0
        %3015 = vmatpush1.msra.mxu0 0.0
        %3016 = vmatprep.subr.mxu0 0.0
        %3017 = vmatpush1.msra.mxu0 0.0
        %3018 = vmatprep.subr.mxu0 0.0
        %3019 = vmatpush1.msra.mxu0 0.0
        %3020 = vmatprep.subr.mxu0 0.0
        %3021 = vmatpush1.msra.mxu0 0.0
        %3022 = vmatprep.subr.mxu0 0.0
        %3023 = vmatpush1.msra.mxu0 0.0
        %3024 = vmatprep.subr.mxu0 0.0
        %3025 = vmatpush1.msra.mxu0 0.0
        %3026 = vmatprep.mubr.f32.mxu0 0.0
        %3027 = vmatmul.mubr.f32.gmra.mrb[0].mxu0 %v2748
        %v3028 = vpop.f32.mrb[0].mxu0
        %v3029 = vadd.f32 0.0, %v3028
        %v3030 = vpop.f32.mrb[0].mxu0
        %3031 = vmatprep.mubr.f32.mxu0 0.0
        %3032 = vmatmul.mubr.f32.gmra.mrb[0].mxu0 %v2749
        %v3033 = vpop.f32.mrb[0].mxu0
        %v3034 = vadd.f32 0.0, %v3033
        %v3035 = vpop.f32.mrb[0].mxu0
        %3036 = vdwg.mxu0
        %v3037 = vadd.f32 %v2943, %v3029
        %v3038 = vadd.f32 %v2944, %v3034
        %s3039 = scalar_lea.vmem [#allocation10], 384
        %v3040 = vld [vmem:[%s3039] sm:$0xff]
        %v3041 = vld [vmem:[%s3039 + $0x8] sm:$0xff]
        %v3042 = vld [vmem:[%s3039 + $0x10] sm:$0xff]
        %v3043 = vld [vmem:[%s3039 + $0x18] sm:$0xff]
        %v3044 = vld [vmem:[%s3039 + $0x20] sm:$0xff]
        %v3045 = vld [vmem:[%s3039 + $0x28] sm:$0xff]
        %v3046 = vld [vmem:[%s3039 + $0x30] sm:$0xff]
        %v3047 = vld [vmem:[%s3039 + $0x38] sm:$0xff]
        %v3048 = vld [vmem:[%s3039 + $0x40] sm:$0xff]
        %v3049 = vld [vmem:[%s3039 + $0x48] sm:$0xff]
        %v3050 = vld [vmem:[%s3039 + $0x50] sm:$0xff]
        %v3051 = vld [vmem:[%s3039 + $0x58] sm:$0xff]
        %v3052 = vld [vmem:[%s3039 + $0x60] sm:$0xff]
        %v3053 = vld [vmem:[%s3039 + $0x68] sm:$0xff]
        %v3054 = vld [vmem:[%s3039 + $0x70] sm:$0xff]
        %v3055 = vld [vmem:[%s3039 + $0x78] sm:$0xff]
        %v3059 = vrot.slane %v2736, 1
        %v3060 = vrot.slane %v2737, 1
        %v3061 = vsel %vm988, %v3059, %v3060
        %v3062 = vrot.slane %v2738, 1
        %v3063 = vsel %vm988, %v3060, %v3062
        %3066 = vmatprep.subr.mxu0 0.0
        %3067 = vmatpush1.msra.mxu0 %v3040
        %3068 = vmatprep.subr.mxu0 0.0
        %3069 = vmatpush1.msra.mxu0 %v3041
        %3070 = vmatprep.subr.mxu0 0.0
        %3071 = vmatpush1.msra.mxu0 %v3042
        %3072 = vmatprep.subr.mxu0 0.0
        %3073 = vmatpush1.msra.mxu0 %v3043
        %3074 = vmatprep.subr.mxu0 0.0
        %3075 = vmatpush1.msra.mxu0 %v3044
        %3076 = vmatprep.subr.mxu0 0.0
        %3077 = vmatpush1.msra.mxu0 %v3045
        %3078 = vmatprep.subr.mxu0 0.0
        %3079 = vmatpush1.msra.mxu0 %v3046
        %3080 = vmatprep.subr.mxu0 0.0
        %3081 = vmatpush1.msra.mxu0 %v3047
        %3082 = vmatprep.subr.mxu0 0.0
        %3083 = vmatpush1.msra.mxu0 %v3048
        %3084 = vmatprep.subr.mxu0 0.0
        %3085 = vmatpush1.msra.mxu0 %v3049
        %3086 = vmatprep.subr.mxu0 0.0
        %3087 = vmatpush1.msra.mxu0 %v3050
        %3088 = vmatprep.subr.mxu0 0.0
        %3089 = vmatpush1.msra.mxu0 %v3051
        %3090 = vmatprep.subr.mxu0 0.0
        %3091 = vmatpush1.msra.mxu0 %v3052
        %3092 = vmatprep.subr.mxu0 0.0
        %3093 = vmatpush1.msra.mxu0 %v3053
        %3094 = vmatprep.subr.mxu0 0.0
        %3095 = vmatpush1.msra.mxu0 %v3054
        %3096 = vmatprep.subr.mxu0 0.0
        %3097 = vmatpush1.msra.mxu0 %v3055
        %3098 = vmatprep.subr.mxu0 0.0
        %3099 = vmatpush1.msra.mxu0 0.0
        %3100 = vmatprep.subr.mxu0 0.0
        %3101 = vmatpush1.msra.mxu0 0.0
        %3102 = vmatprep.subr.mxu0 0.0
        %3103 = vmatpush1.msra.mxu0 0.0
        %3104 = vmatprep.subr.mxu0 0.0
        %3105 = vmatpush1.msra.mxu0 0.0
        %3106 = vmatprep.subr.mxu0 0.0
        %3107 = vmatpush1.msra.mxu0 0.0
        %3108 = vmatprep.subr.mxu0 0.0
        %3109 = vmatpush1.msra.mxu0 0.0
        %3110 = vmatprep.subr.mxu0 0.0
        %3111 = vmatpush1.msra.mxu0 0.0
        %3112 = vmatprep.subr.mxu0 0.0
        %3113 = vmatpush1.msra.mxu0 0.0
        %3114 = vmatprep.subr.mxu0 0.0
        %3115 = vmatpush1.msra.mxu0 0.0
        %3116 = vmatprep.subr.mxu0 0.0
        %3117 = vmatpush1.msra.mxu0 0.0
        %3118 = vmatprep.subr.mxu0 0.0
        %3119 = vmatpush1.msra.mxu0 0.0
        %3120 = vmatprep.subr.mxu0 0.0
        %3121 = vmatpush1.msra.mxu0 0.0
        %3122 = vmatprep.subr.mxu0 0.0
        %3123 = vmatpush1.msra.mxu0 0.0
        %3124 = vmatprep.subr.mxu0 0.0
        %3125 = vmatpush1.msra.mxu0 0.0
        %3126 = vmatprep.subr.mxu0 0.0
        %3127 = vmatpush1.msra.mxu0 0.0
        %3128 = vmatprep.subr.mxu0 0.0
        %3129 = vmatpush1.msra.mxu0 0.0
        %3130 = vmatprep.mubr.f32.mxu0 0.0
        %3131 = vmatmul.mubr.f32.gmra.mrb[0].mxu0 %v3061
        %v3132 = vpop.f32.mrb[0].mxu0
        %v3133 = vadd.f32 0.0, %v3132
        %v3134 = vpop.f32.mrb[0].mxu0
        %3135 = vmatprep.mubr.f32.mxu0 0.0
        %3136 = vmatmul.mubr.f32.gmra.mrb[0].mxu0 %v3063
        %v3137 = vpop.f32.mrb[0].mxu0
        %v3138 = vadd.f32 0.0, %v3137
        %v3139 = vpop.f32.mrb[0].mxu0
        %3140 = vdwg.mxu0
        %v3141 = vadd.f32 %v3037, %v3133
        %v3142 = vadd.f32 %v3038, %v3138
        %s3143 = scalar_lea.vmem [#allocation10], 512
        %v3144 = vld [vmem:[%s3143] sm:$0xff]
        %v3145 = vld [vmem:[%s3143 + $0x8] sm:$0xff]
        %v3146 = vld [vmem:[%s3143 + $0x10] sm:$0xff]
        %v3147 = vld [vmem:[%s3143 + $0x18] sm:$0xff]
        %v3148 = vld [vmem:[%s3143 + $0x20] sm:$0xff]
        %v3149 = vld [vmem:[%s3143 + $0x28] sm:$0xff]
        %v3150 = vld [vmem:[%s3143 + $0x30] sm:$0xff]
        %v3151 = vld [vmem:[%s3143 + $0x38] sm:$0xff]
        %v3152 = vld [vmem:[%s3143 + $0x40] sm:$0xff]
        %v3153 = vld [vmem:[%s3143 + $0x48] sm:$0xff]
        %v3154 = vld [vmem:[%s3143 + $0x50] sm:$0xff]
        %v3155 = vld [vmem:[%s3143 + $0x58] sm:$0xff]
        %v3156 = vld [vmem:[%s3143 + $0x60] sm:$0xff]
        %v3157 = vld [vmem:[%s3143 + $0x68] sm:$0xff]
        %v3158 = vld [vmem:[%s3143 + $0x70] sm:$0xff]
        %v3159 = vld [vmem:[%s3143 + $0x78] sm:$0xff]
        %v3160 = vrot.slane %v2721, 1
        %v3161 = vrot.slane %v2722, 1
        %v3162 = vsel %vm988, %v3160, %v3161
        %v3163 = vrot.slane %v2723, 1
        %v3164 = vsel %vm988, %v3161, %v3163
        %3167 = vmatprep.subr.mxu0 0.0
        %3168 = vmatpush1.msra.mxu0 %v3144
        %3169 = vmatprep.subr.mxu0 0.0
        %3170 = vmatpush1.msra.mxu0 %v3145
        %3171 = vmatprep.subr.mxu0 0.0
        %3172 = vmatpush1.msra.mxu0 %v3146
        %3173 = vmatprep.subr.mxu0 0.0
        %3174 = vmatpush1.msra.mxu0 %v3147
        %3175 = vmatprep.subr.mxu0 0.0
        %3176 = vmatpush1.msra.mxu0 %v3148
        %3177 = vmatprep.subr.mxu0 0.0
        %3178 = vmatpush1.msra.mxu0 %v3149
        %3179 = vmatprep.subr.mxu0 0.0
        %3180 = vmatpush1.msra.mxu0 %v3150
        %3181 = vmatprep.subr.mxu0 0.0
        %3182 = vmatpush1.msra.mxu0 %v3151
        %3183 = vmatprep.subr.mxu0 0.0
        %3184 = vmatpush1.msra.mxu0 %v3152
        %3185 = vmatprep.subr.mxu0 0.0
        %3186 = vmatpush1.msra.mxu0 %v3153
        %3187 = vmatprep.subr.mxu0 0.0
        %3188 = vmatpush1.msra.mxu0 %v3154
        %3189 = vmatprep.subr.mxu0 0.0
        %3190 = vmatpush1.msra.mxu0 %v3155
        %3191 = vmatprep.subr.mxu0 0.0
        %3192 = vmatpush1.msra.mxu0 %v3156
        %3193 = vmatprep.subr.mxu0 0.0
        %3194 = vmatpush1.msra.mxu0 %v3157
        %3195 = vmatprep.subr.mxu0 0.0
        %3196 = vmatpush1.msra.mxu0 %v3158
        %3197 = vmatprep.subr.mxu0 0.0
        %3198 = vmatpush1.msra.mxu0 %v3159
        %3199 = vmatprep.subr.mxu0 0.0
        %3200 = vmatpush1.msra.mxu0 0.0
        %3201 = vmatprep.subr.mxu0 0.0
        %3202 = vmatpush1.msra.mxu0 0.0
        %3203 = vmatprep.subr.mxu0 0.0
        %3204 = vmatpush1.msra.mxu0 0.0
        %3205 = vmatprep.subr.mxu0 0.0
        %3206 = vmatpush1.msra.mxu0 0.0
        %3207 = vmatprep.subr.mxu0 0.0
        %3208 = vmatpush1.msra.mxu0 0.0
        %3209 = vmatprep.subr.mxu0 0.0
        %3210 = vmatpush1.msra.mxu0 0.0
        %3211 = vmatprep.subr.mxu0 0.0
        %3212 = vmatpush1.msra.mxu0 0.0
        %3213 = vmatprep.subr.mxu0 0.0
        %3214 = vmatpush1.msra.mxu0 0.0
        %3215 = vmatprep.subr.mxu0 0.0
        %3216 = vmatpush1.msra.mxu0 0.0
        %3217 = vmatprep.subr.mxu0 0.0
        %3218 = vmatpush1.msra.mxu0 0.0
        %3219 = vmatprep.subr.mxu0 0.0
        %3220 = vmatpush1.msra.mxu0 0.0
        %3221 = vmatprep.subr.mxu0 0.0
        %3222 = vmatpush1.msra.mxu0 0.0
        %3223 = vmatprep.subr.mxu0 0.0
        %3224 = vmatpush1.msra.mxu0 0.0
        %3225 = vmatprep.subr.mxu0 0.0
        %3226 = vmatpush1.msra.mxu0 0.0
        %3227 = vmatprep.subr.mxu0 0.0
        %3228 = vmatpush1.msra.mxu0 0.0
        %3229 = vmatprep.subr.mxu0 0.0
        %3230 = vmatpush1.msra.mxu0 0.0
        %3231 = vmatprep.mubr.f32.mxu0 0.0
        %3232 = vmatmul.mubr.f32.gmra.mrb[0].mxu0 %v3162
        %v3233 = vpop.f32.mrb[0].mxu0
        %v3234 = vadd.f32 0.0, %v3233
        %v3235 = vpop.f32.mrb[0].mxu0
        %3236 = vmatprep.mubr.f32.mxu0 0.0
        %3237 = vmatmul.mubr.f32.gmra.mrb[0].mxu0 %v3164
        %v3238 = vpop.f32.mrb[0].mxu0
        %v3239 = vadd.f32 0.0, %v3238
        %v3240 = vpop.f32.mrb[0].mxu0
        %3241 = vdwg.mxu0
        %v3242 = vadd.f32 %v3141, %v3234
        %v3243 = vadd.f32 %v3142, %v3239
        %s3244 = scalar_lea.vmem [#allocation10], 640
        %v3245 = vld [vmem:[%s3244] sm:$0xff]
        %v3246 = vld [vmem:[%s3244 + $0x8] sm:$0xff]
        %v3247 = vld [vmem:[%s3244 + $0x10] sm:$0xff]
        %v3248 = vld [vmem:[%s3244 + $0x18] sm:$0xff]
        %v3249 = vld [vmem:[%s3244 + $0x20] sm:$0xff]
        %v3250 = vld [vmem:[%s3244 + $0x28] sm:$0xff]
        %v3251 = vld [vmem:[%s3244 + $0x30] sm:$0xff]
        %v3252 = vld [vmem:[%s3244 + $0x38] sm:$0xff]
        %v3253 = vld [vmem:[%s3244 + $0x40] sm:$0xff]
        %v3254 = vld [vmem:[%s3244 + $0x48] sm:$0xff]
        %v3255 = vld [vmem:[%s3244 + $0x50] sm:$0xff]
        %v3256 = vld [vmem:[%s3244 + $0x58] sm:$0xff]
        %v3257 = vld [vmem:[%s3244 + $0x60] sm:$0xff]
        %v3258 = vld [vmem:[%s3244 + $0x68] sm:$0xff]
        %v3259 = vld [vmem:[%s3244 + $0x70] sm:$0xff]
        %v3260 = vld [vmem:[%s3244 + $0x78] sm:$0xff]
        %v3264 = vrot.slane %v2748, 1
        %v3265 = vrot.slane %v2749, 1
        %v3266 = vsel %vm988, %v3264, %v3265
        %v3267 = vrot.slane %v2750, 1
        %v3268 = vsel %vm988, %v3265, %v3267
        %3271 = vmatprep.subr.mxu0 0.0
        %3272 = vmatpush1.msra.mxu0 %v3245
        %3273 = vmatprep.subr.mxu0 0.0
        %3274 = vmatpush1.msra.mxu0 %v3246
        %3275 = vmatprep.subr.mxu0 0.0
        %3276 = vmatpush1.msra.mxu0 %v3247
        %3277 = vmatprep.subr.mxu0 0.0
        %3278 = vmatpush1.msra.mxu0 %v3248
        %3279 = vmatprep.subr.mxu0 0.0
        %3280 = vmatpush1.msra.mxu0 %v3249
        %3281 = vmatprep.subr.mxu0 0.0
        %3282 = vmatpush1.msra.mxu0 %v3250
        %3283 = vmatprep.subr.mxu0 0.0
        %3284 = vmatpush1.msra.mxu0 %v3251
        %3285 = vmatprep.subr.mxu0 0.0
        %3286 = vmatpush1.msra.mxu0 %v3252
        %3287 = vmatprep.subr.mxu0 0.0
        %3288 = vmatpush1.msra.mxu0 %v3253
        %3289 = vmatprep.subr.mxu0 0.0
        %3290 = vmatpush1.msra.mxu0 %v3254
        %3291 = vmatprep.subr.mxu0 0.0
        %3292 = vmatpush1.msra.mxu0 %v3255
        %3293 = vmatprep.subr.mxu0 0.0
        %3294 = vmatpush1.msra.mxu0 %v3256
        %3295 = vmatprep.subr.mxu0 0.0
        %3296 = vmatpush1.msra.mxu0 %v3257
        %3297 = vmatprep.subr.mxu0 0.0
        %3298 = vmatpush1.msra.mxu0 %v3258
        %3299 = vmatprep.subr.mxu0 0.0
        %3300 = vmatpush1.msra.mxu0 %v3259
        %3301 = vmatprep.subr.mxu0 0.0
        %3302 = vmatpush1.msra.mxu0 %v3260
        %3303 = vmatprep.subr.mxu0 0.0
        %3304 = vmatpush1.msra.mxu0 0.0
        %3305 = vmatprep.subr.mxu0 0.0
        %3306 = vmatpush1.msra.mxu0 0.0
        %3307 = vmatprep.subr.mxu0 0.0
        %3308 = vmatpush1.msra.mxu0 0.0
        %3309 = vmatprep.subr.mxu0 0.0
        %3310 = vmatpush1.msra.mxu0 0.0
        %3311 = vmatprep.subr.mxu0 0.0
        %3312 = vmatpush1.msra.mxu0 0.0
        %3313 = vmatprep.subr.mxu0 0.0
        %3314 = vmatpush1.msra.mxu0 0.0
        %3315 = vmatprep.subr.mxu0 0.0
        %3316 = vmatpush1.msra.mxu0 0.0
        %3317 = vmatprep.subr.mxu0 0.0
        %3318 = vmatpush1.msra.mxu0 0.0
        %3319 = vmatprep.subr.mxu0 0.0
        %3320 = vmatpush1.msra.mxu0 0.0
        %3321 = vmatprep.subr.mxu0 0.0
        %3322 = vmatpush1.msra.mxu0 0.0
        %3323 = vmatprep.subr.mxu0 0.0
        %3324 = vmatpush1.msra.mxu0 0.0
        %3325 = vmatprep.subr.mxu0 0.0
        %3326 = vmatpush1.msra.mxu0 0.0
        %3327 = vmatprep.subr.mxu0 0.0
        %3328 = vmatpush1.msra.mxu0 0.0
        %3329 = vmatprep.subr.mxu0 0.0
        %3330 = vmatpush1.msra.mxu0 0.0
        %3331 = vmatprep.subr.mxu0 0.0
        %3332 = vmatpush1.msra.mxu0 0.0
        %3333 = vmatprep.subr.mxu0 0.0
        %3334 = vmatpush1.msra.mxu0 0.0
        %3335 = vmatprep.mubr.f32.mxu0 0.0
        %3336 = vmatmul.mubr.f32.gmra.mrb[0].mxu0 %v3266
        %v3337 = vpop.f32.mrb[0].mxu0
        %v3338 = vadd.f32 0.0, %v3337
        %v3339 = vpop.f32.mrb[0].mxu0
        %3340 = vmatprep.mubr.f32.mxu0 0.0
        %3341 = vmatmul.mubr.f32.gmra.mrb[0].mxu0 %v3268
        %v3342 = vpop.f32.mrb[0].mxu0
        %v3343 = vadd.f32 0.0, %v3342
        %v3344 = vpop.f32.mrb[0].mxu0
        %3345 = vdwg.mxu0
        %v3346 = vadd.f32 %v3242, %v3338
        %v3347 = vadd.f32 %v3243, %v3343
        %s3348 = scalar_lea.vmem [#allocation10], 768
        %v3349 = vld [vmem:[%s3348] sm:$0xff]
        %v3350 = vld [vmem:[%s3348 + $0x8] sm:$0xff]
        %v3351 = vld [vmem:[%s3348 + $0x10] sm:$0xff]
        %v3352 = vld [vmem:[%s3348 + $0x18] sm:$0xff]
        %v3353 = vld [vmem:[%s3348 + $0x20] sm:$0xff]
        %v3354 = vld [vmem:[%s3348 + $0x28] sm:$0xff]
        %v3355 = vld [vmem:[%s3348 + $0x30] sm:$0xff]
        %v3356 = vld [vmem:[%s3348 + $0x38] sm:$0xff]
        %v3357 = vld [vmem:[%s3348 + $0x40] sm:$0xff]
        %v3358 = vld [vmem:[%s3348 + $0x48] sm:$0xff]
        %v3359 = vld [vmem:[%s3348 + $0x50] sm:$0xff]
        %v3360 = vld [vmem:[%s3348 + $0x58] sm:$0xff]
        %v3361 = vld [vmem:[%s3348 + $0x60] sm:$0xff]
        %v3362 = vld [vmem:[%s3348 + $0x68] sm:$0xff]
        %v3363 = vld [vmem:[%s3348 + $0x70] sm:$0xff]
        %v3364 = vld [vmem:[%s3348 + $0x78] sm:$0xff]
        %v3365 = vrot.slane %v2736, 2
        %v3366 = vrot.slane %v2737, 2
        %v3367 = vsel %vm1289, %v3365, %v3366
        %v3368 = vrot.slane %v2738, 2
        %v3369 = vsel %vm1289, %v3366, %v3368
        %3372 = vmatprep.subr.mxu0 0.0
        %3373 = vmatpush1.msra.mxu0 %v3349
        %3374 = vmatprep.subr.mxu0 0.0
        %3375 = vmatpush1.msra.mxu0 %v3350
        %3376 = vmatprep.subr.mxu0 0.0
        %3377 = vmatpush1.msra.mxu0 %v3351
        %3378 = vmatprep.subr.mxu0 0.0
        %3379 = vmatpush1.msra.mxu0 %v3352
        %3380 = vmatprep.subr.mxu0 0.0
        %3381 = vmatpush1.msra.mxu0 %v3353
        %3382 = vmatprep.subr.mxu0 0.0
        %3383 = vmatpush1.msra.mxu0 %v3354
        %3384 = vmatprep.subr.mxu0 0.0
        %3385 = vmatpush1.msra.mxu0 %v3355
        %3386 = vmatprep.subr.mxu0 0.0
        %3387 = vmatpush1.msra.mxu0 %v3356
        %3388 = vmatprep.subr.mxu0 0.0
        %3389 = vmatpush1.msra.mxu0 %v3357
        %3390 = vmatprep.subr.mxu0 0.0
        %3391 = vmatpush1.msra.mxu0 %v3358
        %3392 = vmatprep.subr.mxu0 0.0
        %3393 = vmatpush1.msra.mxu0 %v3359
        %3394 = vmatprep.subr.mxu0 0.0
        %3395 = vmatpush1.msra.mxu0 %v3360
        %3396 = vmatprep.subr.mxu0 0.0
        %3397 = vmatpush1.msra.mxu0 %v3361
        %3398 = vmatprep.subr.mxu0 0.0
        %3399 = vmatpush1.msra.mxu0 %v3362
        %3400 = vmatprep.subr.mxu0 0.0
        %3401 = vmatpush1.msra.mxu0 %v3363
        %3402 = vmatprep.subr.mxu0 0.0
        %3403 = vmatpush1.msra.mxu0 %v3364
        %3404 = vmatprep.subr.mxu0 0.0
        %3405 = vmatpush1.msra.mxu0 0.0
        %3406 = vmatprep.subr.mxu0 0.0
        %3407 = vmatpush1.msra.mxu0 0.0
        %3408 = vmatprep.subr.mxu0 0.0
        %3409 = vmatpush1.msra.mxu0 0.0
        %3410 = vmatprep.subr.mxu0 0.0
        %3411 = vmatpush1.msra.mxu0 0.0
        %3412 = vmatprep.subr.mxu0 0.0
        %3413 = vmatpush1.msra.mxu0 0.0
        %3414 = vmatprep.subr.mxu0 0.0
        %3415 = vmatpush1.msra.mxu0 0.0
        %3416 = vmatprep.subr.mxu0 0.0
        %3417 = vmatpush1.msra.mxu0 0.0
        %3418 = vmatprep.subr.mxu0 0.0
        %3419 = vmatpush1.msra.mxu0 0.0
        %3420 = vmatprep.subr.mxu0 0.0
        %3421 = vmatpush1.msra.mxu0 0.0
        %3422 = vmatprep.subr.mxu0 0.0
        %3423 = vmatpush1.msra.mxu0 0.0
        %3424 = vmatprep.subr.mxu0 0.0
        %3425 = vmatpush1.msra.mxu0 0.0
        %3426 = vmatprep.subr.mxu0 0.0
        %3427 = vmatpush1.msra.mxu0 0.0
        %3428 = vmatprep.subr.mxu0 0.0
        %3429 = vmatpush1.msra.mxu0 0.0
        %3430 = vmatprep.subr.mxu0 0.0
        %3431 = vmatpush1.msra.mxu0 0.0
        %3432 = vmatprep.subr.mxu0 0.0
        %3433 = vmatpush1.msra.mxu0 0.0
        %3434 = vmatprep.subr.mxu0 0.0
        %3435 = vmatpush1.msra.mxu0 0.0
        %3436 = vmatprep.mubr.f32.mxu0 0.0
        %3437 = vmatmul.mubr.f32.gmra.mrb[0].mxu0 %v3367
        %v3438 = vpop.f32.mrb[0].mxu0
        %v3439 = vadd.f32 0.0, %v3438
        %v3440 = vpop.f32.mrb[0].mxu0
        %3441 = vmatprep.mubr.f32.mxu0 0.0
        %3442 = vmatmul.mubr.f32.gmra.mrb[0].mxu0 %v3369
        %v3443 = vpop.f32.mrb[0].mxu0
        %v3444 = vadd.f32 0.0, %v3443
        %v3445 = vpop.f32.mrb[0].mxu0
        %3446 = vdwg.mxu0
        %v3447 = vadd.f32 %v3346, %v3439
        %v3448 = vadd.f32 %v3347, %v3444
        %s3449 = scalar_lea.vmem [#allocation10], 896
        %v3450 = vld [vmem:[%s3449] sm:$0xff]
        %v3451 = vld [vmem:[%s3449 + $0x8] sm:$0xff]
        %v3452 = vld [vmem:[%s3449 + $0x10] sm:$0xff]
        %v3453 = vld [vmem:[%s3449 + $0x18] sm:$0xff]
        %v3454 = vld [vmem:[%s3449 + $0x20] sm:$0xff]
        %v3455 = vld [vmem:[%s3449 + $0x28] sm:$0xff]
        %v3456 = vld [vmem:[%s3449 + $0x30] sm:$0xff]
        %v3457 = vld [vmem:[%s3449 + $0x38] sm:$0xff]
        %v3458 = vld [vmem:[%s3449 + $0x40] sm:$0xff]
        %v3459 = vld [vmem:[%s3449 + $0x48] sm:$0xff]
        %v3460 = vld [vmem:[%s3449 + $0x50] sm:$0xff]
        %v3461 = vld [vmem:[%s3449 + $0x58] sm:$0xff]
        %v3462 = vld [vmem:[%s3449 + $0x60] sm:$0xff]
        %v3463 = vld [vmem:[%s3449 + $0x68] sm:$0xff]
        %v3464 = vld [vmem:[%s3449 + $0x70] sm:$0xff]
        %v3465 = vld [vmem:[%s3449 + $0x78] sm:$0xff]
        %v3466 = vrot.slane %v2721, 2
        %v3467 = vrot.slane %v2722, 2
        %v3468 = vsel %vm1289, %v3466, %v3467
        %v3469 = vrot.slane %v2723, 2
        %v3470 = vsel %vm1289, %v3467, %v3469
        %3473 = vmatprep.subr.mxu0 0.0
        %3474 = vmatpush1.msra.mxu0 %v3450
        %3475 = vmatprep.subr.mxu0 0.0
        %3476 = vmatpush1.msra.mxu0 %v3451
        %3477 = vmatprep.subr.mxu0 0.0
        %3478 = vmatpush1.msra.mxu0 %v3452
        %3479 = vmatprep.subr.mxu0 0.0
        %3480 = vmatpush1.msra.mxu0 %v3453
        %3481 = vmatprep.subr.mxu0 0.0
        %3482 = vmatpush1.msra.mxu0 %v3454
        %3483 = vmatprep.subr.mxu0 0.0
        %3484 = vmatpush1.msra.mxu0 %v3455
        %3485 = vmatprep.subr.mxu0 0.0
        %3486 = vmatpush1.msra.mxu0 %v3456
        %3487 = vmatprep.subr.mxu0 0.0
        %3488 = vmatpush1.msra.mxu0 %v3457
        %3489 = vmatprep.subr.mxu0 0.0
        %3490 = vmatpush1.msra.mxu0 %v3458
        %3491 = vmatprep.subr.mxu0 0.0
        %3492 = vmatpush1.msra.mxu0 %v3459
        %3493 = vmatprep.subr.mxu0 0.0
        %3494 = vmatpush1.msra.mxu0 %v3460
        %3495 = vmatprep.subr.mxu0 0.0
        %3496 = vmatpush1.msra.mxu0 %v3461
        %3497 = vmatprep.subr.mxu0 0.0
        %3498 = vmatpush1.msra.mxu0 %v3462
        %3499 = vmatprep.subr.mxu0 0.0
        %3500 = vmatpush1.msra.mxu0 %v3463
        %3501 = vmatprep.subr.mxu0 0.0
        %3502 = vmatpush1.msra.mxu0 %v3464
        %3503 = vmatprep.subr.mxu0 0.0
        %3504 = vmatpush1.msra.mxu0 %v3465
        %3505 = vmatprep.subr.mxu0 0.0
        %3506 = vmatpush1.msra.mxu0 0.0
        %3507 = vmatprep.subr.mxu0 0.0
        %3508 = vmatpush1.msra.mxu0 0.0
        %3509 = vmatprep.subr.mxu0 0.0
        %3510 = vmatpush1.msra.mxu0 0.0
        %3511 = vmatprep.subr.mxu0 0.0
        %3512 = vmatpush1.msra.mxu0 0.0
        %3513 = vmatprep.subr.mxu0 0.0
        %3514 = vmatpush1.msra.mxu0 0.0
        %3515 = vmatprep.subr.mxu0 0.0
        %3516 = vmatpush1.msra.mxu0 0.0
        %3517 = vmatprep.subr.mxu0 0.0
        %3518 = vmatpush1.msra.mxu0 0.0
        %3519 = vmatprep.subr.mxu0 0.0
        %3520 = vmatpush1.msra.mxu0 0.0
        %3521 = vmatprep.subr.mxu0 0.0
        %3522 = vmatpush1.msra.mxu0 0.0
        %3523 = vmatprep.subr.mxu0 0.0
        %3524 = vmatpush1.msra.mxu0 0.0
        %3525 = vmatprep.subr.mxu0 0.0
        %3526 = vmatpush1.msra.mxu0 0.0
        %3527 = vmatprep.subr.mxu0 0.0
        %3528 = vmatpush1.msra.mxu0 0.0
        %3529 = vmatprep.subr.mxu0 0.0
        %3530 = vmatpush1.msra.mxu0 0.0
        %3531 = vmatprep.subr.mxu0 0.0
        %3532 = vmatpush1.msra.mxu0 0.0
        %3533 = vmatprep.subr.mxu0 0.0
        %3534 = vmatpush1.msra.mxu0 0.0
        %3535 = vmatprep.subr.mxu0 0.0
        %3536 = vmatpush1.msra.mxu0 0.0
        %3537 = vmatprep.mubr.f32.mxu0 0.0
        %3538 = vmatmul.mubr.f32.gmra.mrb[0].mxu0 %v3468
        %v3539 = vpop.f32.mrb[0].mxu0
        %v3540 = vadd.f32 0.0, %v3539
        %v3541 = vpop.f32.mrb[0].mxu0
        %3542 = vmatprep.mubr.f32.mxu0 0.0
        %3543 = vmatmul.mubr.f32.gmra.mrb[0].mxu0 %v3470
        %v3544 = vpop.f32.mrb[0].mxu0
        %v3545 = vadd.f32 0.0, %v3544
        %v3546 = vpop.f32.mrb[0].mxu0
        %3547 = vdwg.mxu0
        %v3548 = vadd.f32 %v3447, %v3540
        %v3549 = vadd.f32 %v3448, %v3545
        %s3550 = scalar_lea.vmem [#allocation10], 1024
        %v3551 = vld [vmem:[%s3550] sm:$0xff]
        %v3552 = vld [vmem:[%s3550 + $0x8] sm:$0xff]
        %v3553 = vld [vmem:[%s3550 + $0x10] sm:$0xff]
        %v3554 = vld [vmem:[%s3550 + $0x18] sm:$0xff]
        %v3555 = vld [vmem:[%s3550 + $0x20] sm:$0xff]
        %v3556 = vld [vmem:[%s3550 + $0x28] sm:$0xff]
        %v3557 = vld [vmem:[%s3550 + $0x30] sm:$0xff]
        %v3558 = vld [vmem:[%s3550 + $0x38] sm:$0xff]
        %v3559 = vld [vmem:[%s3550 + $0x40] sm:$0xff]
        %v3560 = vld [vmem:[%s3550 + $0x48] sm:$0xff]
        %v3561 = vld [vmem:[%s3550 + $0x50] sm:$0xff]
        %v3562 = vld [vmem:[%s3550 + $0x58] sm:$0xff]
        %v3563 = vld [vmem:[%s3550 + $0x60] sm:$0xff]
        %v3564 = vld [vmem:[%s3550 + $0x68] sm:$0xff]
        %v3565 = vld [vmem:[%s3550 + $0x70] sm:$0xff]
        %v3566 = vld [vmem:[%s3550 + $0x78] sm:$0xff]
        %v3567 = vrot.slane %v2748, 2
        %v3568 = vrot.slane %v2749, 2
        %v3569 = vsel %vm1289, %v3567, %v3568
        %v3570 = vrot.slane %v2750, 2
        %v3571 = vsel %vm1289, %v3568, %v3570
        %3574 = vmatprep.subr.mxu0 0.0
        %3575 = vmatpush1.msra.mxu0 %v3551
        %3576 = vmatprep.subr.mxu0 0.0
        %3577 = vmatpush1.msra.mxu0 %v3552
        %3578 = vmatprep.subr.mxu0 0.0
        %3579 = vmatpush1.msra.mxu0 %v3553
        %3580 = vmatprep.subr.mxu0 0.0
        %3581 = vmatpush1.msra.mxu0 %v3554
        %3582 = vmatprep.subr.mxu0 0.0
        %3583 = vmatpush1.msra.mxu0 %v3555
        %3584 = vmatprep.subr.mxu0 0.0
        %3585 = vmatpush1.msra.mxu0 %v3556
        %3586 = vmatprep.subr.mxu0 0.0
        %3587 = vmatpush1.msra.mxu0 %v3557
        %3588 = vmatprep.subr.mxu0 0.0
        %3589 = vmatpush1.msra.mxu0 %v3558
        %3590 = vmatprep.subr.mxu0 0.0
        %3591 = vmatpush1.msra.mxu0 %v3559
        %3592 = vmatprep.subr.mxu0 0.0
        %3593 = vmatpush1.msra.mxu0 %v3560
        %3594 = vmatprep.subr.mxu0 0.0
        %3595 = vmatpush1.msra.mxu0 %v3561
        %3596 = vmatprep.subr.mxu0 0.0
        %3597 = vmatpush1.msra.mxu0 %v3562
        %3598 = vmatprep.subr.mxu0 0.0
        %3599 = vmatpush1.msra.mxu0 %v3563
        %3600 = vmatprep.subr.mxu0 0.0
        %3601 = vmatpush1.msra.mxu0 %v3564
        %3602 = vmatprep.subr.mxu0 0.0
        %3603 = vmatpush1.msra.mxu0 %v3565
        %3604 = vmatprep.subr.mxu0 0.0
        %3605 = vmatpush1.msra.mxu0 %v3566
        %3606 = vmatprep.subr.mxu0 0.0
        %3607 = vmatpush1.msra.mxu0 0.0
        %3608 = vmatprep.subr.mxu0 0.0
        %3609 = vmatpush1.msra.mxu0 0.0
        %3610 = vmatprep.subr.mxu0 0.0
        %3611 = vmatpush1.msra.mxu0 0.0
        %3612 = vmatprep.subr.mxu0 0.0
        %3613 = vmatpush1.msra.mxu0 0.0
        %3614 = vmatprep.subr.mxu0 0.0
        %3615 = vmatpush1.msra.mxu0 0.0
        %3616 = vmatprep.subr.mxu0 0.0
        %3617 = vmatpush1.msra.mxu0 0.0
        %3618 = vmatprep.subr.mxu0 0.0
        %3619 = vmatpush1.msra.mxu0 0.0
        %3620 = vmatprep.subr.mxu0 0.0
        %3621 = vmatpush1.msra.mxu0 0.0
        %3622 = vmatprep.subr.mxu0 0.0
        %3623 = vmatpush1.msra.mxu0 0.0
        %3624 = vmatprep.subr.mxu0 0.0
        %3625 = vmatpush1.msra.mxu0 0.0
        %3626 = vmatprep.subr.mxu0 0.0
        %3627 = vmatpush1.msra.mxu0 0.0
        %3628 = vmatprep.subr.mxu0 0.0
        %3629 = vmatpush1.msra.mxu0 0.0
        %3630 = vmatprep.subr.mxu0 0.0
        %3631 = vmatpush1.msra.mxu0 0.0
        %3632 = vmatprep.subr.mxu0 0.0
        %3633 = vmatpush1.msra.mxu0 0.0
        %3634 = vmatprep.subr.mxu0 0.0
        %3635 = vmatpush1.msra.mxu0 0.0
        %3636 = vmatprep.subr.mxu0 0.0
        %3637 = vmatpush1.msra.mxu0 0.0
        %3638 = vmatprep.mubr.f32.mxu0 0.0
        %3639 = vmatmul.mubr.f32.gmra.mrb[0].mxu0 %v3569
        %v3640 = vpop.f32.mrb[0].mxu0
        %v3641 = vadd.f32 0.0, %v3640
        %v3642 = vpop.f32.mrb[0].mxu0
        %3643 = vmatprep.mubr.f32.mxu0 0.0
        %3644 = vmatmul.mubr.f32.gmra.mrb[0].mxu0 %v3571
        %v3645 = vpop.f32.mrb[0].mxu0
        %v3646 = vadd.f32 0.0, %v3645
        %v3647 = vpop.f32.mrb[0].mxu0
        %3648 = vdwg.mxu0
        %v3649 = vadd.f32 %v3548, %v3641
        %v3650 = vadd.f32 %v3549, %v3646
        %3651 = vst [vmem:[%s466] sm:$0xff] %v3649
        %3652 = vst [vmem:[%s466 + $0x8] sm:$0xff] %v3650
        %s3653 = sand.u32 %s295, 1
        %s3654 = scalar_lea.sflag [#allocation6], %s3653
        %s3655 = sand.u32 %s295, 1
        %s3656 = smul.addr %s3655, 16
        %s3657 = scalar_lea.vmem [#allocation12], %s3656
        // Predicated region
        $region85: #{tpu_custom_call.1} parent=67 // pred_check
          %p3658 = pneg %p305
        $region86: #{tpu_custom_call.1} parent=67 // pred_check_branch
          %3660 = sbr.rel (%p3658) target = $region88
        $region87: #{tpu_custom_call.1} parent=67 // pred_region
          %s3662 = ssub.s32 256, 256
          %3663 = vsyncadd %s3654, %s3662
          %s3664 = smul.addr %s30, 2
          %s3665 = smul.addr %s3664, 128
          %s3666 = scalar_lea.hbm %s12, %s3665
          %s3667 = sshll.u32 %s3657, 4
          %s3668 = int_to_ptr.vmem [resolvable:$true] %s3667
          %3673 = dma.vmem_to_hbm [thread:$0]  %s3668, 256, %s3666, %s3654, 128, 128, 8
        $region88: #{tpu_custom_call.1} parent=67 // pred_fallthru
          _
      $region68: #{tpu_custom_call.1} parent=5 // pred_fallthru
        _
      %p3674 = scmp.le.s32.totalorder 2, %s25
      // Predicated region
      $region89: #{tpu_custom_call.1} parent=5 // pred_check
        %p3675 = pneg %p3674
      $region90: #{tpu_custom_call.1} parent=5 // pred_check_branch
        %3677 = sbr.rel (%p3675) target = $region92
      $region91: #{tpu_custom_call.1} parent=5 // pred_region
        %s3678 = ssub.s32 %s25, 2
        // Predicated region
        $region93: #{tpu_custom_call.1} parent=91 // pred_check
          %p3679 = pneg %p311
        $region94: #{tpu_custom_call.1} parent=91 // pred_check_branch
          %3681 = sbr.rel (%p3679) target = $region96
        $region95: #{tpu_custom_call.1} parent=91 // pred_region
          %s3682 = sand.u32 %s296, 1
          %s3683 = scalar_lea.sflag [#allocation6], %s3682
          %s3684 = sand.u32 %s296, 1
          %s3685 = smul.addr %s3684, 16
          %s3686 = scalar_lea.vmem [#allocation12], %s3685
          %3687 = dma.done %s3683, 256
        $region96: #{tpu_custom_call.1} parent=91 // pred_fallthru
          _
      $region92: #{tpu_custom_call.1} parent=5 // pred_fallthru
        _
    $region6: #{tpu_custom_call.1} parent=1 // loop_footer
      %s29 = sadd.s32 1, %s25
    $region7: #{tpu_custom_call.1} parent=1 // loop_footer_branch
      %24 = sbr.rel target = $region3
    $region8: #{tpu_custom_call.1} parent=1 // loop_exit
      _
    %3688 = vsyncpa [#allocation5], 1
    %s3689 = scalar_lea.sflag [#allocation5], 1
    %3690 = vsyncpa %s3689, 1
    %3691 = vsyncpa [#allocation8], 1
    %3692 = vsyncpa [#allocation11], 1
    %3693 = vsyncpa [#allocation6], 1
    %s3694 = scalar_lea.sflag [#allocation6], 1
    %3695 = vsyncpa %s3694, 1

</llo_original>
